<compile_context>
chip_gen: v5e
topology: v5e:2x2
jax: 0.10.0
libtpu: 0.0.40
codegen_flags: <defaults>
</compile_context>

<pallas_src>
import numpy as np

import jax
import jax.numpy as jnp
from jax.experimental import pallas as pl
from jax.experimental.pallas import tpu as pltpu

QBIT = 8
QMIN = float(-2 ** QBIT)       # -256.0  (as in the reference QuantizedLayer)
QMAX = float(2 ** QBIT - 1)    #  255.0
ZERO_POINT = 0.0

# Network geometry (from the PyTorch module).
IMG = 32                       # input spatial size
C_IN = 3                       # input channels
C1, C2 = 16, 4                 # conv1 / conv2 output channels
KS = 3                         # conv kernel size (valid, stride 1)
H1 = IMG - KS + 1              # 30
H2 = H1 - KS + 1               # 28
FEAT = H2 * H2 * C2            # 3136
HID = 16                       # linear1 width


# ---------------------------------------------------------------------------
# JAX-side helpers (parameter preprocessing, run once per forward).
# ---------------------------------------------------------------------------

def _quantize_host(v, scale):
    """QuantizedLayer.quantize_tensor for weights / biases (hoisted out of kernels)."""
    return jnp.clip(jnp.round(v / scale) + ZERO_POINT, QMIN, QMAX)


def _banded_conv_weight(w_q, w_in):
    """Expand a quantized (C_out, C_in, KH, KW) conv weight into banded matmul slabs.

    Returns (KH, w_in*C_in, Wo*C_out) so that a valid/stride-1 conv over NHWC rows becomes
        out2d[ho, wo*C_out + co] = sum_kh  x2d[ho+kh, :] @ banded[kh]
    with x2d rows = H and lanes = (w, ci).  banded[kh, w*C_in+ci, wo*C_out+co] =
    w_q[co, ci, kh, w-wo] if 0 <= w-wo < KW else 0.
    """
    c_out, c_in, kh_sz, kw_sz = w_q.shape
    wo = w_in - kw_sz + 1
    sel = np.zeros((kw_sz, w_in, wo), np.float32)          # sel[kw, wo+kw, wo] = 1
    for kw in range(kw_sz):
        sel[kw, kw:kw + wo, :] = np.eye(wo, dtype=np.float32)
    banded = jnp.einsum('kwv,oihk->hwivo', sel, w_q)       # (KH, W_in, C_in, Wo, C_out)
    return banded.reshape(kh_sz, w_in * c_in, wo * c_out)


# ---------------------------------------------------------------------------
# Pallas kernels.
# ---------------------------------------------------------------------------

def _conv_stack_kernel(q_ref, x_ref, w1_ref, b1_ref, w2_ref, b2_ref, o_ref):
    """Per-sample fused conv1 -> QReLU -> conv2 -> QReLU, entirely in VMEM/vregs.

    q_ref:  SMEM (2,) f32 = (scale, inv_scale).
    x_ref:  (32, 96)  f32 raw input rows (NHWC rows, lanes = W*C).
    w1_ref: (3, 96, 480)  bf16 banded conv1 weights (one slab per kernel row kh).
    w2_ref: (3, 480, 112) bf16 banded conv2 weights.
    b1_ref: (1, 480) f32 quantized conv1 bias, tiled along width.
    b2_ref: (1, 112) f32 quantized conv2 bias, tiled along width.
    o_ref:  (28, 112) bf16 quantized post-ReLU activations, (h, w, c) flatten order.
    """
    inv_scale = q_ref[1]
    x = x_ref[...]                                                     # (32, 96) f32
    # quantize_tensor(input): clamp(round(x * inv_scale) + zp, qmin, qmax), f32 math.
    xq = jnp.clip(jnp.round(x * inv_scale) + ZERO_POINT, QMIN, QMAX)

    # conv1: window gather = 3 sublane-sliced matmuls against the banded slabs.
    acc1 = None
    for kh in range(KS):
        lhs = xq[kh:kh + H1, :].astype(jnp.bfloat16)                   # ints exact in bf16
        term = jnp.dot(lhs, w1_ref[kh], preferred_element_type=jnp.float32)
        acc1 = term if acc1 is None else acc1 + term
    # QunatizedReLU with zero_point = 0: requantize -> clamp(min=0) -> dequant collapses
    # to a clip (+round) in the quantized domain.
    h1 = jnp.clip(jnp.round(acc1 + b1_ref[...]), ZERO_POINT, QMAX)     # (30, 480)

    # conv2 on the (h, (w,c)) slab — h1's lane layout is exactly conv2's (w, ci) layout.
    acc2 = None
    for kh in range(KS):
        lhs = h1[kh:kh + H2, :].astype(jnp.bfloat16)
        term = jnp.dot(lhs, w2_ref[kh], preferred_element_type=jnp.float32)
        acc2 = term if acc2 is None else acc2 + term
    h2 = jnp.clip(jnp.round(acc2 + b2_ref[...]), ZERO_POINT, QMAX)     # (28, 112)

    o_ref[...] = h2.astype(jnp.bfloat16)                               # quantized bf16 out


def _mlp_kernel(q_ref, x_ref, w1_ref, b1_ref, w2_ref, b2_ref, o_ref):
    """Fused linear1 -> QReLU -> linear2 -> dequantize on pre-quantized bf16 activations."""
    scale = q_ref[0]
    h = jnp.dot(x_ref[...], w1_ref[...],
                preferred_element_type=jnp.float32) + b1_ref[...]      # (tm, 16)
    h = jnp.clip(jnp.round(h), ZERO_POINT, QMAX)                       # QReLU, quantized dom.
    # linear2 (16 -> 1) on the VPU: broadcast-multiply + lane reduction (no N=1 MXU matmul).
    out_q = jnp.sum(h * w2_ref[...], axis=-1, keepdims=True) + b2_ref[...]
    o_ref[...] = (out_q - ZERO_POINT) * scale                          # final dequantize


# ---------------------------------------------------------------------------
# pallas_call wrappers.
# ---------------------------------------------------------------------------

def _conv_stack(x2d, w1b, b1t, w2b, b2t, qparams):
    B = x2d.shape[0]
    return pl.pallas_call(
        _conv_stack_kernel,
        out_shape=jax.ShapeDtypeStruct((B, H2, H2 * C2), jnp.bfloat16),
        grid=(B,),
        in_specs=[
            pl.BlockSpec(memory_space=pltpu.MemorySpace.SMEM),                 # (scale, 1/scale)
            pl.BlockSpec((None, IMG, IMG * C_IN), lambda b: (b, 0, 0)),        # input rows
            pl.BlockSpec((KS, IMG * C_IN, H1 * C1), lambda b: (0, 0, 0)),      # banded conv1 w
            pl.BlockSpec((1, H1 * C1), lambda b: (0, 0)),                      # conv1 bias (tiled)
            pl.BlockSpec((KS, H1 * C1, H2 * C2), lambda b: (0, 0, 0)),         # banded conv2 w
            pl.BlockSpec((1, H2 * C2), lambda b: (0, 0)),                      # conv2 bias (tiled)
        ],
        out_specs=pl.BlockSpec((None, H2, H2 * C2), lambda b: (b, 0, 0)),
        compiler_params=pltpu.CompilerParams(dimension_semantics=("parallel",)),
    )(qparams, x2d, w1b, b1t, w2b, b2t)


def _mlp(xq, w1_q, b1_q, w2_q, b2_q, qparams):
    M, K = xq.shape
    # Fixed tile (multiple of 16 for bf16 sublanes); partial last block handled by Pallas.
    tm = min(256, ((M + 15) // 16) * 16)
    return pl.pallas_call(
        _mlp_kernel,
        out_shape=jax.ShapeDtypeStruct((M, 1), jnp.float32),
        grid=(pl.cdiv(M, tm),),
        in_specs=[
            pl.BlockSpec(memory_space=pltpu.MemorySpace.SMEM),    # (scale, 1/scale)
            pl.BlockSpec((tm, K), lambda i: (i, 0)),              # quantized bf16 activations
            pl.BlockSpec((K, HID), lambda i: (0, 0)),             # linear1 weight (resident)
            pl.BlockSpec((1, HID), lambda i: (0, 0)),             # linear1 bias
            pl.BlockSpec((1, HID), lambda i: (0, 0)),             # linear2 weight row (VPU)
            pl.BlockSpec((1, 1), lambda i: (0, 0)),               # linear2 bias
        ],
        out_specs=pl.BlockSpec((tm, 1), lambda i: (i, 0)),
        compiler_params=pltpu.CompilerParams(dimension_semantics=("parallel",)),
    )(qparams, xq, w1_q, b1_q, w2_q, b2_q)


# ---------------------------------------------------------------------------
# Model forward.
# ---------------------------------------------------------------------------

def quantized_model_forward(x, params):
    B = x.shape[0]
    # QuantizedLayer.calibrate on the input batch (single shared scale, zero_point = 0).
    scale = (jnp.max(x) - jnp.min(x)) / (QMAX - QMIN)
    scale = jnp.maximum(scale, 1e-12).astype(jnp.float32)        # guard constant batches
    qparams = jnp.stack([scale, 1.0 / scale]).astype(jnp.float32)

    # Channels-last rows with lanes = W*C (row-major NHWC view; single transpose, no
    # per-layer layout shuffles).
    x2d = jnp.transpose(x, (0, 2, 3, 1)).reshape(B, IMG, IMG * C_IN)

    # Quantize weights/biases once per forward (hoisted out of the kernels); expand conv
    # weights into banded matmul slabs and pre-tile conv biases to the banded lane layout.
    w1b = _banded_conv_weight(_quantize_host(params["conv1_w"], scale), IMG).astype(jnp.bfloat16)
    b1t = jnp.tile(_quantize_host(params["conv1_b"], scale), H1).reshape(1, H1 * C1)
    w2b = _banded_conv_weight(_quantize_host(params["conv2_w"], scale), H1).astype(jnp.bfloat16)
    b2t = jnp.tile(_quantize_host(params["conv2_b"], scale), H2).reshape(1, H2 * C2)

    hq = _conv_stack(x2d, w1b, b1t, w2b, b2t, qparams)           # (B, 28, 112) quantized bf16
    hq = hq.reshape(B, FEAT)                                     # (h, w, c) flatten order

    # linear1 expects NCHW flatten order (c, h, w); permute its weight columns once instead
    # of re-gathering the activation tensor.
    w1 = params["lin1_w"].reshape(HID, C2, H2, H2).transpose(0, 2, 3, 1).reshape(HID, FEAT)
    w1_q = _quantize_host(w1, scale).T.astype(jnp.bfloat16)      # (3136, 16)
    b1_q = _quantize_host(params["lin1_b"], scale).reshape(1, HID)
    w2_q = _quantize_host(params["lin2_w"], scale).reshape(1, HID)   # f32 row (VPU path)
    b2_q = _quantize_host(params["lin2_b"], scale).reshape(1, 1)
    return _mlp(hq, w1_q, b1_q, w2_q, b2_q, qparams)


# ---------------------------------------------------------------------------
# Pure-JAX (XLA) reference for validation + params / main.
# ---------------------------------------------------------------------------

def _reference_forward(x, params):
    scale = jnp.maximum((jnp.max(x) - jnp.min(x)) / (QMAX - QMIN), 1e-12)
    inv_scale = 1.0 / scale   # kernels quantize activations via *inv_scale; mirror it here

    def q_act(v):
        return jnp.clip(jnp.round(v * inv_scale) + ZERO_POINT, QMIN, QMAX)

    def dq(v):
        return (v - ZERO_POINT) * scale

    def conv(h, w, b):
        out = jax.lax.conv_general_dilated(
            q_act(h), _quantize_host(w, scale), (1, 1), "VALID",
            dimension_numbers=("NCHW", "OIHW", "NCHW"))
        return dq(out + _quantize_host(b, scale)[None, :, None, None])

    def qrelu(h):
        return dq(jnp.maximum(q_act(h), ZERO_POINT))

    def linear(h, w, b):
        return dq(q_act(h) @ _quantize_host(w, scale).T + _quantize_host(b, scale))

    h = qrelu(conv(x, params["conv1_w"], params["conv1_b"]))
    h = qrelu(conv(h, params["conv2_w"], params["conv2_b"]))
    h = h.reshape(h.shape[0], -1)
    h = qrelu(linear(h, params["lin1_w"], params["lin1_b"]))
    return linear(h, params["lin2_w"], params["lin2_b"])


def init_params(key):
    # Deterministic init mimicking PyTorch's default U(-1/sqrt(fan_in), +1/sqrt(fan_in)).
    def uniform(k, shape, fan_in):
        bound = 1.0 / (fan_in ** 0.5)
        return jax.random.uniform(k, shape, jnp.float32, -bound, bound)

    ks = jax.random.split(key, 8)
    return {
        "conv1_w": uniform(ks[0], (C1, C_IN, KS, KS), C_IN * KS * KS),
        "conv1_b": uniform(ks[1], (C1,), C_IN * KS * KS),
        "conv2_w": uniform(ks[2], (C2, C1, KS, KS), C1 * KS * KS),
        "conv2_b": uniform(ks[3], (C2,), C1 * KS * KS),
        "lin1_w": uniform(ks[4], (HID, FEAT), FEAT),
        "lin1_b": uniform(ks[5], (HID,), FEAT),
        "lin2_w": uniform(ks[6], (1, HID), HID),
        "lin2_b": uniform(ks[7], (1,), HID),
    }


if __name__ == "__main__":
    key = jax.random.PRNGKey(0)
    pkey, xkey = jax.random.split(key)
    params = init_params(pkey)
    # The module's forward implies (B, 3, 32, 32) so that linear1 sees 4*28*28 features.
    x = jax.random.normal(xkey, (2, 3, 32, 32), jnp.float32)

    out = jax.jit(quantized_model_forward)(x, params)
    jax.block_until_ready(out)
    assert out.shape == (2, 1) and out.dtype == jnp.float32

    ref = jax.jit(_reference_forward)(x, params)
    jax.block_until_ready(ref)
    assert jnp.allclose(out, ref, rtol=1e-4, atol=1e-4), (out, ref)

    print("KERNEL_OK")
</pallas_src>

<mosaic_0001>
module attributes {stable_mosaic.version = 11 : i64} {
  func.func @_conv_stack_kernel(%arg0: i32, %arg1: memref<2xf32, #tpu.memory_space<smem>>, %arg2: memref<1x32x96xf32, #tpu.memory_space<vmem>>, %arg3: memref<3x96x480xbf16, #tpu.memory_space<vmem>>, %arg4: memref<1x480xf32, #tpu.memory_space<vmem>>, %arg5: memref<3x480x112xbf16, #tpu.memory_space<vmem>>, %arg6: memref<1x112xf32, #tpu.memory_space<vmem>>, %arg7: memref<1x28x112xbf16, #tpu.memory_space<vmem>>) attributes {dimension_semantics = [#tpu.dimension_semantics<parallel>], iteration_bounds = array<i64: 2>, scalar_prefetch = 0 : i64, scratch_operands = 0 : i64, tpu.core_type = #tpu.core_type<tc>, window_params = [{transform_indices = @transform_0, window_bounds = array<i64: 2>}, {transform_indices = @transform_1, window_bounds = array<i64: 1, 32, 96>}, {pipeline_mode = #tpu.pipeline_mode<synchronous>, transform_indices = @transform_2, window_bounds = array<i64: 3, 96, 480>}, {pipeline_mode = #tpu.pipeline_mode<synchronous>, transform_indices = @transform_3, window_bounds = array<i64: 1, 480>}, {pipeline_mode = #tpu.pipeline_mode<synchronous>, transform_indices = @transform_4, window_bounds = array<i64: 3, 480, 112>}, {pipeline_mode = #tpu.pipeline_mode<synchronous>, transform_indices = @transform_5, window_bounds = array<i64: 1, 112>}, {transform_indices = @transform_6, window_bounds = array<i64: 1, 28, 112>}]} {
    %c1 = arith.constant 1 : index
    %0 = memref.load %arg1[%c1] : memref<2xf32, #tpu.memory_space<smem>>
    %c0 = arith.constant 0 : index
    %c0_0 = arith.constant 0 : index
    %c0_1 = arith.constant 0 : index
    %1 = vector.load %arg2[%c0, %c0_0, %c0_1] : memref<1x32x96xf32, #tpu.memory_space<vmem>>, vector<1x32x96xf32>
    %2 = vector.shape_cast %1 : vector<1x32x96xf32> to vector<32x96xf32>
    %3 = vector.broadcast %0 : f32 to vector<32x96xf32>
    %4 = arith.mulf %2, %3 : vector<32x96xf32>
    %5 = math.roundeven %4 : vector<32x96xf32>
    %cst = arith.constant 0.000000e+00 : f32
    %6 = vector.broadcast %cst : f32 to vector<32x96xf32>
    %7 = arith.addf %5, %6 : vector<32x96xf32>
    %cst_2 = arith.constant -2.560000e+02 : f32
    %cst_3 = arith.constant 2.550000e+02 : f32
    %8 = vector.broadcast %cst_2 : f32 to vector<32x96xf32>
    %9 = arith.maximumf %8, %7 : vector<32x96xf32>
    %10 = vector.broadcast %cst_3 : f32 to vector<32x96xf32>
    %11 = arith.minimumf %10, %9 : vector<32x96xf32>
    %12 = vector.extract_strided_slice %11 {offsets = [0, 0], sizes = [30, 96], strides = [1, 1]} : vector<32x96xf32> to vector<30x96xf32>
    %13 = arith.truncf %12 : vector<30x96xf32> to vector<30x96xbf16>
    %c0_4 = arith.constant 0 : index
    %c0_5 = arith.constant 0 : index
    %c0_6 = arith.constant 0 : index
    %14 = vector.load %arg3[%c0_4, %c0_5, %c0_6] : memref<3x96x480xbf16, #tpu.memory_space<vmem>>, vector<1x96x480xbf16>
    %15 = vector.shape_cast %14 : vector<1x96x480xbf16> to vector<96x480xbf16>
    %cst_7 = arith.constant dense<0.000000e+00> : vector<30x480xf32>
    %16 = tpu.matmul %13, %15, %cst_7 {dimension_numbers = #tpu.dot_dimension_numbers<[1], [0], [0], [1], [0, 0, 1, 1], [], []>} : vector<30x96xbf16>, vector<96x480xbf16>, vector<30x480xf32> -> vector<30x480xf32>
    %17 = vector.extract_strided_slice %11 {offsets = [1, 0], sizes = [30, 96], strides = [1, 1]} : vector<32x96xf32> to vector<30x96xf32>
    %18 = arith.truncf %17 : vector<30x96xf32> to vector<30x96xbf16>
    %c1_8 = arith.constant 1 : index
    %c0_9 = arith.constant 0 : index
    %c0_10 = arith.constant 0 : index
    %19 = vector.load %arg3[%c1_8, %c0_9, %c0_10] : memref<3x96x480xbf16, #tpu.memory_space<vmem>>, vector<1x96x480xbf16>
    %20 = vector.shape_cast %19 : vector<1x96x480xbf16> to vector<96x480xbf16>
    %cst_11 = arith.constant dense<0.000000e+00> : vector<30x480xf32>
    %21 = tpu.matmul %18, %20, %cst_11 {dimension_numbers = #tpu.dot_dimension_numbers<[1], [0], [0], [1], [0, 0, 1, 1], [], []>} : vector<30x96xbf16>, vector<96x480xbf16>, vector<30x480xf32> -> vector<30x480xf32>
    %22 = arith.addf %16, %21 : vector<30x480xf32>
    %23 = vector.extract_strided_slice %11 {offsets = [2, 0], sizes = [30, 96], strides = [1, 1]} : vector<32x96xf32> to vector<30x96xf32>
    %24 = arith.truncf %23 : vector<30x96xf32> to vector<30x96xbf16>
    %c2 = arith.constant 2 : index
    %c0_12 = arith.constant 0 : index
    %c0_13 = arith.constant 0 : index
    %25 = vector.load %arg3[%c2, %c0_12, %c0_13] : memref<3x96x480xbf16, #tpu.memory_space<vmem>>, vector<1x96x480xbf16>
    %26 = vector.shape_cast %25 : vector<1x96x480xbf16> to vector<96x480xbf16>
    %cst_14 = arith.constant dense<0.000000e+00> : vector<30x480xf32>
    %27 = tpu.matmul %24, %26, %cst_14 {dimension_numbers = #tpu.dot_dimension_numbers<[1], [0], [0], [1], [0, 0, 1, 1], [], []>} : vector<30x96xbf16>, vector<96x480xbf16>, vector<30x480xf32> -> vector<30x480xf32>
    %28 = arith.addf %22, %27 : vector<30x480xf32>
    %c0_15 = arith.constant 0 : index
    %c0_16 = arith.constant 0 : index
    %29 = vector.load %arg4[%c0_15, %c0_16] : memref<1x480xf32, #tpu.memory_space<vmem>>, vector<1x480xf32>
    %30 = vector.broadcast %29 : vector<1x480xf32> to vector<30x480xf32>
    %31 = arith.addf %28, %30 : vector<30x480xf32>
    %32 = math.roundeven %31 : vector<30x480xf32>
    %cst_17 = arith.constant 0.000000e+00 : f32
    %cst_18 = arith.constant 2.550000e+02 : f32
    %33 = vector.broadcast %cst_17 : f32 to vector<30x480xf32>
    %34 = arith.maximumf %33, %32 : vector<30x480xf32>
    %35 = vector.broadcast %cst_18 : f32 to vector<30x480xf32>
    %36 = arith.minimumf %35, %34 : vector<30x480xf32>
    %37 = vector.extract_strided_slice %36 {offsets = [0, 0], sizes = [28, 480], strides = [1, 1]} : vector<30x480xf32> to vector<28x480xf32>
    %38 = arith.truncf %37 : vector<28x480xf32> to vector<28x480xbf16>
    %c0_19 = arith.constant 0 : index
    %c0_20 = arith.constant 0 : index
    %c0_21 = arith.constant 0 : index
    %39 = vector.load %arg5[%c0_19, %c0_20, %c0_21] : memref<3x480x112xbf16, #tpu.memory_space<vmem>>, vector<1x480x112xbf16>
    %40 = vector.shape_cast %39 : vector<1x480x112xbf16> to vector<480x112xbf16>
    %cst_22 = arith.constant dense<0.000000e+00> : vector<28x112xf32>
    %41 = tpu.matmul %38, %40, %cst_22 {dimension_numbers = #tpu.dot_dimension_numbers<[1], [0], [0], [1], [0, 0, 1, 1], [], []>} : vector<28x480xbf16>, vector<480x112xbf16>, vector<28x112xf32> -> vector<28x112xf32>
    %42 = vector.extract_strided_slice %36 {offsets = [1, 0], sizes = [28, 480], strides = [1, 1]} : vector<30x480xf32> to vector<28x480xf32>
    %43 = arith.truncf %42 : vector<28x480xf32> to vector<28x480xbf16>
    %c1_23 = arith.constant 1 : index
    %c0_24 = arith.constant 0 : index
    %c0_25 = arith.constant 0 : index
    %44 = vector.load %arg5[%c1_23, %c0_24, %c0_25] : memref<3x480x112xbf16, #tpu.memory_space<vmem>>, vector<1x480x112xbf16>
    %45 = vector.shape_cast %44 : vector<1x480x112xbf16> to vector<480x112xbf16>
    %cst_26 = arith.constant dense<0.000000e+00> : vector<28x112xf32>
    %46 = tpu.matmul %43, %45, %cst_26 {dimension_numbers = #tpu.dot_dimension_numbers<[1], [0], [0], [1], [0, 0, 1, 1], [], []>} : vector<28x480xbf16>, vector<480x112xbf16>, vector<28x112xf32> -> vector<28x112xf32>
    %47 = arith.addf %41, %46 : vector<28x112xf32>
    %48 = vector.extract_strided_slice %36 {offsets = [2, 0], sizes = [28, 480], strides = [1, 1]} : vector<30x480xf32> to vector<28x480xf32>
    %49 = arith.truncf %48 : vector<28x480xf32> to vector<28x480xbf16>
    %c2_27 = arith.constant 2 : index
    %c0_28 = arith.constant 0 : index
    %c0_29 = arith.constant 0 : index
    %50 = vector.load %arg5[%c2_27, %c0_28, %c0_29] : memref<3x480x112xbf16, #tpu.memory_space<vmem>>, vector<1x480x112xbf16>
    %51 = vector.shape_cast %50 : vector<1x480x112xbf16> to vector<480x112xbf16>
    %cst_30 = arith.constant dense<0.000000e+00> : vector<28x112xf32>
    %52 = tpu.matmul %49, %51, %cst_30 {dimension_numbers = #tpu.dot_dimension_numbers<[1], [0], [0], [1], [0, 0, 1, 1], [], []>} : vector<28x480xbf16>, vector<480x112xbf16>, vector<28x112xf32> -> vector<28x112xf32>
    %53 = arith.addf %47, %52 : vector<28x112xf32>
    %c0_31 = arith.constant 0 : index
    %c0_32 = arith.constant 0 : index
    %54 = vector.load %arg6[%c0_31, %c0_32] : memref<1x112xf32, #tpu.memory_space<vmem>>, vector<1x112xf32>
    %55 = vector.broadcast %54 : vector<1x112xf32> to vector<28x112xf32>
    %56 = arith.addf %53, %55 : vector<28x112xf32>
    %57 = math.roundeven %56 : vector<28x112xf32>
    %cst_33 = arith.constant 0.000000e+00 : f32
    %cst_34 = arith.constant 2.550000e+02 : f32
    %58 = vector.broadcast %cst_33 : f32 to vector<28x112xf32>
    %59 = arith.maximumf %58, %57 : vector<28x112xf32>
    %60 = vector.broadcast %cst_34 : f32 to vector<28x112xf32>
    %61 = arith.minimumf %60, %59 : vector<28x112xf32>
    %62 = arith.truncf %61 : vector<28x112xf32> to vector<28x112xbf16>
    %c0_35 = arith.constant 0 : index
    %c0_36 = arith.constant 0 : index
    %c0_37 = arith.constant 0 : index
    %63 = vector.load %arg7[%c0_35, %c0_36, %c0_37] : memref<1x28x112xbf16, #tpu.memory_space<vmem>>, vector<1x28x112xbf16>
    %64 = vector.shape_cast %63 : vector<1x28x112xbf16> to vector<28x112xbf16>
    %65 = vector.shape_cast %62 : vector<28x112xbf16> to vector<1x28x112xbf16>
    tpu.vector_store %arg7[%c0_35, %c0_36, %c0_37], %65 {strides = array<i32>} : memref<1x28x112xbf16, #tpu.memory_space<vmem>>, vector<1x28x112xbf16>,
    return
  }
  func.func @transform_0(%arg0: i32) -> i32 {
    %c0_i32 = arith.constant 0 : i32
    %c0_i32_0 = arith.constant 0 : i32
    return %c0_i32 : i32
  }
  func.func @transform_1(%arg0: i32) -> (i32, i32, i32) {
    %c0_i32 = arith.constant 0 : i32
    %c0_i32_0 = arith.constant 0 : i32
    %c0_i32_1 = arith.constant 0 : i32
    return %arg0, %c0_i32, %c0_i32_0 : i32, i32, i32
  }
  func.func @transform_2(%arg0: i32) -> (i32, i32, i32) {
    %c0_i32 = arith.constant 0 : i32
    %c0_i32_0 = arith.constant 0 : i32
    %c0_i32_1 = arith.constant 0 : i32
    %c0_i32_2 = arith.constant 0 : i32
    return %c0_i32, %c0_i32_0, %c0_i32_1 : i32, i32, i32
  }
  func.func @transform_3(%arg0: i32) -> (i32, i32) {
    %c0_i32 = arith.constant 0 : i32
    %c0_i32_0 = arith.constant 0 : i32
    %c0_i32_1 = arith.constant 0 : i32
    return %c0_i32, %c0_i32_0 : i32, i32
  }
  func.func @transform_4(%arg0: i32) -> (i32, i32, i32) {
    %c0_i32 = arith.constant 0 : i32
    %c0_i32_0 = arith.constant 0 : i32
    %c0_i32_1 = arith.constant 0 : i32
    %c0_i32_2 = arith.constant 0 : i32
    return %c0_i32, %c0_i32_0, %c0_i32_1 : i32, i32, i32
  }
  func.func @transform_5(%arg0: i32) -> (i32, i32) {
    %c0_i32 = arith.constant 0 : i32
    %c0_i32_0 = arith.constant 0 : i32
    %c0_i32_1 = arith.constant 0 : i32
    return %c0_i32, %c0_i32_0 : i32, i32
  }
  func.func @transform_6(%arg0: i32) -> (i32, i32, i32) {
    %c0_i32 = arith.constant 0 : i32
    %c0_i32_0 = arith.constant 0 : i32
    %c0_i32_1 = arith.constant 0 : i32
    return %arg0, %c0_i32, %c0_i32_0 : i32, i32, i32
  }
}

module attributes {stable_mosaic.version = 11 : i64} {
  func.func @_mlp_kernel(%arg0: i32, %arg1: memref<2xf32, #tpu.memory_space<smem>>, %arg2: memref<16x3136xbf16, #tpu.memory_space<vmem>>, %arg3: memref<3136x16xbf16, #tpu.memory_space<vmem>>, %arg4: memref<1x16xf32, #tpu.memory_space<vmem>>, %arg5: memref<1x16xf32, #tpu.memory_space<vmem>>, %arg6: memref<1x1xf32, #tpu.memory_space<vmem>>, %arg7: memref<16x1xf32, #tpu.memory_space<vmem>>) attributes {dimension_semantics = [#tpu.dimension_semantics<parallel>], iteration_bounds = array<i64: 1>, scalar_prefetch = 0 : i64, scratch_operands = 0 : i64, tpu.core_type = #tpu.core_type<tc>, window_params = [{transform_indices = @transform_0, window_bounds = array<i64: 2>}, {transform_indices = @transform_1, window_bounds = array<i64: 16, 3136>}, {pipeline_mode = #tpu.pipeline_mode<synchronous>, transform_indices = @transform_2, window_bounds = array<i64: 3136, 16>}, {pipeline_mode = #tpu.pipeline_mode<synchronous>, transform_indices = @transform_3, window_bounds = array<i64: 1, 16>}, {pipeline_mode = #tpu.pipeline_mode<synchronous>, transform_indices = @transform_4, window_bounds = array<i64: 1, 16>}, {pipeline_mode = #tpu.pipeline_mode<synchronous>, transform_indices = @transform_5, window_bounds = array<i64: 1, 1>}, {transform_indices = @transform_6, window_bounds = array<i64: 16, 1>}]} {
    %c0 = arith.constant 0 : index
    %0 = memref.load %arg1[%c0] : memref<2xf32, #tpu.memory_space<smem>>
    %c0_0 = arith.constant 0 : index
    %c0_1 = arith.constant 0 : index
    %1 = vector.load %arg2[%c0_0, %c0_1] : memref<16x3136xbf16, #tpu.memory_space<vmem>>, vector<16x3136xbf16>
    %c0_2 = arith.constant 0 : index
    %c0_3 = arith.constant 0 : index
    %2 = vector.load %arg3[%c0_2, %c0_3] : memref<3136x16xbf16, #tpu.memory_space<vmem>>, vector<3136x16xbf16>
    %cst = arith.constant dense<0.000000e+00> : vector<16x16xf32>
    %3 = tpu.matmul %1, %2, %cst {dimension_numbers = #tpu.dot_dimension_numbers<[1], [0], [0], [1], [0, 0, 1, 1], [], []>} : vector<16x3136xbf16>, vector<3136x16xbf16>, vector<16x16xf32> -> vector<16x16xf32>
    %c0_4 = arith.constant 0 : index
    %c0_5 = arith.constant 0 : index
    %4 = vector.load %arg4[%c0_4, %c0_5] : memref<1x16xf32, #tpu.memory_space<vmem>>, vector<1x16xf32>
    %5 = vector.broadcast %4 : vector<1x16xf32> to vector<16x16xf32>
    %6 = arith.addf %3, %5 : vector<16x16xf32>
    %7 = math.roundeven %6 : vector<16x16xf32>
    %cst_6 = arith.constant 0.000000e+00 : f32
    %cst_7 = arith.constant 2.550000e+02 : f32
    %8 = vector.broadcast %cst_6 : f32 to vector<16x16xf32>
    %9 = arith.maximumf %8, %7 : vector<16x16xf32>
    %10 = vector.broadcast %cst_7 : f32 to vector<16x16xf32>
    %11 = arith.minimumf %10, %9 : vector<16x16xf32>
    %c0_8 = arith.constant 0 : index
    %c0_9 = arith.constant 0 : index
    %12 = vector.load %arg5[%c0_8, %c0_9] : memref<1x16xf32, #tpu.memory_space<vmem>>, vector<1x16xf32>
    %13 = vector.broadcast %12 : vector<1x16xf32> to vector<16x16xf32>
    %14 = arith.mulf %11, %13 : vector<16x16xf32>
    %cst_10 = arith.constant dense<0.000000e+00> : vector<16xf32>
    %15 = vector.multi_reduction <add>, %14, %cst_10 [1] : vector<16x16xf32> to vector<16xf32>
    %16 = vector.shape_cast %15 : vector<16xf32> to vector<16x1xf32>
    %c0_11 = arith.constant 0 : index
    %c0_12 = arith.constant 0 : index
    %17 = vector.load %arg6[%c0_11, %c0_12] : memref<1x1xf32, #tpu.memory_space<vmem>>, vector<1x1xf32>
    %18 = vector.broadcast %17 : vector<1x1xf32> to vector<16x1xf32>
    %19 = arith.addf %16, %18 : vector<16x1xf32>
    %cst_13 = arith.constant 0.000000e+00 : f32
    %20 = vector.broadcast %cst_13 : f32 to vector<16x1xf32>
    %21 = arith.subf %19, %20 : vector<16x1xf32>
    %22 = vector.broadcast %0 : f32 to vector<16x1xf32>
    %23 = arith.mulf %21, %22 : vector<16x1xf32>
    %c0_14 = arith.constant 0 : index
    %c0_15 = arith.constant 0 : index
    %24 = vector.load %arg7[%c0_14, %c0_15] : memref<16x1xf32, #tpu.memory_space<vmem>>, vector<16x1xf32>
    tpu.vector_store %arg7[%c0_14, %c0_15], %23 {strides = array<i32>} : memref<16x1xf32, #tpu.memory_space<vmem>>, vector<16x1xf32>,
    return
  }
  func.func @transform_0(%arg0: i32) -> i32 {
    %c0_i32 = arith.constant 0 : i32
    %c0_i32_0 = arith.constant 0 : i32
    return %c0_i32 : i32
  }
  func.func @transform_1(%arg0: i32) -> (i32, i32) {
    %c0_i32 = arith.constant 0 : i32
    %c0_i32_0 = arith.constant 0 : i32
    return %arg0, %c0_i32 : i32, i32
  }
  func.func @transform_2(%arg0: i32) -> (i32, i32) {
    %c0_i32 = arith.constant 0 : i32
    %c0_i32_0 = arith.constant 0 : i32
    %c0_i32_1 = arith.constant 0 : i32
    return %c0_i32, %c0_i32_0 : i32, i32
  }
  func.func @transform_3(%arg0: i32) -> (i32, i32) {
    %c0_i32 = arith.constant 0 : i32
    %c0_i32_0 = arith.constant 0 : i32
    %c0_i32_1 = arith.constant 0 : i32
    return %c0_i32, %c0_i32_0 : i32, i32
  }
  func.func @transform_4(%arg0: i32) -> (i32, i32) {
    %c0_i32 = arith.constant 0 : i32
    %c0_i32_0 = arith.constant 0 : i32
    %c0_i32_1 = arith.constant 0 : i32
    return %c0_i32, %c0_i32_0 : i32, i32
  }
  func.func @transform_5(%arg0: i32) -> (i32, i32) {
    %c0_i32 = arith.constant 0 : i32
    %c0_i32_0 = arith.constant 0 : i32
    %c0_i32_1 = arith.constant 0 : i32
    return %c0_i32, %c0_i32_0 : i32, i32
  }
  func.func @transform_6(%arg0: i32) -> (i32, i32) {
    %c0_i32 = arith.constant 0 : i32
    %c0_i32_0 = arith.constant 0 : i32
    return %arg0, %c0_i32 : i32, i32
  }
}

</mosaic_0001>

<llo_original>
// kernel: tile.13
$region0: #{tile.13}
  #allocation0 [shape = 's32[1]{0}', space=sflag, size = 0x4, scoped, tag = 'scoped memory for tile.13']
  %s0 = inlined_call_operand.vmem [shape: f32[16], index: 0, kind: input, shape index: {}]
  %s1 = inlined_call_operand.vmem [shape: f32[30,16], index: 1, kind: output, shape index: {}]
  // Predicated region
  $region2: #{tile.13} parent=0 // pred_check
    _
  $region3: #{tile.13} parent=0 // pred_check_branch
    %3 = sbr.rel (0) target = $region5
  $region4: #{tile.13} parent=0 // pred_region
    _
  $region5: #{tile.13} parent=0 // pred_fallthru
    _
  %v4 = vld [vmem:[%s0] ss:$0 sm:$0xff]
  %5 = vst [vmem:[%s1] sm:$0xff] %v4
  %s6 = scalar_lea.vmem %s1, 8
  %7 = vst [vmem:[%s6] sm:$0xff] %v4
  %s8 = scalar_lea.vmem %s1, 16
  %9 = vst [vmem:[%s8] sm:$0xff] %v4
  %s10 = scalar_lea.vmem %s1, 24
  %11 = vst [vmem:[%s10] sm:$0xff] %v4

// kernel: tile.14
$region0: #{tile.14}
  %s0 = inlined_call_operand.vmem [shape: f32[30,16], index: 0, kind: input, shape index: {}]
  %s1 = inlined_call_operand.vmem [shape: f32[1,480], index: 1, kind: output, shape index: {}]
  $region1: #{tile.14} parent=0
    #allocation0 [shape = 'u8[16384]{0}', space=vmem, size = 0x4000, scoped, tag = 'scoped mem for output reshape']
    %v2 = vld [vmem:[%s0] ss:$8 sm:$0xf]
    %vm3 = vcmask 130048
    %4 = vst.msk [vmem:[#allocation0] ss:$8 sm:$0xf] %vm3, %v2
    %s5 = scalar_lea.vmem %s0, 7
    %v6 = vld [vmem:[%s5] ss:$8 sm:$0x7]
    %7 = vrot.lane.b32.xlu0 %v6, 112
    %v8 = vpop.permute.xlu0 %7
    %vm9 = vcmask 1048448
    %10 = vst.msk [vmem:[#allocation0] ss:$8 sm:$0x7] %vm9, %v8
    %s11 = scalar_lea.vmem %s0, 6
    %v12 = vld [vmem:[%s11] ss:$8 sm:$0x7]
    %13 = vrot.lane.b32.xlu0 %v12, 96
    %v14 = vpop.permute.xlu0 %13
    %vm15 = vcmask 917248
    %16 = vst.msk [vmem:[#allocation0] ss:$8 sm:$0x7] %vm15, %v14
    %s17 = scalar_lea.vmem %s0, 5
    %v18 = vld [vmem:[%s17] ss:$8 sm:$0xf]
    %19 = vrot.lane.b32.xlu0 %v18, 80
    %v20 = vpop.permute.xlu0 %19
    %vm21 = vcmask 786048
    %22 = vst.msk [vmem:[#allocation0] ss:$8 sm:$0xf] %vm21, %v20
    %s23 = scalar_lea.vmem %s0, 4
    %v24 = vld [vmem:[%s23] ss:$8 sm:$0xf]
    %25 = vrot.lane.b32.xlu0 %v24, 64
    %v26 = vpop.permute.xlu0 %25
    %vm27 = vcmask 654848
    %28 = vst.msk [vmem:[#allocation0] ss:$8 sm:$0xf] %vm27, %v26
    %s29 = scalar_lea.vmem %s0, 3
    %v30 = vld [vmem:[%s29] ss:$8 sm:$0xf]
    %31 = vrot.lane.b32.xlu0 %v30, 48
    %v32 = vpop.permute.xlu0 %31
    %vm33 = vcmask 523648
    %34 = vst.msk [vmem:[#allocation0] ss:$8 sm:$0xf] %vm33, %v32
    %s35 = scalar_lea.vmem %s0, 2
    %v36 = vld [vmem:[%s35] ss:$8 sm:$0xf]
    %37 = vrot.lane.b32.xlu0 %v36, 32
    %v38 = vpop.permute.xlu0 %37
    %vm39 = vcmask 392448
    %40 = vst.msk [vmem:[#allocation0] ss:$8 sm:$0xf] %vm39, %v38
    %s41 = scalar_lea.vmem %s0, 1
    %v42 = vld [vmem:[%s41] ss:$8 sm:$0xf]
    %43 = vrot.lane.b32.xlu0 %v42, 16
    %v44 = vpop.permute.xlu0 %43
    %vm45 = vcmask 261248
    %46 = vst.msk [vmem:[#allocation0] ss:$8 sm:$0xf] %vm45, %v44
    %s48 = ssub.s32 2, 1
    %v49 = vld [vmem:[#allocation0] sm:%s48]
    %s51 = ssub.s32 2, 1
    %52 = vst [vmem:[%s1] sm:%s51] %v49
    %s53 = scalar_lea.vmem [#allocation0], 8
    %v54 = vld [vmem:[%s53] sm:%s48]
    %s56 = ssub.s32 2, 1
    %s57 = scalar_lea.vmem %s1, 1
    %58 = vst [vmem:[%s57] sm:%s56] %v54
    %s59 = scalar_lea.vmem [#allocation0], 16
    %v60 = vld [vmem:[%s59] sm:%s48]
    %s62 = ssub.s32 2, 1
    %s63 = scalar_lea.vmem %s1, 2
    %64 = vst [vmem:[%s63] sm:%s62] %v60
    %s65 = scalar_lea.vmem [#allocation0], 24
    %v66 = vld [vmem:[%s65] sm:%s48]
    %s68 = ssub.s32 2, 1
    %s69 = scalar_lea.vmem %s1, 3
    %70 = vst [vmem:[%s69] sm:%s68] %v66

// kernel: tile.18
$region0: #{tile.18}
  #allocation0 [shape = 's32[1]{0}', space=sflag, size = 0x4, scoped, tag = 'scoped memory for tile.18']
  %s0 = inlined_call_operand.vmem [shape: f32[4], index: 0, kind: input, shape index: {}]
  %s1 = inlined_call_operand.vmem [shape: f32[28,4], index: 1, kind: output, shape index: {}]
  // Predicated region
  $region2: #{tile.18} parent=0 // pred_check
    _
  $region3: #{tile.18} parent=0 // pred_check_branch
    %3 = sbr.rel (0) target = $region5
  $region4: #{tile.18} parent=0 // pred_region
    _
  $region5: #{tile.18} parent=0 // pred_fallthru
    _
  %v4 = vld [vmem:[%s0] ss:$0 sm:$0xff]
  %5 = vst [vmem:[%s1] sm:$0xff] %v4
  %s6 = scalar_lea.vmem %s1, 8
  %7 = vst [vmem:[%s6] sm:$0xff] %v4
  %s8 = scalar_lea.vmem %s1, 16
  %9 = vst [vmem:[%s8] sm:$0xff] %v4
  %s10 = scalar_lea.vmem %s1, 24
  %11 = vst [vmem:[%s10] sm:$0xff] %v4

// kernel: tile.19
$region0: #{tile.19}
  %s0 = inlined_call_operand.vmem [shape: f32[28,4], index: 0, kind: input, shape index: {}]
  %s1 = inlined_call_operand.vmem [shape: f32[1,112], index: 1, kind: output, shape index: {}]
  $region1: #{tile.19} parent=0
    #allocation0 [shape = 'u8[4096]{0}', space=vmem, size = 0x1000, scoped, tag = 'scoped mem for output reshape']
    %v2 = vld [vmem:[%s0] sm:$0x1]
    %vm3 = vcmask 31744
    %4 = vst.msk [vmem:[#allocation0] sm:$0x1] %vm3, %v2
    %s5 = scalar_lea.vmem %s0, 27
    %v6 = vld [vmem:[%s5] sm:$0x1]
    %7 = vrot.lane.b32.xlu0 %v6, 108
    %v8 = vpop.permute.xlu0 %7
    %vm9 = vcmask 917344
    %10 = vst.msk [vmem:[#allocation0] sm:$0x1] %vm9, %v8
    %s11 = scalar_lea.vmem %s0, 26
    %v12 = vld [vmem:[%s11] sm:$0x1]
    %13 = vrot.lane.b32.xlu0 %v12, 104
    %v14 = vpop.permute.xlu0 %13
    %vm15 = vcmask 884544
    %16 = vst.msk [vmem:[#allocation0] sm:$0x1] %vm15, %v14
    %s17 = scalar_lea.vmem %s0, 25
    %v18 = vld [vmem:[%s17] sm:$0x1]
    %19 = vrot.lane.b32.xlu0 %v18, 100
    %v20 = vpop.permute.xlu0 %19
    %vm21 = vcmask 851744
    %22 = vst.msk [vmem:[#allocation0] sm:$0x1] %vm21, %v20
    %s23 = scalar_lea.vmem %s0, 24
    %v24 = vld [vmem:[%s23] sm:$0x1]
    %25 = vrot.lane.b32.xlu0 %v24, 96
    %v26 = vpop.permute.xlu0 %25
    %vm27 = vcmask 818944
    %28 = vst.msk [vmem:[#allocation0] sm:$0x1] %vm27, %v26
    %s29 = scalar_lea.vmem %s0, 23
    %v30 = vld [vmem:[%s29] sm:$0x1]
    %31 = vrot.lane.b32.xlu0 %v30, 92
    %v32 = vpop.permute.xlu0 %31
    %vm33 = vcmask 786144
    %34 = vst.msk [vmem:[#allocation0] sm:$0x1] %vm33, %v32
    %s35 = scalar_lea.vmem %s0, 22
    %v36 = vld [vmem:[%s35] sm:$0x1]
    %37 = vrot.lane.b32.xlu0 %v36, 88
    %v38 = vpop.permute.xlu0 %37
    %vm39 = vcmask 753344
    %40 = vst.msk [vmem:[#allocation0] sm:$0x1] %vm39, %v38
    %s41 = scalar_lea.vmem %s0, 21
    %v42 = vld [vmem:[%s41] sm:$0x1]
    %43 = vrot.lane.b32.xlu0 %v42, 84
    %v44 = vpop.permute.xlu0 %43
    %vm45 = vcmask 720544
    %46 = vst.msk [vmem:[#allocation0] sm:$0x1] %vm45, %v44
    %s47 = scalar_lea.vmem %s0, 20
    %v48 = vld [vmem:[%s47] sm:$0x1]
    %49 = vrot.lane.b32.xlu0 %v48, 80
    %v50 = vpop.permute.xlu0 %49
    %vm51 = vcmask 687744
    %52 = vst.msk [vmem:[#allocation0] sm:$0x1] %vm51, %v50
    %s53 = scalar_lea.vmem %s0, 19
    %v54 = vld [vmem:[%s53] sm:$0x1]
    %55 = vrot.lane.b32.xlu0 %v54, 76
    %v56 = vpop.permute.xlu0 %55
    %vm57 = vcmask 654944
    %58 = vst.msk [vmem:[#allocation0] sm:$0x1] %vm57, %v56
    %s59 = scalar_lea.vmem %s0, 18
    %v60 = vld [vmem:[%s59] sm:$0x1]
    %61 = vrot.lane.b32.xlu0 %v60, 72
    %v62 = vpop.permute.xlu0 %61
    %vm63 = vcmask 622144
    %64 = vst.msk [vmem:[#allocation0] sm:$0x1] %vm63, %v62
    %s65 = scalar_lea.vmem %s0, 17
    %v66 = vld [vmem:[%s65] sm:$0x1]
    %67 = vrot.lane.b32.xlu0 %v66, 68
    %v68 = vpop.permute.xlu0 %67
    %vm69 = vcmask 589344
    %70 = vst.msk [vmem:[#allocation0] sm:$0x1] %vm69, %v68
    %s71 = scalar_lea.vmem %s0, 16
    %v72 = vld [vmem:[%s71] sm:$0x1]
    %73 = vrot.lane.b32.xlu0 %v72, 64
    %v74 = vpop.permute.xlu0 %73
    %vm75 = vcmask 556544
    %76 = vst.msk [vmem:[#allocation0] sm:$0x1] %vm75, %v74
    %s77 = scalar_lea.vmem %s0, 15
    %v78 = vld [vmem:[%s77] sm:$0x1]
    %79 = vrot.lane.b32.xlu0 %v78, 60
    %v80 = vpop.permute.xlu0 %79
    %vm81 = vcmask 523744
    %82 = vst.msk [vmem:[#allocation0] sm:$0x1] %vm81, %v80
    %s83 = scalar_lea.vmem %s0, 14
    %v84 = vld [vmem:[%s83] sm:$0x1]
    %85 = vrot.lane.b32.xlu0 %v84, 56
    %v86 = vpop.permute.xlu0 %85
    %vm87 = vcmask 490944
    %88 = vst.msk [vmem:[#allocation0] sm:$0x1] %vm87, %v86
    %s89 = scalar_lea.vmem %s0, 13
    %v90 = vld [vmem:[%s89] sm:$0x1]
    %91 = vrot.lane.b32.xlu0 %v90, 52
    %v92 = vpop.permute.xlu0 %91
    %vm93 = vcmask 458144
    %94 = vst.msk [vmem:[#allocation0] sm:$0x1] %vm93, %v92
    %s95 = scalar_lea.vmem %s0, 12
    %v96 = vld [vmem:[%s95] sm:$0x1]
    %97 = vrot.lane.b32.xlu0 %v96, 48
    %v98 = vpop.permute.xlu0 %97
    %vm99 = vcmask 425344
    %100 = vst.msk [vmem:[#allocation0] sm:$0x1] %vm99, %v98
    %s101 = scalar_lea.vmem %s0, 11
    %v102 = vld [vmem:[%s101] sm:$0x1]
    %103 = vrot.lane.b32.xlu0 %v102, 44
    %v104 = vpop.permute.xlu0 %103
    %vm105 = vcmask 392544
    %106 = vst.msk [vmem:[#allocation0] sm:$0x1] %vm105, %v104
    %s107 = scalar_lea.vmem %s0, 10
    %v108 = vld [vmem:[%s107] sm:$0x1]
    %109 = vrot.lane.b32.xlu0 %v108, 40
    %v110 = vpop.permute.xlu0 %109
    %vm111 = vcmask 359744
    %112 = vst.msk [vmem:[#allocation0] sm:$0x1] %vm111, %v110
    %s113 = scalar_lea.vmem %s0, 9
    %v114 = vld [vmem:[%s113] sm:$0x1]
    %115 = vrot.lane.b32.xlu0 %v114, 36
    %v116 = vpop.permute.xlu0 %115
    %vm117 = vcmask 326944
    %118 = vst.msk [vmem:[#allocation0] sm:$0x1] %vm117, %v116
    %s119 = scalar_lea.vmem %s0, 8
    %v120 = vld [vmem:[%s119] sm:$0x1]
    %121 = vrot.lane.b32.xlu0 %v120, 32
    %v122 = vpop.permute.xlu0 %121
    %vm123 = vcmask 294144
    %124 = vst.msk [vmem:[#allocation0] sm:$0x1] %vm123, %v122
    %s125 = scalar_lea.vmem %s0, 7
    %v126 = vld [vmem:[%s125] sm:$0x1]
    %127 = vrot.lane.b32.xlu0 %v126, 28
    %v128 = vpop.permute.xlu0 %127
    %vm129 = vcmask 261344
    %130 = vst.msk [vmem:[#allocation0] sm:$0x1] %vm129, %v128
    %s131 = scalar_lea.vmem %s0, 6
    %v132 = vld [vmem:[%s131] sm:$0x1]
    %133 = vrot.lane.b32.xlu0 %v132, 24
    %v134 = vpop.permute.xlu0 %133
    %vm135 = vcmask 228544
    %136 = vst.msk [vmem:[#allocation0] sm:$0x1] %vm135, %v134
    %s137 = scalar_lea.vmem %s0, 5
    %v138 = vld [vmem:[%s137] sm:$0x1]
    %139 = vrot.lane.b32.xlu0 %v138, 20
    %v140 = vpop.permute.xlu0 %139
    %vm141 = vcmask 195744
    %142 = vst.msk [vmem:[#allocation0] sm:$0x1] %vm141, %v140
    %s143 = scalar_lea.vmem %s0, 4
    %v144 = vld [vmem:[%s143] sm:$0x1]
    %145 = vrot.lane.b32.xlu0 %v144, 16
    %v146 = vpop.permute.xlu0 %145
    %vm147 = vcmask 162944
    %148 = vst.msk [vmem:[#allocation0] sm:$0x1] %vm147, %v146
    %s149 = scalar_lea.vmem %s0, 3
    %v150 = vld [vmem:[%s149] sm:$0x1]
    %151 = vrot.lane.b32.xlu0 %v150, 12
    %v152 = vpop.permute.xlu0 %151
    %vm153 = vcmask 130144
    %154 = vst.msk [vmem:[#allocation0] sm:$0x1] %vm153, %v152
    %s155 = scalar_lea.vmem %s0, 2
    %v156 = vld [vmem:[%s155] sm:$0x1]
    %157 = vrot.lane.b32.xlu0 %v156, 8
    %v158 = vpop.permute.xlu0 %157
    %vm159 = vcmask 97344
    %160 = vst.msk [vmem:[#allocation0] sm:$0x1] %vm159, %v158
    %s161 = scalar_lea.vmem %s0, 1
    %v162 = vld [vmem:[%s161] sm:$0x1]
    %163 = vrot.lane.b32.xlu0 %v162, 4
    %v164 = vpop.permute.xlu0 %163
    %vm165 = vcmask 64544
    %166 = vst.msk [vmem:[#allocation0] sm:$0x1] %vm165, %v164
    %s168 = ssub.s32 2, 1
    %v169 = vld [vmem:[#allocation0] sm:%s168]
    %s171 = ssub.s32 2, 1
    %172 = vst [vmem:[%s1] sm:%s171] %v169

// kernel: quantized_model_forward.2
$region0: #{quantized_model_forward.2}
  #allocation0 [shape = 'u32[]', space=smem, size = 0x4, offset = 0x4, fixed_abs, tag = 'smem constant byte address 0x4 - core index']
  #allocation1 [shape = 'u32[72,128]{1,0:T(1,128)}', space=vmem, size = 0x9000, scoped, tag = 'internal scratch']
  %s0 = inlined_call_operand.vmem [shape: f32[2], index: 0, kind: input, shape index: {}]
  %s1 = inlined_call_operand.vmem [shape: f32[2,32,96], index: 1, kind: input, shape index: {}]
  %s2 = inlined_call_operand.vmem [shape: bf16[3,96,480], index: 2, kind: input, shape index: {}]
  %s3 = inlined_call_operand.vmem [shape: f32[1,480], index: 3, kind: input, shape index: {}]
  %s4 = inlined_call_operand.vmem [shape: bf16[3,480,112], index: 4, kind: input, shape index: {}]
  %s5 = inlined_call_operand.vmem [shape: f32[1,112], index: 5, kind: input, shape index: {}]
  %s6 = inlined_call_operand.vmem [shape: bf16[2,28,112], index: 6, kind: output, shape index: {}]
  %s7 = sld [smem:[#allocation0]]
  $region61: #{quantized_model_forward.2} parent=0
    _
  %s9 = ssub.s32 1, %s7
  %s10 = scalar_select 0, %s9, %s7
  $region1: #{quantized_model_forward.2} parent=0
    #allocation2 [shape = 'u8[512]{0}', space=smem, size = 0x200, scoped, tag = 'input window, operand 0, single buffered']
    #allocation3 [shape = 's32[2]{0}', space=sflag, size = 0x8, scoped, tag = 'scoped memory for quantized_model_forward.2']
    %11 = vsyncpa [#allocation3], 0
    loop: start=0, step=1, limit=4
    $region2: #{quantized_model_forward.2} parent=1 // loop_pre_header
      _
    $region3: #{quantized_model_forward.2} parent=1 // loop_header
      %s13 = sphi 0, %s17
      %p14 = scmp.ge.s32.totalorder %s13, 4
      %s21 = sphi 0, %s21
      %s23 = sphi 0, %s21
      %s24 = sphi 0, %s23
      %s38 = sphi 0, %s24
      %s44 = sphi 0, %s46
      %s47 = sphi 0, %s44
      %s48 = sphi 0, %s47
      %s64 = sphi 0, %s48
      %s68 = sphi 0, %s68
      %s70 = sphi 0, %s68
      %s71 = sphi 0, %s70
      %s85 = sphi 0, %s71
      %s89 = sphi 0, %s89
      %s91 = sphi 0, %s89
      %s92 = sphi 0, %s91
      %s106 = sphi 0, %s92
      %s110 = sphi 0, %s110
      %s112 = sphi 0, %s110
      %s113 = sphi 0, %s112
      %s127 = sphi 0, %s113
      %s131 = sphi 0, %s131
      %s133 = sphi 0, %s131
      %s134 = sphi 0, %s133
      %s148 = sphi 0, %s134
      %s154 = sphi 0, %s156
      %s157 = sphi 0, %s154
      %s158 = sphi 0, %s157
      %s174 = sphi 0, %s158
    $region4: #{quantized_model_forward.2} parent=1 // loop_header_branch
      %16 = sbr.rel (%p14) target = $region8
    $region5: #{quantized_model_forward.2} parent=1 // loop_body
      %s18 = ssub.s32 %s13, 1
      %s19 = ssub.s32 %s13, 2
      %s20 = sadd.s32 %s13, 1
      %s22 = sadd.s32 %s21, 1
      %p25 = scmp.eq.s32.totalorder %s13, 1
      %p26 = scmp.ne.s32.totalorder %s21, %s23
      %p27 = scmp.eq.s32.totalorder %s13, 0
      %p28 = por %p26, %p27
      %p29 = scmp.ne.s32.totalorder %s21, %s23
      %p30 = scmp.eq.s32.totalorder %s18, 1
      %p31 = por %p29, %p30
      %p32 = scmp.ne.s32.totalorder %s23, %s24
      %p33 = scmp.eq.s32.totalorder %s18, 0
      %p34 = por %p32, %p33
      %p35 = scmp.ne.s32.totalorder %s23, %s24
      %p36 = scmp.eq.s32.totalorder %s19, 1
      %p37 = por %p35, %p36
      %p39 = scmp.ne.s32.totalorder %s24, %s38
      %p40 = scmp.eq.s32.totalorder %s19, 0
      %p41 = por %p39, %p40
      %s42 = ssub.s32 %s13, %s20
      %p43 = scmp.eq.s32.totalorder %s42, 0
      %s45 = sadd.s32 %s44, 1
      %s46 = scalar_select %p43, %s44, %s45
      %p49 = pneg %p43
      %p50 = scmp.eq.s32.totalorder %s13, 1
      %p51 = por %p49, %p50
      %p52 = scmp.ne.s32.totalorder %s44, %s47
      %p53 = scmp.eq.s32.totalorder %s13, 0
      %p54 = por %p52, %p53
      %p55 = scmp.ne.s32.totalorder %s44, %s47
      %p56 = scmp.eq.s32.totalorder %s18, 1
      %p57 = por %p55, %p56
      %p58 = scmp.ne.s32.totalorder %s47, %s48
      %p59 = scmp.eq.s32.totalorder %s18, 0
      %p60 = por %p58, %p59
      %p61 = scmp.ne.s32.totalorder %s47, %s48
      %p62 = scmp.eq.s32.totalorder %s19, 1
      %p63 = por %p61, %p62
      %p65 = scmp.ne.s32.totalorder %s48, %s64
      %p66 = scmp.eq.s32.totalorder %s19, 0
      %p67 = por %p65, %p66
      %s69 = sadd.s32 %s68, 1
      %p72 = scmp.eq.s32.totalorder %s13, 1
      %p73 = scmp.ne.s32.totalorder %s68, %s70
      %p74 = scmp.eq.s32.totalorder %s13, 0
      %p75 = por %p73, %p74
      %p76 = scmp.ne.s32.totalorder %s68, %s70
      %p77 = scmp.eq.s32.totalorder %s18, 1
      %p78 = por %p76, %p77
      %p79 = scmp.ne.s32.totalorder %s70, %s71
      %p80 = scmp.eq.s32.totalorder %s18, 0
      %p81 = por %p79, %p80
      %p82 = scmp.ne.s32.totalorder %s70, %s71
      %p83 = scmp.eq.s32.totalorder %s19, 1
      %p84 = por %p82, %p83
      %p86 = scmp.ne.s32.totalorder %s71, %s85
      %p87 = scmp.eq.s32.totalorder %s19, 0
      %p88 = por %p86, %p87
      %s90 = sadd.s32 %s89, 1
      %p93 = scmp.eq.s32.totalorder %s13, 1
      %p94 = scmp.ne.s32.totalorder %s89, %s91
      %p95 = scmp.eq.s32.totalorder %s13, 0
      %p96 = por %p94, %p95
      %p97 = scmp.ne.s32.totalorder %s89, %s91
      %p98 = scmp.eq.s32.totalorder %s18, 1
      %p99 = por %p97, %p98
      %p100 = scmp.ne.s32.totalorder %s91, %s92
      %p101 = scmp.eq.s32.totalorder %s18, 0
      %p102 = por %p100, %p101
      %p103 = scmp.ne.s32.totalorder %s91, %s92
      %p104 = scmp.eq.s32.totalorder %s19, 1
      %p105 = por %p103, %p104
      %p107 = scmp.ne.s32.totalorder %s92, %s106
      %p108 = scmp.eq.s32.totalorder %s19, 0
      %p109 = por %p107, %p108
      %s111 = sadd.s32 %s110, 1
      %p114 = scmp.eq.s32.totalorder %s13, 1
      %p115 = scmp.ne.s32.totalorder %s110, %s112
      %p116 = scmp.eq.s32.totalorder %s13, 0
      %p117 = por %p115, %p116
      %p118 = scmp.ne.s32.totalorder %s110, %s112
      %p119 = scmp.eq.s32.totalorder %s18, 1
      %p120 = por %p118, %p119
      %p121 = scmp.ne.s32.totalorder %s112, %s113
      %p122 = scmp.eq.s32.totalorder %s18, 0
      %p123 = por %p121, %p122
      %p124 = scmp.ne.s32.totalorder %s112, %s113
      %p125 = scmp.eq.s32.totalorder %s19, 1
      %p126 = por %p124, %p125
      %p128 = scmp.ne.s32.totalorder %s113, %s127
      %p129 = scmp.eq.s32.totalorder %s19, 0
      %p130 = por %p128, %p129
      %s132 = sadd.s32 %s131, 1
      %p135 = scmp.eq.s32.totalorder %s13, 1
      %p136 = scmp.ne.s32.totalorder %s131, %s133
      %p137 = scmp.eq.s32.totalorder %s13, 0
      %p138 = por %p136, %p137
      %p139 = scmp.ne.s32.totalorder %s131, %s133
      %p140 = scmp.eq.s32.totalorder %s18, 1
      %p141 = por %p139, %p140
      %p142 = scmp.ne.s32.totalorder %s133, %s134
      %p143 = scmp.eq.s32.totalorder %s18, 0
      %p144 = por %p142, %p143
      %p145 = scmp.ne.s32.totalorder %s133, %s134
      %p146 = scmp.eq.s32.totalorder %s19, 1
      %p147 = por %p145, %p146
      %p149 = scmp.ne.s32.totalorder %s134, %s148
      %p150 = scmp.eq.s32.totalorder %s19, 0
      %p151 = por %p149, %p150
      %s152 = ssub.s32 %s13, %s20
      %p153 = scmp.eq.s32.totalorder %s152, 0
      %s155 = sadd.s32 %s154, 1
      %s156 = scalar_select %p153, %s154, %s155
      %p159 = pneg %p153
      %p160 = scmp.eq.s32.totalorder %s13, 1
      %p161 = por %p159, %p160
      %p162 = scmp.ne.s32.totalorder %s154, %s157
      %p163 = scmp.eq.s32.totalorder %s13, 0
      %p164 = por %p162, %p163
      %p165 = scmp.ne.s32.totalorder %s154, %s157
      %p166 = scmp.eq.s32.totalorder %s18, 1
      %p167 = por %p165, %p166
      %p168 = scmp.ne.s32.totalorder %s157, %s158
      %p169 = scmp.eq.s32.totalorder %s18, 0
      %p170 = por %p168, %p169
      %p171 = scmp.ne.s32.totalorder %s157, %s158
      %p172 = scmp.eq.s32.totalorder %s19, 1
      %p173 = por %p171, %p172
      %p175 = scmp.ne.s32.totalorder %s158, %s174
      %p176 = scmp.eq.s32.totalorder %s19, 0
      %p177 = por %p175, %p176
      %p178 = scmp.le.s32.totalorder 1, %s13
      %p179 = scmp.lt.s32.totalorder %s13, 3
      %p180 = pnand %p178, %p179
      %p181 = pneg %p180
      // Predicated region
      $region9: #{quantized_model_forward.2} parent=5 // pred_check
        _
      $region10: #{quantized_model_forward.2} parent=5 // pred_check_branch
        %183 = sbr.rel (%p180) target = $region12
      $region11: #{quantized_model_forward.2} parent=5 // pred_region
        %s184 = ssub.s32 %s13, 1
        // Predicated region
        $region13: #{quantized_model_forward.2} parent=11 // pred_check
          %p185 = pneg %p34
        $region14: #{quantized_model_forward.2} parent=11 // pred_check_branch
          %187 = sbr.rel (%p185) target = $region16
        $region15: #{quantized_model_forward.2} parent=11 // pred_region
          %189 = vsyncadd [#allocation3], 0
          %s191 = sshll.u32 %s0, 4
          %s192 = int_to_ptr.vmem [resolvable:$true] %s191
          %194 = dma.vmem_to_smem %s192, 16, [#allocation2], [#allocation3]
        $region16: #{quantized_model_forward.2} parent=11 // pred_fallthru
          _
        // Predicated region
        $region17: #{quantized_model_forward.2} parent=11 // pred_check
          %p195 = pneg %p81
        $region18: #{quantized_model_forward.2} parent=11 // pred_check_branch
          %197 = sbr.rel (%p195) target = $region20
        $region19: #{quantized_model_forward.2} parent=11 // pred_region
          _
        $region20: #{quantized_model_forward.2} parent=11 // pred_fallthru
          _
        // Predicated region
        $region21: #{quantized_model_forward.2} parent=11 // pred_check
          %p198 = pneg %p102
        $region22: #{quantized_model_forward.2} parent=11 // pred_check_branch
          %200 = sbr.rel (%p198) target = $region24
        $region23: #{quantized_model_forward.2} parent=11 // pred_region
          _
        $region24: #{quantized_model_forward.2} parent=11 // pred_fallthru
          _
        // Predicated region
        $region25: #{quantized_model_forward.2} parent=11 // pred_check
          %p201 = pneg %p123
        $region26: #{quantized_model_forward.2} parent=11 // pred_check_branch
          %203 = sbr.rel (%p201) target = $region28
        $region27: #{quantized_model_forward.2} parent=11 // pred_region
          _
        $region28: #{quantized_model_forward.2} parent=11 // pred_fallthru
          _
        // Predicated region
        $region29: #{quantized_model_forward.2} parent=11 // pred_check
          %p204 = pneg %p144
        $region30: #{quantized_model_forward.2} parent=11 // pred_check_branch
          %206 = sbr.rel (%p204) target = $region32
        $region31: #{quantized_model_forward.2} parent=11 // pred_region
          _
        $region32: #{quantized_model_forward.2} parent=11 // pred_fallthru
          _
      $region12: #{quantized_model_forward.2} parent=5 // pred_fallthru
        _
      %p207 = scmp.lt.s32.totalorder %s13, 2
      // Predicated region
      $region33: #{quantized_model_forward.2} parent=5 // pred_check
        %p208 = pneg %p207
      $region34: #{quantized_model_forward.2} parent=5 // pred_check_branch
        %210 = sbr.rel (%p208) target = $region36
      $region35: #{quantized_model_forward.2} parent=5 // pred_region
        // Predicated region
        $region37: #{quantized_model_forward.2} parent=35 // pred_check
          %p211 = pneg %p54
        $region38: #{quantized_model_forward.2} parent=35 // pred_check_branch
          %213 = sbr.rel (%p211) target = $region40
        $region39: #{quantized_model_forward.2} parent=35 // pred_region
          %p214 = scmp.lt.s32.totalorder %s13, 1
          %s215 = scalar_select %p214, %s13, 1
          %s216 = smul.addr %s215, 4
          %s217 = smul.addr %s216, 8
          %s218 = scalar_lea.vmem %s1, %s217
        $region40: #{quantized_model_forward.2} parent=35 // pred_fallthru
          _
      $region36: #{quantized_model_forward.2} parent=5 // pred_fallthru
        _
      %p219 = scmp.le.s32.totalorder 1, %s13
      %p220 = scmp.lt.s32.totalorder %s13, 3
      %p221 = pnand %p219, %p220
      %p222 = pneg %p221
      // Predicated region
      $region41: #{quantized_model_forward.2} parent=5 // pred_check
        _
      $region42: #{quantized_model_forward.2} parent=5 // pred_check_branch
        %224 = sbr.rel (%p221) target = $region44
      $region43: #{quantized_model_forward.2} parent=5 // pred_region
        %s225 = ssub.s32 %s13, 1
        // Predicated region
        $region45: #{quantized_model_forward.2} parent=43 // pred_check
          %p226 = pneg %p34
        $region46: #{quantized_model_forward.2} parent=43 // pred_check_branch
          %228 = sbr.rel (%p226) target = $region48
        $region47: #{quantized_model_forward.2} parent=43 // pred_region
          %230 = dma.done [#allocation3], 16
        $region48: #{quantized_model_forward.2} parent=43 // pred_fallthru
          _
        %231 = sfence
        %p232 = pneg %p34
        %p233 = pneg %p31
        %p234 = scmp.lt.s32.totalorder %s18, 1
        %s235 = scalar_select %p234, %s18, 1
        %s236 = smul.addr %s235, 4
        %s237 = smul.addr %s236, 8
        %s238 = scalar_lea.vmem %s1, %s237
        %p239 = pneg %p60
        %p240 = pneg %p57
        %p241 = pneg %p81
        %p242 = pneg %p78
        %p243 = pneg %p102
        %p244 = pneg %p99
        %p245 = pneg %p123
        %p246 = pneg %p120
        %p247 = pneg %p144
        %p248 = pneg %p141
        %p249 = pneg %p170
        %p250 = pneg %p167
        %p251 = scmp.lt.s32.totalorder %s18, 1
        %s252 = scalar_select %p251, %s18, 1
        %s253 = smul.addr %s252, 4
        %s254 = smul.addr %s253, 4
        %s255 = scalar_lea.vmem %s6, %s254
        %p256 = scmp.lt.s32.totalorder %s18, 1
        %s257 = scalar_select %p256, %s18, 1
        %s258 = smul.addr %s257, 4
        %s259 = smul.addr %s258, 8
        %s260 = scalar_lea.vmem %s1, %s259
        %p261 = scmp.lt.s32.totalorder %s18, 1
        %s262 = scalar_select %p261, %s18, 1
        %s263 = smul.addr %s262, 4
        %s264 = smul.addr %s263, 4
        %s265 = scalar_lea.vmem %s6, %s264
        %s267 = sld [smem:[#allocation2 + $0x1]]
        %v268 = vld [vmem:[%s260] sm:$0xff]
        %v269 = vld [vmem:[%s260 + $0x8] sm:$0xff]
        %v270 = vld [vmem:[%s260 + $0x10] sm:$0xff]
        %v271 = vld [vmem:[%s260 + $0x18] sm:$0xff]
        %v272 = vstv %s267
        %v273 = vmul.f32 %v268, %v272
        %v274 = vmul.f32 %v269, %v272
        %v275 = vmul.f32 %v270, %v272
        %v276 = vmul.f32 %v271, %v272
        %v277 = vround.ne.pseudo %v273
        %v278 = vround.ne.pseudo %v274
        %v279 = vround.ne.pseudo %v275
        %v280 = vround.ne.pseudo %v276
        %v281 = vadd.f32 %v277, 0.0
        %v282 = vadd.f32 %v278, 0.0
        %v283 = vadd.f32 %v279, 0.0
        %v284 = vadd.f32 %v280, 0.0
        %v285 = vmax.f32 %v281, -256.0
        %v286 = vmax.f32 %v282, -256.0
        %v287 = vmax.f32 %v283, -256.0
        %v288 = vmax.f32 %v284, -256.0
        %v289 = vmin.f32 %v285, 255.0
        %v290 = vmin.f32 %v286, 255.0
        %v291 = vmin.f32 %v287, 255.0
        %v292 = vmin.f32 %v288, 255.0
        %v293 = vpack.c.bf16 %v290, %v289
        %v294 = vpack.c.bf16 %v292, %v291
        %v295 = vld [vmem:[%s2] sm:$0xff]
        %v296 = vld [vmem:[%s2 + $0x8] sm:$0xff]
        %v297 = vld [vmem:[%s2 + $0x10] sm:$0xff]
        %v298 = vld [vmem:[%s2 + $0x18] sm:$0xff]
        %v299 = vld [vmem:[%s2 + $0x20] sm:$0xff]
        %v300 = vld [vmem:[%s2 + $0x28] sm:$0xff]
        %v301 = vld [vmem:[%s2 + $0x30] sm:$0xff]
        %v302 = vld [vmem:[%s2 + $0x38] sm:$0xff]
        %v303 = vld [vmem:[%s2 + $0x40] sm:$0xff]
        %v304 = vld [vmem:[%s2 + $0x48] sm:$0xff]
        %v305 = vld [vmem:[%s2 + $0x50] sm:$0xff]
        %v306 = vld [vmem:[%s2 + $0x58] sm:$0xff]
        %v307 = vld [vmem:[%s2 + $0x60] sm:$0xff]
        %v308 = vld [vmem:[%s2 + $0x68] sm:$0xff]
        %v309 = vld [vmem:[%s2 + $0x70] sm:$0xff]
        %v310 = vld [vmem:[%s2 + $0x78] sm:$0xff]
        %v311 = vld [vmem:[%s2 + $0x80] sm:$0xff]
        %v312 = vld [vmem:[%s2 + $0x88] sm:$0xff]
        %v313 = vld [vmem:[%s2 + $0x90] sm:$0xff]
        %v314 = vld [vmem:[%s2 + $0x98] sm:$0xff]
        %v315 = vld [vmem:[%s2 + $0xa0] sm:$0xff]
        %v316 = vld [vmem:[%s2 + $0xa8] sm:$0xff]
        %v317 = vld [vmem:[%s2 + $0xb0] sm:$0xff]
        %v318 = vld [vmem:[%s2 + $0xb8] sm:$0xff]
        %s319 = scalar_lea.vmem %s2, 192
        %v320 = vld [vmem:[%s319] sm:$0xff]
        %v321 = vld [vmem:[%s319 + $0x8] sm:$0xff]
        %v322 = vld [vmem:[%s319 + $0x10] sm:$0xff]
        %v323 = vld [vmem:[%s319 + $0x18] sm:$0xff]
        %v324 = vld [vmem:[%s319 + $0x20] sm:$0xff]
        %v325 = vld [vmem:[%s319 + $0x28] sm:$0xff]
        %v326 = vld [vmem:[%s319 + $0x30] sm:$0xff]
        %v327 = vld [vmem:[%s319 + $0x38] sm:$0xff]
        %v328 = vld [vmem:[%s319 + $0x40] sm:$0xff]
        %v329 = vld [vmem:[%s319 + $0x48] sm:$0xff]
        %v330 = vld [vmem:[%s319 + $0x50] sm:$0xff]
        %v331 = vld [vmem:[%s319 + $0x58] sm:$0xff]
        %v332 = vld [vmem:[%s319 + $0x60] sm:$0xff]
        %v333 = vld [vmem:[%s319 + $0x68] sm:$0xff]
        %v334 = vld [vmem:[%s319 + $0x70] sm:$0xff]
        %v335 = vld [vmem:[%s319 + $0x78] sm:$0xff]
        %v336 = vld [vmem:[%s319 + $0x80] sm:$0xff]
        %v337 = vld [vmem:[%s319 + $0x88] sm:$0xff]
        %v338 = vld [vmem:[%s319 + $0x90] sm:$0xff]
        %v339 = vld [vmem:[%s319 + $0x98] sm:$0xff]
        %v340 = vld [vmem:[%s319 + $0xa0] sm:$0xff]
        %v341 = vld [vmem:[%s319 + $0xa8] sm:$0xff]
        %v342 = vld [vmem:[%s319 + $0xb0] sm:$0xff]
        %v343 = vld [vmem:[%s319 + $0xb8] sm:$0xff]
        %vm344 = vsmask.f32 7424
        %v346 = vshrl.u32 %v293, 16
        %v348 = vshll.u32 %v293, 16
        %v350 = vrot.slane %v348, 1
        %v351 = vor.u32 %v346, %v350
        %v353 = vshll.u32 %v294, 16
        %v355 = vrot.slane %v353, 1
        %v356 = vsel %vm344, %v351, %v355
        %v357 = vshrl.u32 %v294, 16
        %v359 = vor.u32 %v357, %v355
        %v384 = vunpack.c.l.b16 %v320
        %v385 = vunpack.c.h.b16 %v320
        %v386 = vunpack.c.l.b16 %v321
        %v387 = vunpack.c.h.b16 %v321
        %v388 = vunpack.c.l.b16 %v322
        %v389 = vunpack.c.h.b16 %v322
        %v390 = vunpack.c.l.b16 %v323
        %v391 = vunpack.c.h.b16 %v323
        %v392 = vunpack.c.l.b16 %v324
        %v393 = vunpack.c.h.b16 %v324
        %v394 = vunpack.c.l.b16 %v325
        %v395 = vunpack.c.h.b16 %v325
        %v396 = vunpack.c.l.b16 %v326
        %v397 = vunpack.c.h.b16 %v326
        %v398 = vunpack.c.l.b16 %v327
        %v399 = vunpack.c.h.b16 %v327
        %v400 = vunpack.c.l.b16 %v328
        %v401 = vunpack.c.h.b16 %v328
        %v402 = vunpack.c.l.b16 %v329
        %v403 = vunpack.c.h.b16 %v329
        %v404 = vunpack.c.l.b16 %v330
        %v405 = vunpack.c.h.b16 %v330
        %v406 = vunpack.c.l.b16 %v331
        %v407 = vunpack.c.h.b16 %v331
        %v408 = vunpack.c.l.b16 %v332
        %v409 = vunpack.c.h.b16 %v332
        %v410 = vunpack.c.l.b16 %v333
        %v411 = vunpack.c.h.b16 %v333
        %v412 = vunpack.c.l.b16 %v334
        %v413 = vunpack.c.h.b16 %v334
        %v414 = vunpack.c.l.b16 %v335
        %v415 = vunpack.c.h.b16 %v335
        %v416 = vunpack.c.l.b16 %v336
        %v417 = vunpack.c.h.b16 %v336
        %v418 = vunpack.c.l.b16 %v337
        %v419 = vunpack.c.h.b16 %v337
        %v420 = vunpack.c.l.b16 %v338
        %v421 = vunpack.c.h.b16 %v338
        %v422 = vunpack.c.l.b16 %v339
        %v423 = vunpack.c.h.b16 %v339
        %v424 = vunpack.c.l.b16 %v340
        %v425 = vunpack.c.h.b16 %v340
        %v426 = vunpack.c.l.b16 %v341
        %v427 = vunpack.c.h.b16 %v341
        %v428 = vunpack.c.l.b16 %v342
        %v429 = vunpack.c.h.b16 %v342
        %v430 = vunpack.c.l.b16 %v343
        %v431 = vunpack.c.h.b16 %v343
        %v432 = vpack.c.b16 %v388, %v384
        %v433 = vpack.c.b16 %v389, %v385
        %v434 = vpack.c.b16 %v390, %v386
        %v435 = vpack.c.b16 %v391, %v387
        %v436 = vpack.c.b16 %v396, %v392
        %v437 = vpack.c.b16 %v397, %v393
        %v438 = vpack.c.b16 %v398, %v394
        %v439 = vpack.c.b16 %v399, %v395
        %v440 = vpack.c.b16 %v404, %v400
        %v441 = vpack.c.b16 %v405, %v401
        %v442 = vpack.c.b16 %v406, %v402
        %v443 = vpack.c.b16 %v407, %v403
        %v444 = vpack.c.b16 %v412, %v408
        %v445 = vpack.c.b16 %v413, %v409
        %v446 = vpack.c.b16 %v414, %v410
        %v447 = vpack.c.b16 %v415, %v411
        %v448 = vpack.c.b16 %v420, %v416
        %v449 = vpack.c.b16 %v421, %v417
        %v450 = vpack.c.b16 %v422, %v418
        %v451 = vpack.c.b16 %v423, %v419
        %v452 = vpack.c.b16 %v428, %v424
        %v453 = vpack.c.b16 %v429, %v425
        %v454 = vpack.c.b16 %v430, %v426
        %v455 = vpack.c.b16 %v431, %v427
        %vm480 = vcmask 785408
        %v482 = vsel %vm480, %v356, 0
        %v485 = vsel %vm480, %v359, 0
        %487 = vmatpush.bf16.msra.mxu0 0
        %488 = vmatpush.bf16.msra.mxu0 0
        %489 = vmatpush.bf16.msra.mxu0 %v452
        %490 = vmatpush.bf16.msra.mxu0 %v448
        %491 = vmatpush.bf16.msra.mxu0 %v444
        %492 = vmatpush.bf16.msra.mxu0 %v440
        %493 = vmatpush.bf16.msra.mxu0 %v436
        %494 = vmatpush.bf16.msra.mxu0 %v432
        %495 = vmatmul.bf16.gmra.mxu0 %v482
        %v496 = vpop.f32.mrf.mxu0
        %v497 = vadd.f32 0.0, %v496
        %v498 = vpop.f32.mrf.mxu0
        %v499 = vadd.f32 0.0, %v498
        %500 = vmatmul.bf16.gmra.mxu0 %v485
        %v501 = vpop.f32.mrf.mxu0
        %v502 = vadd.f32 0.0, %v501
        %v503 = vpop.f32.mrf.mxu0
        %v504 = vadd.f32 0.0, %v503
        %505 = vdwg.mxu0
        %506 = vmatpush.bf16.msra.mxu0 0
        %507 = vmatpush.bf16.msra.mxu0 0
        %508 = vmatpush.bf16.msra.mxu0 %v453
        %509 = vmatpush.bf16.msra.mxu0 %v449
        %510 = vmatpush.bf16.msra.mxu0 %v445
        %511 = vmatpush.bf16.msra.mxu0 %v441
        %512 = vmatpush.bf16.msra.mxu0 %v437
        %513 = vmatpush.bf16.msra.mxu0 %v433
        %514 = vmatmul.bf16.gmra.mxu0 %v482
        %v515 = vpop.f32.mrf.mxu0
        %v516 = vadd.f32 0.0, %v515
        %v517 = vpop.f32.mrf.mxu0
        %v518 = vadd.f32 0.0, %v517
        %519 = vmatmul.bf16.gmra.mxu0 %v485
        %v520 = vpop.f32.mrf.mxu0
        %v521 = vadd.f32 0.0, %v520
        %v522 = vpop.f32.mrf.mxu0
        %v523 = vadd.f32 0.0, %v522
        %524 = vdwg.mxu0
        %525 = vmatpush.bf16.msra.mxu0 0
        %526 = vmatpush.bf16.msra.mxu0 0
        %527 = vmatpush.bf16.msra.mxu0 %v454
        %528 = vmatpush.bf16.msra.mxu0 %v450
        %529 = vmatpush.bf16.msra.mxu0 %v446
        %530 = vmatpush.bf16.msra.mxu0 %v442
        %531 = vmatpush.bf16.msra.mxu0 %v438
        %532 = vmatpush.bf16.msra.mxu0 %v434
        %533 = vmatmul.bf16.gmra.mxu0 %v482
        %v534 = vpop.f32.mrf.mxu0
        %v535 = vadd.f32 0.0, %v534
        %v536 = vpop.f32.mrf.mxu0
        %v537 = vadd.f32 0.0, %v536
        %538 = vmatmul.bf16.gmra.mxu0 %v485
        %v539 = vpop.f32.mrf.mxu0
        %v540 = vadd.f32 0.0, %v539
        %v541 = vpop.f32.mrf.mxu0
        %v542 = vadd.f32 0.0, %v541
        %543 = vdwg.mxu0
        %544 = vmatpush.bf16.msra.mxu0 0
        %545 = vmatpush.bf16.msra.mxu0 0
        %546 = vmatpush.bf16.msra.mxu0 %v455
        %547 = vmatpush.bf16.msra.mxu0 %v451
        %548 = vmatpush.bf16.msra.mxu0 %v447
        %549 = vmatpush.bf16.msra.mxu0 %v443
        %550 = vmatpush.bf16.msra.mxu0 %v439
        %551 = vmatpush.bf16.msra.mxu0 %v435
        %552 = vmatmul.bf16.gmra.mxu0 %v482
        %v553 = vpop.f32.mrf.mxu0
        %v554 = vadd.f32 0.0, %v553
        %v555 = vpop.f32.mrf.mxu0
        %v556 = vadd.f32 0.0, %v555
        %557 = vmatmul.bf16.gmra.mxu0 %v485
        %v558 = vpop.f32.mrf.mxu0
        %v559 = vadd.f32 0.0, %v558
        %v560 = vpop.f32.mrf.mxu0
        %v561 = vadd.f32 0.0, %v560
        %562 = vdwg.mxu0
        %v587 = vunpack.c.l.b16 %v295
        %v588 = vunpack.c.h.b16 %v295
        %v589 = vunpack.c.l.b16 %v296
        %v590 = vunpack.c.h.b16 %v296
        %v591 = vunpack.c.l.b16 %v297
        %v592 = vunpack.c.h.b16 %v297
        %v593 = vunpack.c.l.b16 %v298
        %v594 = vunpack.c.h.b16 %v298
        %v595 = vunpack.c.l.b16 %v299
        %v596 = vunpack.c.h.b16 %v299
        %v597 = vunpack.c.l.b16 %v300
        %v598 = vunpack.c.h.b16 %v300
        %v599 = vunpack.c.l.b16 %v301
        %v600 = vunpack.c.h.b16 %v301
        %v601 = vunpack.c.l.b16 %v302
        %v602 = vunpack.c.h.b16 %v302
        %v603 = vunpack.c.l.b16 %v303
        %v604 = vunpack.c.h.b16 %v303
        %v605 = vunpack.c.l.b16 %v304
        %v606 = vunpack.c.h.b16 %v304
        %v607 = vunpack.c.l.b16 %v305
        %v608 = vunpack.c.h.b16 %v305
        %v609 = vunpack.c.l.b16 %v306
        %v610 = vunpack.c.h.b16 %v306
        %v611 = vunpack.c.l.b16 %v307
        %v612 = vunpack.c.h.b16 %v307
        %v613 = vunpack.c.l.b16 %v308
        %v614 = vunpack.c.h.b16 %v308
        %v615 = vunpack.c.l.b16 %v309
        %v616 = vunpack.c.h.b16 %v309
        %v617 = vunpack.c.l.b16 %v310
        %v618 = vunpack.c.h.b16 %v310
        %v619 = vunpack.c.l.b16 %v311
        %v620 = vunpack.c.h.b16 %v311
        %v621 = vunpack.c.l.b16 %v312
        %v622 = vunpack.c.h.b16 %v312
        %v623 = vunpack.c.l.b16 %v313
        %v624 = vunpack.c.h.b16 %v313
        %v625 = vunpack.c.l.b16 %v314
        %v626 = vunpack.c.h.b16 %v314
        %v627 = vunpack.c.l.b16 %v315
        %v628 = vunpack.c.h.b16 %v315
        %v629 = vunpack.c.l.b16 %v316
        %v630 = vunpack.c.h.b16 %v316
        %v631 = vunpack.c.l.b16 %v317
        %v632 = vunpack.c.h.b16 %v317
        %v633 = vunpack.c.l.b16 %v318
        %v634 = vunpack.c.h.b16 %v318
        %v635 = vpack.c.b16 %v591, %v587
        %v636 = vpack.c.b16 %v592, %v588
        %v637 = vpack.c.b16 %v593, %v589
        %v638 = vpack.c.b16 %v594, %v590
        %v639 = vpack.c.b16 %v599, %v595
        %v640 = vpack.c.b16 %v600, %v596
        %v641 = vpack.c.b16 %v601, %v597
        %v642 = vpack.c.b16 %v602, %v598
        %v643 = vpack.c.b16 %v607, %v603
        %v644 = vpack.c.b16 %v608, %v604
        %v645 = vpack.c.b16 %v609, %v605
        %v646 = vpack.c.b16 %v610, %v606
        %v647 = vpack.c.b16 %v615, %v611
        %v648 = vpack.c.b16 %v616, %v612
        %v649 = vpack.c.b16 %v617, %v613
        %v650 = vpack.c.b16 %v618, %v614
        %v651 = vpack.c.b16 %v623, %v619
        %v652 = vpack.c.b16 %v624, %v620
        %v653 = vpack.c.b16 %v625, %v621
        %v654 = vpack.c.b16 %v626, %v622
        %v655 = vpack.c.b16 %v631, %v627
        %v656 = vpack.c.b16 %v632, %v628
        %v657 = vpack.c.b16 %v633, %v629
        %v658 = vpack.c.b16 %v634, %v630
        %v683 = vsel %vm480, %v293, 0
        %v685 = vsel %vm480, %v294, 0
        %687 = vmatpush.bf16.msra.mxu0 0
        %688 = vmatpush.bf16.msra.mxu0 0
        %689 = vmatpush.bf16.msra.mxu0 %v655
        %690 = vmatpush.bf16.msra.mxu0 %v651
        %691 = vmatpush.bf16.msra.mxu0 %v647
        %692 = vmatpush.bf16.msra.mxu0 %v643
        %693 = vmatpush.bf16.msra.mxu0 %v639
        %694 = vmatpush.bf16.msra.mxu0 %v635
        %695 = vmatmul.bf16.gmra.mxu0 %v683
        %v696 = vpop.f32.mrf.mxu0
        %v697 = vadd.f32 %v497, %v696
        %v698 = vpop.f32.mrf.mxu0
        %v699 = vadd.f32 %v499, %v698
        %700 = vmatmul.bf16.gmra.mxu0 %v685
        %v701 = vpop.f32.mrf.mxu0
        %v702 = vadd.f32 %v502, %v701
        %v703 = vpop.f32.mrf.mxu0
        %v704 = vadd.f32 %v504, %v703
        %705 = vdwg.mxu0
        %706 = vmatpush.bf16.msra.mxu0 0
        %707 = vmatpush.bf16.msra.mxu0 0
        %708 = vmatpush.bf16.msra.mxu0 %v656
        %709 = vmatpush.bf16.msra.mxu0 %v652
        %710 = vmatpush.bf16.msra.mxu0 %v648
        %711 = vmatpush.bf16.msra.mxu0 %v644
        %712 = vmatpush.bf16.msra.mxu0 %v640
        %713 = vmatpush.bf16.msra.mxu0 %v636
        %714 = vmatmul.bf16.gmra.mxu0 %v683
        %v715 = vpop.f32.mrf.mxu0
        %v716 = vadd.f32 %v516, %v715
        %v717 = vpop.f32.mrf.mxu0
        %v718 = vadd.f32 %v518, %v717
        %719 = vmatmul.bf16.gmra.mxu0 %v685
        %v720 = vpop.f32.mrf.mxu0
        %v721 = vadd.f32 %v521, %v720
        %v722 = vpop.f32.mrf.mxu0
        %v723 = vadd.f32 %v523, %v722
        %724 = vdwg.mxu0
        %725 = vmatpush.bf16.msra.mxu0 0
        %726 = vmatpush.bf16.msra.mxu0 0
        %727 = vmatpush.bf16.msra.mxu0 %v657
        %728 = vmatpush.bf16.msra.mxu0 %v653
        %729 = vmatpush.bf16.msra.mxu0 %v649
        %730 = vmatpush.bf16.msra.mxu0 %v645
        %731 = vmatpush.bf16.msra.mxu0 %v641
        %732 = vmatpush.bf16.msra.mxu0 %v637
        %733 = vmatmul.bf16.gmra.mxu0 %v683
        %v734 = vpop.f32.mrf.mxu0
        %v735 = vadd.f32 %v535, %v734
        %v736 = vpop.f32.mrf.mxu0
        %v737 = vadd.f32 %v537, %v736
        %738 = vmatmul.bf16.gmra.mxu0 %v685
        %v739 = vpop.f32.mrf.mxu0
        %v740 = vadd.f32 %v540, %v739
        %v741 = vpop.f32.mrf.mxu0
        %v742 = vadd.f32 %v542, %v741
        %743 = vdwg.mxu0
        %744 = vmatpush.bf16.msra.mxu0 0
        %745 = vmatpush.bf16.msra.mxu0 0
        %746 = vmatpush.bf16.msra.mxu0 %v658
        %747 = vmatpush.bf16.msra.mxu0 %v654
        %748 = vmatpush.bf16.msra.mxu0 %v650
        %749 = vmatpush.bf16.msra.mxu0 %v646
        %750 = vmatpush.bf16.msra.mxu0 %v642
        %751 = vmatpush.bf16.msra.mxu0 %v638
        %752 = vmatmul.bf16.gmra.mxu0 %v683
        %v753 = vpop.f32.mrf.mxu0
        %v754 = vadd.f32 %v554, %v753
        %v755 = vpop.f32.mrf.mxu0
        %v756 = vadd.f32 %v556, %v755
        %757 = vmatmul.bf16.gmra.mxu0 %v685
        %v758 = vpop.f32.mrf.mxu0
        %v759 = vadd.f32 %v559, %v758
        %v760 = vpop.f32.mrf.mxu0
        %v761 = vadd.f32 %v561, %v760
        %762 = vdwg.mxu0
        %s763 = scalar_lea.vmem %s2, 384
        %v764 = vld [vmem:[%s763] sm:$0xff]
        %v765 = vld [vmem:[%s763 + $0x8] sm:$0xff]
        %v766 = vld [vmem:[%s763 + $0x10] sm:$0xff]
        %v767 = vld [vmem:[%s763 + $0x18] sm:$0xff]
        %v768 = vld [vmem:[%s763 + $0x20] sm:$0xff]
        %v769 = vld [vmem:[%s763 + $0x28] sm:$0xff]
        %v770 = vld [vmem:[%s763 + $0x30] sm:$0xff]
        %v771 = vld [vmem:[%s763 + $0x38] sm:$0xff]
        %v772 = vld [vmem:[%s763 + $0x40] sm:$0xff]
        %v773 = vld [vmem:[%s763 + $0x48] sm:$0xff]
        %v774 = vld [vmem:[%s763 + $0x50] sm:$0xff]
        %v775 = vld [vmem:[%s763 + $0x58] sm:$0xff]
        %v776 = vld [vmem:[%s763 + $0x60] sm:$0xff]
        %v777 = vld [vmem:[%s763 + $0x68] sm:$0xff]
        %v778 = vld [vmem:[%s763 + $0x70] sm:$0xff]
        %v779 = vld [vmem:[%s763 + $0x78] sm:$0xff]
        %v780 = vld [vmem:[%s763 + $0x80] sm:$0xff]
        %v781 = vld [vmem:[%s763 + $0x88] sm:$0xff]
        %v782 = vld [vmem:[%s763 + $0x90] sm:$0xff]
        %v783 = vld [vmem:[%s763 + $0x98] sm:$0xff]
        %v784 = vld [vmem:[%s763 + $0xa0] sm:$0xff]
        %v785 = vld [vmem:[%s763 + $0xa8] sm:$0xff]
        %v786 = vld [vmem:[%s763 + $0xb0] sm:$0xff]
        %v787 = vld [vmem:[%s763 + $0xb8] sm:$0xff]
        %vm790 = vcmask 1046528
        %v791 = vrot.slane %v293, 1
        %v792 = vrot.slane %v294, 1
        %v793 = vsel %vm790, %v791, %v792
        %v818 = vunpack.c.l.b16 %v764
        %v819 = vunpack.c.h.b16 %v764
        %v820 = vunpack.c.l.b16 %v765
        %v821 = vunpack.c.h.b16 %v765
        %v822 = vunpack.c.l.b16 %v766
        %v823 = vunpack.c.h.b16 %v766
        %v824 = vunpack.c.l.b16 %v767
        %v825 = vunpack.c.h.b16 %v767
        %v826 = vunpack.c.l.b16 %v768
        %v827 = vunpack.c.h.b16 %v768
        %v828 = vunpack.c.l.b16 %v769
        %v829 = vunpack.c.h.b16 %v769
        %v830 = vunpack.c.l.b16 %v770
        %v831 = vunpack.c.h.b16 %v770
        %v832 = vunpack.c.l.b16 %v771
        %v833 = vunpack.c.h.b16 %v771
        %v834 = vunpack.c.l.b16 %v772
        %v835 = vunpack.c.h.b16 %v772
        %v836 = vunpack.c.l.b16 %v773
        %v837 = vunpack.c.h.b16 %v773
        %v838 = vunpack.c.l.b16 %v774
        %v839 = vunpack.c.h.b16 %v774
        %v840 = vunpack.c.l.b16 %v775
        %v841 = vunpack.c.h.b16 %v775
        %v842 = vunpack.c.l.b16 %v776
        %v843 = vunpack.c.h.b16 %v776
        %v844 = vunpack.c.l.b16 %v777
        %v845 = vunpack.c.h.b16 %v777
        %v846 = vunpack.c.l.b16 %v778
        %v847 = vunpack.c.h.b16 %v778
        %v848 = vunpack.c.l.b16 %v779
        %v849 = vunpack.c.h.b16 %v779
        %v850 = vunpack.c.l.b16 %v780
        %v851 = vunpack.c.h.b16 %v780
        %v852 = vunpack.c.l.b16 %v781
        %v853 = vunpack.c.h.b16 %v781
        %v854 = vunpack.c.l.b16 %v782
        %v855 = vunpack.c.h.b16 %v782
        %v856 = vunpack.c.l.b16 %v783
        %v857 = vunpack.c.h.b16 %v783
        %v858 = vunpack.c.l.b16 %v784
        %v859 = vunpack.c.h.b16 %v784
        %v860 = vunpack.c.l.b16 %v785
        %v861 = vunpack.c.h.b16 %v785
        %v862 = vunpack.c.l.b16 %v786
        %v863 = vunpack.c.h.b16 %v786
        %v864 = vunpack.c.l.b16 %v787
        %v865 = vunpack.c.h.b16 %v787
        %v866 = vpack.c.b16 %v822, %v818
        %v867 = vpack.c.b16 %v823, %v819
        %v868 = vpack.c.b16 %v824, %v820
        %v869 = vpack.c.b16 %v825, %v821
        %v870 = vpack.c.b16 %v830, %v826
        %v871 = vpack.c.b16 %v831, %v827
        %v872 = vpack.c.b16 %v832, %v828
        %v873 = vpack.c.b16 %v833, %v829
        %v874 = vpack.c.b16 %v838, %v834
        %v875 = vpack.c.b16 %v839, %v835
        %v876 = vpack.c.b16 %v840, %v836
        %v877 = vpack.c.b16 %v841, %v837
        %v878 = vpack.c.b16 %v846, %v842
        %v879 = vpack.c.b16 %v847, %v843
        %v880 = vpack.c.b16 %v848, %v844
        %v881 = vpack.c.b16 %v849, %v845
        %v882 = vpack.c.b16 %v854, %v850
        %v883 = vpack.c.b16 %v855, %v851
        %v884 = vpack.c.b16 %v856, %v852
        %v885 = vpack.c.b16 %v857, %v853
        %v886 = vpack.c.b16 %v862, %v858
        %v887 = vpack.c.b16 %v863, %v859
        %v888 = vpack.c.b16 %v864, %v860
        %v889 = vpack.c.b16 %v865, %v861
        %v915 = vsel %vm480, %v793, 0
        %v918 = vsel %vm480, %v792, 0
        %920 = vmatpush.bf16.msra.mxu0 0
        %921 = vmatpush.bf16.msra.mxu0 0
        %922 = vmatpush.bf16.msra.mxu0 %v886
        %923 = vmatpush.bf16.msra.mxu0 %v882
        %924 = vmatpush.bf16.msra.mxu0 %v878
        %925 = vmatpush.bf16.msra.mxu0 %v874
        %926 = vmatpush.bf16.msra.mxu0 %v870
        %927 = vmatpush.bf16.msra.mxu0 %v866
        %928 = vmatmul.bf16.gmra.mxu0 %v915
        %v929 = vpop.f32.mrf.mxu0
        %v930 = vadd.f32 0.0, %v929
        %v931 = vpop.f32.mrf.mxu0
        %v932 = vadd.f32 0.0, %v931
        %933 = vmatmul.bf16.gmra.mxu0 %v918
        %v934 = vpop.f32.mrf.mxu0
        %v935 = vadd.f32 0.0, %v934
        %v936 = vpop.f32.mrf.mxu0
        %v937 = vadd.f32 0.0, %v936
        %938 = vdwg.mxu0
        %939 = vmatpush.bf16.msra.mxu0 0
        %940 = vmatpush.bf16.msra.mxu0 0
        %941 = vmatpush.bf16.msra.mxu0 %v887
        %942 = vmatpush.bf16.msra.mxu0 %v883
        %943 = vmatpush.bf16.msra.mxu0 %v879
        %944 = vmatpush.bf16.msra.mxu0 %v875
        %945 = vmatpush.bf16.msra.mxu0 %v871
        %946 = vmatpush.bf16.msra.mxu0 %v867
        %947 = vmatmul.bf16.gmra.mxu0 %v915
        %v948 = vpop.f32.mrf.mxu0
        %v949 = vadd.f32 0.0, %v948
        %v950 = vpop.f32.mrf.mxu0
        %v951 = vadd.f32 0.0, %v950
        %952 = vmatmul.bf16.gmra.mxu0 %v918
        %v953 = vpop.f32.mrf.mxu0
        %v954 = vadd.f32 0.0, %v953
        %v955 = vpop.f32.mrf.mxu0
        %v956 = vadd.f32 0.0, %v955
        %957 = vdwg.mxu0
        %958 = vmatpush.bf16.msra.mxu0 0
        %959 = vmatpush.bf16.msra.mxu0 0
        %960 = vmatpush.bf16.msra.mxu0 %v888
        %961 = vmatpush.bf16.msra.mxu0 %v884
        %962 = vmatpush.bf16.msra.mxu0 %v880
        %963 = vmatpush.bf16.msra.mxu0 %v876
        %964 = vmatpush.bf16.msra.mxu0 %v872
        %965 = vmatpush.bf16.msra.mxu0 %v868
        %966 = vmatmul.bf16.gmra.mxu0 %v915
        %v967 = vpop.f32.mrf.mxu0
        %v968 = vadd.f32 0.0, %v967
        %v969 = vpop.f32.mrf.mxu0
        %v970 = vadd.f32 0.0, %v969
        %971 = vmatmul.bf16.gmra.mxu0 %v918
        %v972 = vpop.f32.mrf.mxu0
        %v973 = vadd.f32 0.0, %v972
        %v974 = vpop.f32.mrf.mxu0
        %v975 = vadd.f32 0.0, %v974
        %976 = vdwg.mxu0
        %977 = vmatpush.bf16.msra.mxu0 0
        %978 = vmatpush.bf16.msra.mxu0 0
        %979 = vmatpush.bf16.msra.mxu0 %v889
        %980 = vmatpush.bf16.msra.mxu0 %v885
        %981 = vmatpush.bf16.msra.mxu0 %v881
        %982 = vmatpush.bf16.msra.mxu0 %v877
        %983 = vmatpush.bf16.msra.mxu0 %v873
        %984 = vmatpush.bf16.msra.mxu0 %v869
        %985 = vmatmul.bf16.gmra.mxu0 %v915
        %v986 = vpop.f32.mrf.mxu0
        %v987 = vadd.f32 0.0, %v986
        %v988 = vpop.f32.mrf.mxu0
        %v989 = vadd.f32 0.0, %v988
        %990 = vmatmul.bf16.gmra.mxu0 %v918
        %v991 = vpop.f32.mrf.mxu0
        %v992 = vadd.f32 0.0, %v991
        %v993 = vpop.f32.mrf.mxu0
        %v994 = vadd.f32 0.0, %v993
        %995 = vdwg.mxu0
        %v996 = vadd.f32 %v697, %v930
        %v997 = vadd.f32 %v716, %v949
        %v998 = vadd.f32 %v735, %v968
        %v999 = vadd.f32 %v754, %v987
        %v1000 = vadd.f32 %v699, %v932
        %v1001 = vadd.f32 %v718, %v951
        %v1002 = vadd.f32 %v737, %v970
        %v1003 = vadd.f32 %v756, %v989
        %v1004 = vadd.f32 %v702, %v935
        %v1005 = vadd.f32 %v721, %v954
        %v1006 = vadd.f32 %v740, %v973
        %v1007 = vadd.f32 %v759, %v992
        %v1008 = vadd.f32 %v704, %v937
        %v1009 = vadd.f32 %v723, %v956
        %v1010 = vadd.f32 %v742, %v975
        %v1011 = vadd.f32 %v761, %v994
        %v1012 = vld [vmem:[%s3] sm:$0xf]
        %v1014 = vperm.slane %v1012, 0
        %v1015 = vperm.slane %v1012, 1
        %v1016 = vperm.slane %v1012, 2
        %v1017 = vperm.slane %v1012, 3
        %v1022 = vadd.f32 %v996, %v1014
        %v1023 = vadd.f32 %v997, %v1015
        %v1024 = vadd.f32 %v998, %v1016
        %v1025 = vadd.f32 %v999, %v1017
        %v1026 = vadd.f32 %v1000, %v1014
        %v1027 = vadd.f32 %v1001, %v1015
        %v1028 = vadd.f32 %v1002, %v1016
        %v1029 = vadd.f32 %v1003, %v1017
        %v1030 = vadd.f32 %v1004, %v1014
        %v1031 = vadd.f32 %v1005, %v1015
        %v1032 = vadd.f32 %v1006, %v1016
        %v1033 = vadd.f32 %v1007, %v1017
        %v1034 = vadd.f32 %v1008, %v1014
        %v1035 = vadd.f32 %v1009, %v1015
        %v1036 = vadd.f32 %v1010, %v1016
        %v1037 = vadd.f32 %v1011, %v1017
        %v1038 = vround.ne.pseudo %v1022
        %v1039 = vround.ne.pseudo %v1023
        %v1040 = vround.ne.pseudo %v1024
        %v1041 = vround.ne.pseudo %v1025
        %v1042 = vround.ne.pseudo %v1026
        %v1043 = vround.ne.pseudo %v1027
        %v1044 = vround.ne.pseudo %v1028
        %v1045 = vround.ne.pseudo %v1029
        %v1046 = vround.ne.pseudo %v1030
        %v1047 = vround.ne.pseudo %v1031
        %v1048 = vround.ne.pseudo %v1032
        %v1049 = vround.ne.pseudo %v1033
        %v1050 = vround.ne.pseudo %v1034
        %v1051 = vround.ne.pseudo %v1035
        %v1052 = vround.ne.pseudo %v1036
        %v1053 = vround.ne.pseudo %v1037
        %v1054 = vmax.f32 %v1038, 0.0
        %v1055 = vmax.f32 %v1039, 0.0
        %v1056 = vmax.f32 %v1040, 0.0
        %v1057 = vmax.f32 %v1041, 0.0
        %v1058 = vmax.f32 %v1042, 0.0
        %v1059 = vmax.f32 %v1043, 0.0
        %v1060 = vmax.f32 %v1044, 0.0
        %v1061 = vmax.f32 %v1045, 0.0
        %v1062 = vmax.f32 %v1046, 0.0
        %v1063 = vmax.f32 %v1047, 0.0
        %v1064 = vmax.f32 %v1048, 0.0
        %v1065 = vmax.f32 %v1049, 0.0
        %v1066 = vmax.f32 %v1050, 0.0
        %v1067 = vmax.f32 %v1051, 0.0
        %v1068 = vmax.f32 %v1052, 0.0
        %v1069 = vmax.f32 %v1053, 0.0
        %v1070 = vmin.f32 %v1054, 255.0
        %v1071 = vmin.f32 %v1055, 255.0
        %v1072 = vmin.f32 %v1056, 255.0
        %v1073 = vmin.f32 %v1057, 255.0
        %v1074 = vmin.f32 %v1058, 255.0
        %v1075 = vmin.f32 %v1059, 255.0
        %v1076 = vmin.f32 %v1060, 255.0
        %v1077 = vmin.f32 %v1061, 255.0
        %v1078 = vmin.f32 %v1062, 255.0
        %v1079 = vmin.f32 %v1063, 255.0
        %v1080 = vmin.f32 %v1064, 255.0
        %v1081 = vmin.f32 %v1065, 255.0
        %v1082 = vmin.f32 %v1066, 255.0
        %v1083 = vmin.f32 %v1067, 255.0
        %v1084 = vmin.f32 %v1068, 255.0
        %v1085 = vmin.f32 %v1069, 255.0
        %v1086 = vpack.c.bf16 %v1074, %v1070
        %v1087 = vpack.c.bf16 %v1075, %v1071
        %v1088 = vpack.c.bf16 %v1076, %v1072
        %v1089 = vpack.c.bf16 %v1077, %v1073
        %v1090 = vpack.c.bf16 %v1082, %v1078
        %v1091 = vpack.c.bf16 %v1083, %v1079
        %v1092 = vpack.c.bf16 %v1084, %v1080
        %v1093 = vpack.c.bf16 %v1085, %v1081
        %v1094 = vld [vmem:[%s4] sm:$0xf]
        %v1095 = vld [vmem:[%s4 + $0x4] sm:$0xf]
        %v1096 = vld [vmem:[%s4 + $0x8] sm:$0xf]
        %v1097 = vld [vmem:[%s4 + $0xc] sm:$0xf]
        %v1098 = vld [vmem:[%s4 + $0x10] sm:$0xf]
        %v1099 = vld [vmem:[%s4 + $0x14] sm:$0xf]
        %v1100 = vld [vmem:[%s4 + $0x18] sm:$0xf]
        %v1101 = vld [vmem:[%s4 + $0x1c] sm:$0xf]
        %v1102 = vld [vmem:[%s4 + $0x20] sm:$0xf]
        %v1103 = vld [vmem:[%s4 + $0x24] sm:$0xf]
        %v1104 = vld [vmem:[%s4 + $0x28] sm:$0xf]
        %v1105 = vld [vmem:[%s4 + $0x2c] sm:$0xf]
        %v1106 = vld [vmem:[%s4 + $0x30] sm:$0xf]
        %v1107 = vld [vmem:[%s4 + $0x34] sm:$0xf]
        %v1108 = vld [vmem:[%s4 + $0x38] sm:$0xf]
        %v1109 = vld [vmem:[%s4 + $0x3c] sm:$0xf]
        %v1110 = vld [vmem:[%s4 + $0x40] sm:$0xf]
        %v1111 = vld [vmem:[%s4 + $0x44] sm:$0xf]
        %v1112 = vld [vmem:[%s4 + $0x48] sm:$0xf]
        %v1113 = vld [vmem:[%s4 + $0x4c] sm:$0xf]
        %v1114 = vld [vmem:[%s4 + $0x50] sm:$0xf]
        %v1115 = vld [vmem:[%s4 + $0x54] sm:$0xf]
        %v1116 = vld [vmem:[%s4 + $0x58] sm:$0xf]
        %v1117 = vld [vmem:[%s4 + $0x5c] sm:$0xf]
        %v1118 = vld [vmem:[%s4 + $0x60] sm:$0xf]
        %v1119 = vld [vmem:[%s4 + $0x64] sm:$0xf]
        %v1120 = vld [vmem:[%s4 + $0x68] sm:$0xf]
        %v1121 = vld [vmem:[%s4 + $0x6c] sm:$0xf]
        %v1122 = vld [vmem:[%s4 + $0x70] sm:$0xf]
        %v1123 = vld [vmem:[%s4 + $0x74] sm:$0xf]
        %v1124 = vld [vmem:[%s4 + $0x78] sm:$0xf]
        %v1125 = vld [vmem:[%s4 + $0x7c] sm:$0xf]
        %v1126 = vld [vmem:[%s4 + $0x80] sm:$0xf]
        %v1127 = vld [vmem:[%s4 + $0x84] sm:$0xf]
        %v1128 = vld [vmem:[%s4 + $0x88] sm:$0xf]
        %v1129 = vld [vmem:[%s4 + $0x8c] sm:$0xf]
        %v1130 = vld [vmem:[%s4 + $0x90] sm:$0xf]
        %v1131 = vld [vmem:[%s4 + $0x94] sm:$0xf]
        %v1132 = vld [vmem:[%s4 + $0x98] sm:$0xf]
        %v1133 = vld [vmem:[%s4 + $0x9c] sm:$0xf]
        %v1134 = vld [vmem:[%s4 + $0xa0] sm:$0xf]
        %v1135 = vld [vmem:[%s4 + $0xa4] sm:$0xf]
        %v1136 = vld [vmem:[%s4 + $0xa8] sm:$0xf]
        %v1137 = vld [vmem:[%s4 + $0xac] sm:$0xf]
        %v1138 = vld [vmem:[%s4 + $0xb0] sm:$0xf]
        %v1139 = vld [vmem:[%s4 + $0xb4] sm:$0xf]
        %v1140 = vld [vmem:[%s4 + $0xb8] sm:$0xf]
        %v1141 = vld [vmem:[%s4 + $0xbc] sm:$0xf]
        %v1142 = vld [vmem:[%s4 + $0xc0] sm:$0xf]
        %v1143 = vld [vmem:[%s4 + $0xc4] sm:$0xf]
        %v1144 = vld [vmem:[%s4 + $0xc8] sm:$0xf]
        %v1145 = vld [vmem:[%s4 + $0xcc] sm:$0xf]
        %v1146 = vld [vmem:[%s4 + $0xd0] sm:$0xf]
        %v1147 = vld [vmem:[%s4 + $0xd4] sm:$0xf]
        %v1148 = vld [vmem:[%s4 + $0xd8] sm:$0xf]
        %v1149 = vld [vmem:[%s4 + $0xdc] sm:$0xf]
        %v1150 = vld [vmem:[%s4 + $0xe0] sm:$0xf]
        %v1151 = vld [vmem:[%s4 + $0xe4] sm:$0xf]
        %v1152 = vld [vmem:[%s4 + $0xe8] sm:$0xf]
        %v1153 = vld [vmem:[%s4 + $0xec] sm:$0xf]
        %s1154 = scalar_lea.vmem %s4, 240
        %v1155 = vld [vmem:[%s1154] sm:$0xf]
        %v1156 = vld [vmem:[%s1154 + $0x4] sm:$0xf]
        %v1157 = vld [vmem:[%s1154 + $0x8] sm:$0xf]
        %v1158 = vld [vmem:[%s1154 + $0xc] sm:$0xf]
        %v1159 = vld [vmem:[%s1154 + $0x10] sm:$0xf]
        %v1160 = vld [vmem:[%s1154 + $0x14] sm:$0xf]
        %v1161 = vld [vmem:[%s1154 + $0x18] sm:$0xf]
        %v1162 = vld [vmem:[%s1154 + $0x1c] sm:$0xf]
        %v1163 = vld [vmem:[%s1154 + $0x20] sm:$0xf]
        %v1164 = vld [vmem:[%s1154 + $0x24] sm:$0xf]
        %v1165 = vld [vmem:[%s1154 + $0x28] sm:$0xf]
        %v1166 = vld [vmem:[%s1154 + $0x2c] sm:$0xf]
        %v1167 = vld [vmem:[%s1154 + $0x30] sm:$0xf]
        %v1168 = vld [vmem:[%s1154 + $0x34] sm:$0xf]
        %v1169 = vld [vmem:[%s1154 + $0x38] sm:$0xf]
        %v1170 = vld [vmem:[%s1154 + $0x3c] sm:$0xf]
        %v1171 = vld [vmem:[%s1154 + $0x40] sm:$0xf]
        %v1172 = vld [vmem:[%s1154 + $0x44] sm:$0xf]
        %v1173 = vld [vmem:[%s1154 + $0x48] sm:$0xf]
        %v1174 = vld [vmem:[%s1154 + $0x4c] sm:$0xf]
        %v1175 = vld [vmem:[%s1154 + $0x50] sm:$0xf]
        %v1176 = vld [vmem:[%s1154 + $0x54] sm:$0xf]
        %v1177 = vld [vmem:[%s1154 + $0x58] sm:$0xf]
        %v1178 = vld [vmem:[%s1154 + $0x5c] sm:$0xf]
        %v1179 = vld [vmem:[%s1154 + $0x60] sm:$0xf]
        %v1180 = vld [vmem:[%s1154 + $0x64] sm:$0xf]
        %v1181 = vld [vmem:[%s1154 + $0x68] sm:$0xf]
        %v1182 = vld [vmem:[%s1154 + $0x6c] sm:$0xf]
        %v1183 = vld [vmem:[%s1154 + $0x70] sm:$0xf]
        %v1184 = vld [vmem:[%s1154 + $0x74] sm:$0xf]
        %v1185 = vld [vmem:[%s1154 + $0x78] sm:$0xf]
        %v1186 = vld [vmem:[%s1154 + $0x7c] sm:$0xf]
        %v1187 = vld [vmem:[%s1154 + $0x80] sm:$0xf]
        %v1188 = vld [vmem:[%s1154 + $0x84] sm:$0xf]
        %v1189 = vld [vmem:[%s1154 + $0x88] sm:$0xf]
        %v1190 = vld [vmem:[%s1154 + $0x8c] sm:$0xf]
        %v1191 = vld [vmem:[%s1154 + $0x90] sm:$0xf]
        %v1192 = vld [vmem:[%s1154 + $0x94] sm:$0xf]
        %v1193 = vld [vmem:[%s1154 + $0x98] sm:$0xf]
        %v1194 = vld [vmem:[%s1154 + $0x9c] sm:$0xf]
        %v1195 = vld [vmem:[%s1154 + $0xa0] sm:$0xf]
        %v1196 = vld [vmem:[%s1154 + $0xa4] sm:$0xf]
        %v1197 = vld [vmem:[%s1154 + $0xa8] sm:$0xf]
        %v1198 = vld [vmem:[%s1154 + $0xac] sm:$0xf]
        %v1199 = vld [vmem:[%s1154 + $0xb0] sm:$0xf]
        %v1200 = vld [vmem:[%s1154 + $0xb4] sm:$0xf]
        %v1201 = vld [vmem:[%s1154 + $0xb8] sm:$0xf]
        %v1202 = vld [vmem:[%s1154 + $0xbc] sm:$0xf]
        %v1203 = vld [vmem:[%s1154 + $0xc0] sm:$0xf]
        %v1204 = vld [vmem:[%s1154 + $0xc4] sm:$0xf]
        %v1205 = vld [vmem:[%s1154 + $0xc8] sm:$0xf]
        %v1206 = vld [vmem:[%s1154 + $0xcc] sm:$0xf]
        %v1207 = vld [vmem:[%s1154 + $0xd0] sm:$0xf]
        %v1208 = vld [vmem:[%s1154 + $0xd4] sm:$0xf]
        %v1209 = vld [vmem:[%s1154 + $0xd8] sm:$0xf]
        %v1210 = vld [vmem:[%s1154 + $0xdc] sm:$0xf]
        %v1211 = vld [vmem:[%s1154 + $0xe0] sm:$0xf]
        %v1212 = vld [vmem:[%s1154 + $0xe4] sm:$0xf]
        %v1213 = vld [vmem:[%s1154 + $0xe8] sm:$0xf]
        %v1214 = vld [vmem:[%s1154 + $0xec] sm:$0xf]
        %v1216 = vshrl.u32 %v1086, 16
        %v1218 = vshll.u32 %v1086, 16
        %v1220 = vrot.slane %v1218, 1
        %v1221 = vor.u32 %v1216, %v1220
        %v1223 = vshll.u32 %v1090, 16
        %v1225 = vrot.slane %v1223, 1
        %v1226 = vsel %vm344, %v1221, %v1225
        %v1228 = vshrl.u32 %v1087, 16
        %v1230 = vshll.u32 %v1087, 16
        %v1232 = vrot.slane %v1230, 1
        %v1233 = vor.u32 %v1228, %v1232
        %v1235 = vshll.u32 %v1091, 16
        %v1237 = vrot.slane %v1235, 1
        %v1238 = vsel %vm344, %v1233, %v1237
        %v1240 = vshrl.u32 %v1088, 16
        %v1242 = vshll.u32 %v1088, 16
        %v1244 = vrot.slane %v1242, 1
        %v1245 = vor.u32 %v1240, %v1244
        %v1247 = vshll.u32 %v1092, 16
        %v1249 = vrot.slane %v1247, 1
        %v1250 = vsel %vm344, %v1245, %v1249
        %v1252 = vshrl.u32 %v1089, 16
        %v1254 = vshll.u32 %v1089, 16
        %v1256 = vrot.slane %v1254, 1
        %v1257 = vor.u32 %v1252, %v1256
        %v1259 = vshll.u32 %v1093, 16
        %v1261 = vrot.slane %v1259, 1
        %v1262 = vsel %vm344, %v1257, %v1261
        %v1263 = vshrl.u32 %v1090, 16
        %v1265 = vor.u32 %v1263, %v1225
        %v1266 = vshrl.u32 %v1091, 16
        %v1268 = vor.u32 %v1266, %v1237
        %v1269 = vshrl.u32 %v1092, 16
        %v1271 = vor.u32 %v1269, %v1249
        %v1272 = vshrl.u32 %v1093, 16
        %v1274 = vor.u32 %v1272, %v1261
        %v1341 = vunpack.c.l.b16 %v1155
        %v1342 = vunpack.c.l.b16 %v1156
        %v1343 = vunpack.c.l.b16 %v1157
        %v1344 = vunpack.c.l.b16 %v1158
        %v1345 = vunpack.c.l.b16 %v1159
        %v1346 = vunpack.c.l.b16 %v1160
        %v1347 = vunpack.c.l.b16 %v1161
        %v1348 = vunpack.c.l.b16 %v1162
        %v1349 = vunpack.c.l.b16 %v1163
        %v1350 = vunpack.c.l.b16 %v1164
        %v1351 = vunpack.c.l.b16 %v1165
        %v1352 = vunpack.c.l.b16 %v1166
        %v1353 = vunpack.c.l.b16 %v1167
        %v1354 = vunpack.c.l.b16 %v1168
        %v1355 = vunpack.c.l.b16 %v1169
        %v1356 = vunpack.c.l.b16 %v1170
        %v1357 = vunpack.c.l.b16 %v1171
        %v1358 = vunpack.c.l.b16 %v1172
        %v1359 = vunpack.c.l.b16 %v1173
        %v1360 = vunpack.c.l.b16 %v1174
        %v1361 = vunpack.c.l.b16 %v1175
        %v1362 = vunpack.c.l.b16 %v1176
        %v1363 = vunpack.c.l.b16 %v1177
        %v1364 = vunpack.c.l.b16 %v1178
        %v1365 = vunpack.c.l.b16 %v1179
        %v1366 = vunpack.c.l.b16 %v1180
        %v1367 = vunpack.c.l.b16 %v1181
        %v1368 = vunpack.c.l.b16 %v1182
        %v1369 = vunpack.c.l.b16 %v1183
        %v1370 = vunpack.c.l.b16 %v1184
        %v1371 = vunpack.c.l.b16 %v1185
        %v1372 = vunpack.c.l.b16 %v1186
        %v1373 = vunpack.c.l.b16 %v1187
        %v1374 = vunpack.c.l.b16 %v1188
        %v1375 = vunpack.c.l.b16 %v1189
        %v1376 = vunpack.c.l.b16 %v1190
        %v1377 = vunpack.c.l.b16 %v1191
        %v1378 = vunpack.c.l.b16 %v1192
        %v1379 = vunpack.c.l.b16 %v1193
        %v1380 = vunpack.c.l.b16 %v1194
        %v1381 = vunpack.c.l.b16 %v1195
        %v1382 = vunpack.c.l.b16 %v1196
        %v1383 = vunpack.c.l.b16 %v1197
        %v1384 = vunpack.c.l.b16 %v1198
        %v1385 = vunpack.c.l.b16 %v1199
        %v1386 = vunpack.c.l.b16 %v1200
        %v1387 = vunpack.c.l.b16 %v1201
        %v1388 = vunpack.c.l.b16 %v1202
        %v1389 = vunpack.c.l.b16 %v1203
        %v1390 = vunpack.c.l.b16 %v1204
        %v1391 = vunpack.c.l.b16 %v1205
        %v1392 = vunpack.c.l.b16 %v1206
        %v1393 = vunpack.c.l.b16 %v1207
        %v1394 = vunpack.c.l.b16 %v1208
        %v1395 = vunpack.c.l.b16 %v1209
        %v1396 = vunpack.c.l.b16 %v1210
        %v1397 = vunpack.c.l.b16 %v1211
        %v1398 = vunpack.c.l.b16 %v1212
        %v1399 = vunpack.c.l.b16 %v1213
        %v1400 = vunpack.c.l.b16 %v1214
        %v1401 = vpack.c.b16 %v1342, %v1341
        %v1402 = vpack.c.b16 %v1344, %v1343
        %v1403 = vpack.c.b16 %v1346, %v1345
        %v1404 = vpack.c.b16 %v1348, %v1347
        %v1405 = vpack.c.b16 %v1350, %v1349
        %v1406 = vpack.c.b16 %v1352, %v1351
        %v1407 = vpack.c.b16 %v1354, %v1353
        %v1408 = vpack.c.b16 %v1356, %v1355
        %v1409 = vpack.c.b16 %v1358, %v1357
        %v1410 = vpack.c.b16 %v1360, %v1359
        %v1411 = vpack.c.b16 %v1362, %v1361
        %v1412 = vpack.c.b16 %v1364, %v1363
        %v1413 = vpack.c.b16 %v1366, %v1365
        %v1414 = vpack.c.b16 %v1368, %v1367
        %v1415 = vpack.c.b16 %v1370, %v1369
        %v1416 = vpack.c.b16 %v1372, %v1371
        %v1417 = vpack.c.b16 %v1374, %v1373
        %v1418 = vpack.c.b16 %v1376, %v1375
        %v1419 = vpack.c.b16 %v1378, %v1377
        %v1420 = vpack.c.b16 %v1380, %v1379
        %v1421 = vpack.c.b16 %v1382, %v1381
        %v1422 = vpack.c.b16 %v1384, %v1383
        %v1423 = vpack.c.b16 %v1386, %v1385
        %v1424 = vpack.c.b16 %v1388, %v1387
        %v1425 = vpack.c.b16 %v1390, %v1389
        %v1426 = vpack.c.b16 %v1392, %v1391
        %v1427 = vpack.c.b16 %v1394, %v1393
        %v1428 = vpack.c.b16 %v1396, %v1395
        %v1429 = vpack.c.b16 %v1398, %v1397
        %v1430 = vpack.c.b16 %v1400, %v1399
        %v1462 = vsel %vm480, %v1262, 0
        %v1465 = vsel %vm480, %v1274, 0
        %1467 = vmatpush.bf16.msra.mxu0 %v1408
        %1468 = vmatpush.bf16.msra.mxu0 %v1407
        %1469 = vmatpush.bf16.msra.mxu0 %v1406
        %1470 = vmatpush.bf16.msra.mxu0 %v1405
        %1471 = vmatpush.bf16.msra.mxu0 %v1404
        %1472 = vmatpush.bf16.msra.mxu0 %v1403
        %1473 = vmatpush.bf16.msra.mxu0 %v1402
        %1474 = vmatpush.bf16.msra.mxu0 %v1401
        %1475 = vmatmul.bf16.gmra.mxu0 %v1226
        %v1476 = vpop.f32.mrf.mxu0
        %v1477 = vadd.f32 0.0, %v1476
        %v1478 = vpop.f32.mrf.mxu0
        %v1479 = vadd.f32 0.0, %v1478
        %1480 = vmatmul.bf16.gmra.mxu0 %v1265
        %v1481 = vpop.f32.mrf.mxu0
        %v1482 = vadd.f32 0.0, %v1481
        %v1483 = vpop.f32.mrf.mxu0
        %v1484 = vadd.f32 0.0, %v1483
        %1485 = vdwg.mxu0
        %1486 = vmatpush.bf16.msra.mxu0 %v1416
        %1487 = vmatpush.bf16.msra.mxu0 %v1415
        %1488 = vmatpush.bf16.msra.mxu0 %v1414
        %1489 = vmatpush.bf16.msra.mxu0 %v1413
        %1490 = vmatpush.bf16.msra.mxu0 %v1412
        %1491 = vmatpush.bf16.msra.mxu0 %v1411
        %1492 = vmatpush.bf16.msra.mxu0 %v1410
        %1493 = vmatpush.bf16.msra.mxu0 %v1409
        %1494 = vmatmul.bf16.gmra.mxu0 %v1238
        %v1495 = vpop.f32.mrf.mxu0
        %v1496 = vadd.f32 %v1477, %v1495
        %v1497 = vpop.f32.mrf.mxu0
        %v1498 = vadd.f32 %v1479, %v1497
        %1499 = vmatmul.bf16.gmra.mxu0 %v1268
        %v1500 = vpop.f32.mrf.mxu0
        %v1501 = vadd.f32 %v1482, %v1500
        %v1502 = vpop.f32.mrf.mxu0
        %v1503 = vadd.f32 %v1484, %v1502
        %1504 = vdwg.mxu0
        %1505 = vmatpush.bf16.msra.mxu0 %v1424
        %1506 = vmatpush.bf16.msra.mxu0 %v1423
        %1507 = vmatpush.bf16.msra.mxu0 %v1422
        %1508 = vmatpush.bf16.msra.mxu0 %v1421
        %1509 = vmatpush.bf16.msra.mxu0 %v1420
        %1510 = vmatpush.bf16.msra.mxu0 %v1419
        %1511 = vmatpush.bf16.msra.mxu0 %v1418
        %1512 = vmatpush.bf16.msra.mxu0 %v1417
        %1513 = vmatmul.bf16.gmra.mxu0 %v1250
        %v1514 = vpop.f32.mrf.mxu0
        %v1515 = vadd.f32 %v1496, %v1514
        %v1516 = vpop.f32.mrf.mxu0
        %v1517 = vadd.f32 %v1498, %v1516
        %1518 = vmatmul.bf16.gmra.mxu0 %v1271
        %v1519 = vpop.f32.mrf.mxu0
        %v1520 = vadd.f32 %v1501, %v1519
        %v1521 = vpop.f32.mrf.mxu0
        %v1522 = vadd.f32 %v1503, %v1521
        %1523 = vdwg.mxu0
        %1524 = vmatpush.bf16.msra.mxu0 0
        %1525 = vmatpush.bf16.msra.mxu0 0
        %1526 = vmatpush.bf16.msra.mxu0 %v1430
        %1527 = vmatpush.bf16.msra.mxu0 %v1429
        %1528 = vmatpush.bf16.msra.mxu0 %v1428
        %1529 = vmatpush.bf16.msra.mxu0 %v1427
        %1530 = vmatpush.bf16.msra.mxu0 %v1426
        %1531 = vmatpush.bf16.msra.mxu0 %v1425
        %1532 = vmatmul.bf16.gmra.mxu0 %v1462
        %v1533 = vpop.f32.mrf.mxu0
        %v1534 = vadd.f32 %v1515, %v1533
        %v1535 = vpop.f32.mrf.mxu0
        %v1536 = vadd.f32 %v1517, %v1535
        %1537 = vmatmul.bf16.gmra.mxu0 %v1465
        %v1538 = vpop.f32.mrf.mxu0
        %v1539 = vadd.f32 %v1520, %v1538
        %v1540 = vpop.f32.mrf.mxu0
        %v1541 = vadd.f32 %v1522, %v1540
        %1542 = vdwg.mxu0
        %v1603 = vunpack.c.l.b16 %v1094
        %v1604 = vunpack.c.l.b16 %v1095
        %v1605 = vunpack.c.l.b16 %v1096
        %v1606 = vunpack.c.l.b16 %v1097
        %v1607 = vunpack.c.l.b16 %v1098
        %v1608 = vunpack.c.l.b16 %v1099
        %v1609 = vunpack.c.l.b16 %v1100
        %v1610 = vunpack.c.l.b16 %v1101
        %v1611 = vunpack.c.l.b16 %v1102
        %v1612 = vunpack.c.l.b16 %v1103
        %v1613 = vunpack.c.l.b16 %v1104
        %v1614 = vunpack.c.l.b16 %v1105
        %v1615 = vunpack.c.l.b16 %v1106
        %v1616 = vunpack.c.l.b16 %v1107
        %v1617 = vunpack.c.l.b16 %v1108
        %v1618 = vunpack.c.l.b16 %v1109
        %v1619 = vunpack.c.l.b16 %v1110
        %v1620 = vunpack.c.l.b16 %v1111
        %v1621 = vunpack.c.l.b16 %v1112
        %v1622 = vunpack.c.l.b16 %v1113
        %v1623 = vunpack.c.l.b16 %v1114
        %v1624 = vunpack.c.l.b16 %v1115
        %v1625 = vunpack.c.l.b16 %v1116
        %v1626 = vunpack.c.l.b16 %v1117
        %v1627 = vunpack.c.l.b16 %v1118
        %v1628 = vunpack.c.l.b16 %v1119
        %v1629 = vunpack.c.l.b16 %v1120
        %v1630 = vunpack.c.l.b16 %v1121
        %v1631 = vunpack.c.l.b16 %v1122
        %v1632 = vunpack.c.l.b16 %v1123
        %v1633 = vunpack.c.l.b16 %v1124
        %v1634 = vunpack.c.l.b16 %v1125
        %v1635 = vunpack.c.l.b16 %v1126
        %v1636 = vunpack.c.l.b16 %v1127
        %v1637 = vunpack.c.l.b16 %v1128
        %v1638 = vunpack.c.l.b16 %v1129
        %v1639 = vunpack.c.l.b16 %v1130
        %v1640 = vunpack.c.l.b16 %v1131
        %v1641 = vunpack.c.l.b16 %v1132
        %v1642 = vunpack.c.l.b16 %v1133
        %v1643 = vunpack.c.l.b16 %v1134
        %v1644 = vunpack.c.l.b16 %v1135
        %v1645 = vunpack.c.l.b16 %v1136
        %v1646 = vunpack.c.l.b16 %v1137
        %v1647 = vunpack.c.l.b16 %v1138
        %v1648 = vunpack.c.l.b16 %v1139
        %v1649 = vunpack.c.l.b16 %v1140
        %v1650 = vunpack.c.l.b16 %v1141
        %v1651 = vunpack.c.l.b16 %v1142
        %v1652 = vunpack.c.l.b16 %v1143
        %v1653 = vunpack.c.l.b16 %v1144
        %v1654 = vunpack.c.l.b16 %v1145
        %v1655 = vunpack.c.l.b16 %v1146
        %v1656 = vunpack.c.l.b16 %v1147
        %v1657 = vunpack.c.l.b16 %v1148
        %v1658 = vunpack.c.l.b16 %v1149
        %v1659 = vunpack.c.l.b16 %v1150
        %v1660 = vunpack.c.l.b16 %v1151
        %v1661 = vunpack.c.l.b16 %v1152
        %v1662 = vunpack.c.l.b16 %v1153
        %v1663 = vpack.c.b16 %v1604, %v1603
        %v1664 = vpack.c.b16 %v1606, %v1605
        %v1665 = vpack.c.b16 %v1608, %v1607
        %v1666 = vpack.c.b16 %v1610, %v1609
        %v1667 = vpack.c.b16 %v1612, %v1611
        %v1668 = vpack.c.b16 %v1614, %v1613
        %v1669 = vpack.c.b16 %v1616, %v1615
        %v1670 = vpack.c.b16 %v1618, %v1617
        %v1671 = vpack.c.b16 %v1620, %v1619
        %v1672 = vpack.c.b16 %v1622, %v1621
        %v1673 = vpack.c.b16 %v1624, %v1623
        %v1674 = vpack.c.b16 %v1626, %v1625
        %v1675 = vpack.c.b16 %v1628, %v1627
        %v1676 = vpack.c.b16 %v1630, %v1629
        %v1677 = vpack.c.b16 %v1632, %v1631
        %v1678 = vpack.c.b16 %v1634, %v1633
        %v1679 = vpack.c.b16 %v1636, %v1635
        %v1680 = vpack.c.b16 %v1638, %v1637
        %v1681 = vpack.c.b16 %v1640, %v1639
        %v1682 = vpack.c.b16 %v1642, %v1641
        %v1683 = vpack.c.b16 %v1644, %v1643
        %v1684 = vpack.c.b16 %v1646, %v1645
        %v1685 = vpack.c.b16 %v1648, %v1647
        %v1686 = vpack.c.b16 %v1650, %v1649
        %v1687 = vpack.c.b16 %v1652, %v1651
        %v1688 = vpack.c.b16 %v1654, %v1653
        %v1689 = vpack.c.b16 %v1656, %v1655
        %v1690 = vpack.c.b16 %v1658, %v1657
        %v1691 = vpack.c.b16 %v1660, %v1659
        %v1692 = vpack.c.b16 %v1662, %v1661
        %v1723 = vsel %vm480, %v1089, 0
        %v1725 = vsel %vm480, %v1093, 0
        %1727 = vmatpush.bf16.msra.mxu0 %v1670
        %1728 = vmatpush.bf16.msra.mxu0 %v1669
        %1729 = vmatpush.bf16.msra.mxu0 %v1668
        %1730 = vmatpush.bf16.msra.mxu0 %v1667
        %1731 = vmatpush.bf16.msra.mxu0 %v1666
        %1732 = vmatpush.bf16.msra.mxu0 %v1665
        %1733 = vmatpush.bf16.msra.mxu0 %v1664
        %1734 = vmatpush.bf16.msra.mxu0 %v1663
        %1735 = vmatmul.bf16.gmra.mxu0 %v1086
        %v1736 = vpop.f32.mrf.mxu0
        %v1737 = vadd.f32 %v1534, %v1736
        %v1738 = vpop.f32.mrf.mxu0
        %v1739 = vadd.f32 %v1536, %v1738
        %1740 = vmatmul.bf16.gmra.mxu0 %v1090
        %v1741 = vpop.f32.mrf.mxu0
        %v1742 = vadd.f32 %v1539, %v1741
        %v1743 = vpop.f32.mrf.mxu0
        %v1744 = vadd.f32 %v1541, %v1743
        %1745 = vdwg.mxu0
        %1746 = vmatpush.bf16.msra.mxu0 %v1678
        %1747 = vmatpush.bf16.msra.mxu0 %v1677
        %1748 = vmatpush.bf16.msra.mxu0 %v1676
        %1749 = vmatpush.bf16.msra.mxu0 %v1675
        %1750 = vmatpush.bf16.msra.mxu0 %v1674
        %1751 = vmatpush.bf16.msra.mxu0 %v1673
        %1752 = vmatpush.bf16.msra.mxu0 %v1672
        %1753 = vmatpush.bf16.msra.mxu0 %v1671
        %1754 = vmatmul.bf16.gmra.mxu0 %v1087
        %v1755 = vpop.f32.mrf.mxu0
        %v1756 = vadd.f32 %v1737, %v1755
        %v1757 = vpop.f32.mrf.mxu0
        %v1758 = vadd.f32 %v1739, %v1757
        %1759 = vmatmul.bf16.gmra.mxu0 %v1091
        %v1760 = vpop.f32.mrf.mxu0
        %v1761 = vadd.f32 %v1742, %v1760
        %v1762 = vpop.f32.mrf.mxu0
        %v1763 = vadd.f32 %v1744, %v1762
        %1764 = vdwg.mxu0
        %1765 = vmatpush.bf16.msra.mxu0 %v1686
        %1766 = vmatpush.bf16.msra.mxu0 %v1685
        %1767 = vmatpush.bf16.msra.mxu0 %v1684
        %1768 = vmatpush.bf16.msra.mxu0 %v1683
        %1769 = vmatpush.bf16.msra.mxu0 %v1682
        %1770 = vmatpush.bf16.msra.mxu0 %v1681
        %1771 = vmatpush.bf16.msra.mxu0 %v1680
        %1772 = vmatpush.bf16.msra.mxu0 %v1679
        %1773 = vmatmul.bf16.gmra.mxu0 %v1088
        %v1774 = vpop.f32.mrf.mxu0
        %v1775 = vadd.f32 %v1756, %v1774
        %v1776 = vpop.f32.mrf.mxu0
        %v1777 = vadd.f32 %v1758, %v1776
        %1778 = vmatmul.bf16.gmra.mxu0 %v1092
        %v1779 = vpop.f32.mrf.mxu0
        %v1780 = vadd.f32 %v1761, %v1779
        %v1781 = vpop.f32.mrf.mxu0
        %v1782 = vadd.f32 %v1763, %v1781
        %1783 = vdwg.mxu0
        %1784 = vmatpush.bf16.msra.mxu0 0
        %1785 = vmatpush.bf16.msra.mxu0 0
        %1786 = vmatpush.bf16.msra.mxu0 %v1692
        %1787 = vmatpush.bf16.msra.mxu0 %v1691
        %1788 = vmatpush.bf16.msra.mxu0 %v1690
        %1789 = vmatpush.bf16.msra.mxu0 %v1689
        %1790 = vmatpush.bf16.msra.mxu0 %v1688
        %1791 = vmatpush.bf16.msra.mxu0 %v1687
        %1792 = vmatmul.bf16.gmra.mxu0 %v1723
        %v1793 = vpop.f32.mrf.mxu0
        %v1794 = vadd.f32 %v1775, %v1793
        %v1795 = vpop.f32.mrf.mxu0
        %v1796 = vadd.f32 %v1777, %v1795
        %1797 = vmatmul.bf16.gmra.mxu0 %v1725
        %v1798 = vpop.f32.mrf.mxu0
        %v1799 = vadd.f32 %v1780, %v1798
        %v1800 = vpop.f32.mrf.mxu0
        %v1801 = vadd.f32 %v1782, %v1800
        %1802 = vdwg.mxu0
        %s1803 = scalar_lea.vmem %s4, 480
        %v1804 = vld [vmem:[%s1803] sm:$0xf]
        %v1805 = vld [vmem:[%s1803 + $0x4] sm:$0xf]
        %v1806 = vld [vmem:[%s1803 + $0x8] sm:$0xf]
        %v1807 = vld [vmem:[%s1803 + $0xc] sm:$0xf]
        %v1808 = vld [vmem:[%s1803 + $0x10] sm:$0xf]
        %v1809 = vld [vmem:[%s1803 + $0x14] sm:$0xf]
        %v1810 = vld [vmem:[%s1803 + $0x18] sm:$0xf]
        %v1811 = vld [vmem:[%s1803 + $0x1c] sm:$0xf]
        %v1812 = vld [vmem:[%s1803 + $0x20] sm:$0xf]
        %v1813 = vld [vmem:[%s1803 + $0x24] sm:$0xf]
        %v1814 = vld [vmem:[%s1803 + $0x28] sm:$0xf]
        %v1815 = vld [vmem:[%s1803 + $0x2c] sm:$0xf]
        %v1816 = vld [vmem:[%s1803 + $0x30] sm:$0xf]
        %v1817 = vld [vmem:[%s1803 + $0x34] sm:$0xf]
        %v1818 = vld [vmem:[%s1803 + $0x38] sm:$0xf]
        %v1819 = vld [vmem:[%s1803 + $0x3c] sm:$0xf]
        %v1820 = vld [vmem:[%s1803 + $0x40] sm:$0xf]
        %v1821 = vld [vmem:[%s1803 + $0x44] sm:$0xf]
        %v1822 = vld [vmem:[%s1803 + $0x48] sm:$0xf]
        %v1823 = vld [vmem:[%s1803 + $0x4c] sm:$0xf]
        %v1824 = vld [vmem:[%s1803 + $0x50] sm:$0xf]
        %v1825 = vld [vmem:[%s1803 + $0x54] sm:$0xf]
        %v1826 = vld [vmem:[%s1803 + $0x58] sm:$0xf]
        %v1827 = vld [vmem:[%s1803 + $0x5c] sm:$0xf]
        %v1828 = vld [vmem:[%s1803 + $0x60] sm:$0xf]
        %v1829 = vld [vmem:[%s1803 + $0x64] sm:$0xf]
        %v1830 = vld [vmem:[%s1803 + $0x68] sm:$0xf]
        %v1831 = vld [vmem:[%s1803 + $0x6c] sm:$0xf]
        %v1832 = vld [vmem:[%s1803 + $0x70] sm:$0xf]
        %v1833 = vld [vmem:[%s1803 + $0x74] sm:$0xf]
        %v1834 = vld [vmem:[%s1803 + $0x78] sm:$0xf]
        %v1835 = vld [vmem:[%s1803 + $0x7c] sm:$0xf]
        %v1836 = vld [vmem:[%s1803 + $0x80] sm:$0xf]
        %v1837 = vld [vmem:[%s1803 + $0x84] sm:$0xf]
        %v1838 = vld [vmem:[%s1803 + $0x88] sm:$0xf]
        %v1839 = vld [vmem:[%s1803 + $0x8c] sm:$0xf]
        %v1840 = vld [vmem:[%s1803 + $0x90] sm:$0xf]
        %v1841 = vld [vmem:[%s1803 + $0x94] sm:$0xf]
        %v1842 = vld [vmem:[%s1803 + $0x98] sm:$0xf]
        %v1843 = vld [vmem:[%s1803 + $0x9c] sm:$0xf]
        %v1844 = vld [vmem:[%s1803 + $0xa0] sm:$0xf]
        %v1845 = vld [vmem:[%s1803 + $0xa4] sm:$0xf]
        %v1846 = vld [vmem:[%s1803 + $0xa8] sm:$0xf]
        %v1847 = vld [vmem:[%s1803 + $0xac] sm:$0xf]
        %v1848 = vld [vmem:[%s1803 + $0xb0] sm:$0xf]
        %v1849 = vld [vmem:[%s1803 + $0xb4] sm:$0xf]
        %v1850 = vld [vmem:[%s1803 + $0xb8] sm:$0xf]
        %v1851 = vld [vmem:[%s1803 + $0xbc] sm:$0xf]
        %v1852 = vld [vmem:[%s1803 + $0xc0] sm:$0xf]
        %v1853 = vld [vmem:[%s1803 + $0xc4] sm:$0xf]
        %v1854 = vld [vmem:[%s1803 + $0xc8] sm:$0xf]
        %v1855 = vld [vmem:[%s1803 + $0xcc] sm:$0xf]
        %v1856 = vld [vmem:[%s1803 + $0xd0] sm:$0xf]
        %v1857 = vld [vmem:[%s1803 + $0xd4] sm:$0xf]
        %v1858 = vld [vmem:[%s1803 + $0xd8] sm:$0xf]
        %v1859 = vld [vmem:[%s1803 + $0xdc] sm:$0xf]
        %v1860 = vld [vmem:[%s1803 + $0xe0] sm:$0xf]
        %v1861 = vld [vmem:[%s1803 + $0xe4] sm:$0xf]
        %v1862 = vld [vmem:[%s1803 + $0xe8] sm:$0xf]
        %v1863 = vld [vmem:[%s1803 + $0xec] sm:$0xf]
        %v1872 = vrot.slane %v1086, 1
        %v1873 = vrot.slane %v1090, 1
        %v1874 = vsel %vm790, %v1872, %v1873
        %v1875 = vrot.slane %v1087, 1
        %v1876 = vrot.slane %v1091, 1
        %v1877 = vsel %vm790, %v1875, %v1876
        %v1878 = vrot.slane %v1088, 1
        %v1879 = vrot.slane %v1092, 1
        %v1880 = vsel %vm790, %v1878, %v1879
        %v1881 = vrot.slane %v1089, 1
        %v1882 = vrot.slane %v1093, 1
        %v1883 = vsel %vm790, %v1881, %v1882
        %v1950 = vunpack.c.l.b16 %v1804
        %v1951 = vunpack.c.l.b16 %v1805
        %v1952 = vunpack.c.l.b16 %v1806
        %v1953 = vunpack.c.l.b16 %v1807
        %v1954 = vunpack.c.l.b16 %v1808
        %v1955 = vunpack.c.l.b16 %v1809
        %v1956 = vunpack.c.l.b16 %v1810
        %v1957 = vunpack.c.l.b16 %v1811
        %v1958 = vunpack.c.l.b16 %v1812
        %v1959 = vunpack.c.l.b16 %v1813
        %v1960 = vunpack.c.l.b16 %v1814
        %v1961 = vunpack.c.l.b16 %v1815
        %v1962 = vunpack.c.l.b16 %v1816
        %v1963 = vunpack.c.l.b16 %v1817
        %v1964 = vunpack.c.l.b16 %v1818
        %v1965 = vunpack.c.l.b16 %v1819
        %v1966 = vunpack.c.l.b16 %v1820
        %v1967 = vunpack.c.l.b16 %v1821
        %v1968 = vunpack.c.l.b16 %v1822
        %v1969 = vunpack.c.l.b16 %v1823
        %v1970 = vunpack.c.l.b16 %v1824
        %v1971 = vunpack.c.l.b16 %v1825
        %v1972 = vunpack.c.l.b16 %v1826
        %v1973 = vunpack.c.l.b16 %v1827
        %v1974 = vunpack.c.l.b16 %v1828
        %v1975 = vunpack.c.l.b16 %v1829
        %v1976 = vunpack.c.l.b16 %v1830
        %v1977 = vunpack.c.l.b16 %v1831
        %v1978 = vunpack.c.l.b16 %v1832
        %v1979 = vunpack.c.l.b16 %v1833
        %v1980 = vunpack.c.l.b16 %v1834
        %v1981 = vunpack.c.l.b16 %v1835
        %v1982 = vunpack.c.l.b16 %v1836
        %v1983 = vunpack.c.l.b16 %v1837
        %v1984 = vunpack.c.l.b16 %v1838
        %v1985 = vunpack.c.l.b16 %v1839
        %v1986 = vunpack.c.l.b16 %v1840
        %v1987 = vunpack.c.l.b16 %v1841
        %v1988 = vunpack.c.l.b16 %v1842
        %v1989 = vunpack.c.l.b16 %v1843
        %v1990 = vunpack.c.l.b16 %v1844
        %v1991 = vunpack.c.l.b16 %v1845
        %v1992 = vunpack.c.l.b16 %v1846
        %v1993 = vunpack.c.l.b16 %v1847
        %v1994 = vunpack.c.l.b16 %v1848
        %v1995 = vunpack.c.l.b16 %v1849
        %v1996 = vunpack.c.l.b16 %v1850
        %v1997 = vunpack.c.l.b16 %v1851
        %v1998 = vunpack.c.l.b16 %v1852
        %v1999 = vunpack.c.l.b16 %v1853
        %v2000 = vunpack.c.l.b16 %v1854
        %v2001 = vunpack.c.l.b16 %v1855
        %v2002 = vunpack.c.l.b16 %v1856
        %v2003 = vunpack.c.l.b16 %v1857
        %v2004 = vunpack.c.l.b16 %v1858
        %v2005 = vunpack.c.l.b16 %v1859
        %v2006 = vunpack.c.l.b16 %v1860
        %v2007 = vunpack.c.l.b16 %v1861
        %v2008 = vunpack.c.l.b16 %v1862
        %v2009 = vunpack.c.l.b16 %v1863
        %v2010 = vpack.c.b16 %v1951, %v1950
        %v2011 = vpack.c.b16 %v1953, %v1952
        %v2012 = vpack.c.b16 %v1955, %v1954
        %v2013 = vpack.c.b16 %v1957, %v1956
        %v2014 = vpack.c.b16 %v1959, %v1958
        %v2015 = vpack.c.b16 %v1961, %v1960
        %v2016 = vpack.c.b16 %v1963, %v1962
        %v2017 = vpack.c.b16 %v1965, %v1964
        %v2018 = vpack.c.b16 %v1967, %v1966
        %v2019 = vpack.c.b16 %v1969, %v1968
        %v2020 = vpack.c.b16 %v1971, %v1970
        %v2021 = vpack.c.b16 %v1973, %v1972
        %v2022 = vpack.c.b16 %v1975, %v1974
        %v2023 = vpack.c.b16 %v1977, %v1976
        %v2024 = vpack.c.b16 %v1979, %v1978
        %v2025 = vpack.c.b16 %v1981, %v1980
        %v2026 = vpack.c.b16 %v1983, %v1982
        %v2027 = vpack.c.b16 %v1985, %v1984
        %v2028 = vpack.c.b16 %v1987, %v1986
        %v2029 = vpack.c.b16 %v1989, %v1988
        %v2030 = vpack.c.b16 %v1991, %v1990
        %v2031 = vpack.c.b16 %v1993, %v1992
        %v2032 = vpack.c.b16 %v1995, %v1994
        %v2033 = vpack.c.b16 %v1997, %v1996
        %v2034 = vpack.c.b16 %v1999, %v1998
        %v2035 = vpack.c.b16 %v2001, %v2000
        %v2036 = vpack.c.b16 %v2003, %v2002
        %v2037 = vpack.c.b16 %v2005, %v2004
        %v2038 = vpack.c.b16 %v2007, %v2006
        %v2039 = vpack.c.b16 %v2009, %v2008
        %v2071 = vsel %vm480, %v1883, 0
        %v2074 = vsel %vm480, %v1882, 0
        %2076 = vmatpush.bf16.msra.mxu0 %v2017
        %2077 = vmatpush.bf16.msra.mxu0 %v2016
        %2078 = vmatpush.bf16.msra.mxu0 %v2015
        %2079 = vmatpush.bf16.msra.mxu0 %v2014
        %2080 = vmatpush.bf16.msra.mxu0 %v2013
        %2081 = vmatpush.bf16.msra.mxu0 %v2012
        %2082 = vmatpush.bf16.msra.mxu0 %v2011
        %2083 = vmatpush.bf16.msra.mxu0 %v2010
        %2084 = vmatmul.bf16.gmra.mxu0 %v1874
        %v2085 = vpop.f32.mrf.mxu0
        %v2086 = vadd.f32 0.0, %v2085
        %v2087 = vpop.f32.mrf.mxu0
        %v2088 = vadd.f32 0.0, %v2087
        %2089 = vmatmul.bf16.gmra.mxu0 %v1873
        %v2090 = vpop.f32.mrf.mxu0
        %v2091 = vadd.f32 0.0, %v2090
        %v2092 = vpop.f32.mrf.mxu0
        %v2093 = vadd.f32 0.0, %v2092
        %2094 = vdwg.mxu0
        %2095 = vmatpush.bf16.msra.mxu0 %v2025
        %2096 = vmatpush.bf16.msra.mxu0 %v2024
        %2097 = vmatpush.bf16.msra.mxu0 %v2023
        %2098 = vmatpush.bf16.msra.mxu0 %v2022
        %2099 = vmatpush.bf16.msra.mxu0 %v2021
        %2100 = vmatpush.bf16.msra.mxu0 %v2020
        %2101 = vmatpush.bf16.msra.mxu0 %v2019
        %2102 = vmatpush.bf16.msra.mxu0 %v2018
        %2103 = vmatmul.bf16.gmra.mxu0 %v1877
        %v2104 = vpop.f32.mrf.mxu0
        %v2105 = vadd.f32 %v2086, %v2104
        %v2106 = vpop.f32.mrf.mxu0
        %v2107 = vadd.f32 %v2088, %v2106
        %2108 = vmatmul.bf16.gmra.mxu0 %v1876
        %v2109 = vpop.f32.mrf.mxu0
        %v2110 = vadd.f32 %v2091, %v2109
        %v2111 = vpop.f32.mrf.mxu0
        %v2112 = vadd.f32 %v2093, %v2111
        %2113 = vdwg.mxu0
        %2114 = vmatpush.bf16.msra.mxu0 %v2033
        %2115 = vmatpush.bf16.msra.mxu0 %v2032
        %2116 = vmatpush.bf16.msra.mxu0 %v2031
        %2117 = vmatpush.bf16.msra.mxu0 %v2030
        %2118 = vmatpush.bf16.msra.mxu0 %v2029
        %2119 = vmatpush.bf16.msra.mxu0 %v2028
        %2120 = vmatpush.bf16.msra.mxu0 %v2027
        %2121 = vmatpush.bf16.msra.mxu0 %v2026
        %2122 = vmatmul.bf16.gmra.mxu0 %v1880
        %v2123 = vpop.f32.mrf.mxu0
        %v2124 = vadd.f32 %v2105, %v2123
        %v2125 = vpop.f32.mrf.mxu0
        %v2126 = vadd.f32 %v2107, %v2125
        %2127 = vmatmul.bf16.gmra.mxu0 %v1879
        %v2128 = vpop.f32.mrf.mxu0
        %v2129 = vadd.f32 %v2110, %v2128
        %v2130 = vpop.f32.mrf.mxu0
        %v2131 = vadd.f32 %v2112, %v2130
        %2132 = vdwg.mxu0
        %2133 = vmatpush.bf16.msra.mxu0 0
        %2134 = vmatpush.bf16.msra.mxu0 0
        %2135 = vmatpush.bf16.msra.mxu0 %v2039
        %2136 = vmatpush.bf16.msra.mxu0 %v2038
        %2137 = vmatpush.bf16.msra.mxu0 %v2037
        %2138 = vmatpush.bf16.msra.mxu0 %v2036
        %2139 = vmatpush.bf16.msra.mxu0 %v2035
        %2140 = vmatpush.bf16.msra.mxu0 %v2034
        %2141 = vmatmul.bf16.gmra.mxu0 %v2071
        %v2142 = vpop.f32.mrf.mxu0
        %v2143 = vadd.f32 %v2124, %v2142
        %v2144 = vpop.f32.mrf.mxu0
        %v2145 = vadd.f32 %v2126, %v2144
        %2146 = vmatmul.bf16.gmra.mxu0 %v2074
        %v2147 = vpop.f32.mrf.mxu0
        %v2148 = vadd.f32 %v2129, %v2147
        %v2149 = vpop.f32.mrf.mxu0
        %v2150 = vadd.f32 %v2131, %v2149
        %2151 = vdwg.mxu0
        %v2152 = vadd.f32 %v1794, %v2143
        %v2153 = vadd.f32 %v1796, %v2145
        %v2154 = vadd.f32 %v1799, %v2148
        %v2155 = vadd.f32 %v1801, %v2150
        %v2156 = vld [vmem:[%s5] sm:$0x1]
        %v2158 = vperm.slane %v2156, 0
        %v2160 = vadd.f32 %v2152, %v2158
        %v2161 = vadd.f32 %v2153, %v2158
        %v2162 = vadd.f32 %v2154, %v2158
        %v2163 = vadd.f32 %v2155, %v2158
        %v2164 = vround.ne.pseudo %v2160
        %v2165 = vround.ne.pseudo %v2161
        %v2166 = vround.ne.pseudo %v2162
        %v2167 = vround.ne.pseudo %v2163
        %v2168 = vmax.f32 %v2164, 0.0
        %v2169 = vmax.f32 %v2165, 0.0
        %v2170 = vmax.f32 %v2166, 0.0
        %v2171 = vmax.f32 %v2167, 0.0
        %v2172 = vmin.f32 %v2168, 255.0
        %v2173 = vmin.f32 %v2169, 255.0
        %v2174 = vmin.f32 %v2170, 255.0
        %v2175 = vmin.f32 %v2171, 255.0
        %v2176 = vpack.c.bf16 %v2172, %v2172
        %v2177 = vpack.c.bf16 %v2173, %v2173
        %v2178 = vpack.c.bf16 %v2174, %v2174
        %v2179 = vpack.c.bf16 %v2175, %v2175
        %vm2180 = vcmask 912384
        %2181 = vst.msk [vmem:[%s265] sm:$0xf] %vm2180, %v2176
        %2182 = vst.msk [vmem:[%s265 + $0x4] sm:$0xf] %vm2180, %v2177
        %2183 = vst.msk [vmem:[%s265 + $0x8] sm:$0xf] %vm2180, %v2178
        %vm2184 = vcmask 910336
        %2185 = vst.msk [vmem:[%s265 + $0xc] sm:$0x3] %vm2184, %v2179
        %p2186 = scmp.lt.s32.totalorder %s18, 1
        %s2187 = scalar_select %p2186, %s18, 1
        %s2188 = smul.addr %s2187, 4
        %s2189 = smul.addr %s2188, 4
        %s2190 = scalar_lea.vmem %s6, %s2189
        // Predicated region
        $region49: #{quantized_model_forward.2} parent=43 // pred_check
          %p2191 = pneg %p167
        $region50: #{quantized_model_forward.2} parent=43 // pred_check_branch
          %2193 = sbr.rel (%p2191) target = $region52
        $region51: #{quantized_model_forward.2} parent=43 // pred_region
          _
        $region52: #{quantized_model_forward.2} parent=43 // pred_fallthru
          _
      $region44: #{quantized_model_forward.2} parent=5 // pred_fallthru
        _
      %p2194 = scmp.le.s32.totalorder 2, %s13
      // Predicated region
      $region53: #{quantized_model_forward.2} parent=5 // pred_check
        %p2195 = pneg %p2194
      $region54: #{quantized_model_forward.2} parent=5 // pred_check_branch
        %2197 = sbr.rel (%p2195) target = $region56
      $region55: #{quantized_model_forward.2} parent=5 // pred_region
        %s2198 = ssub.s32 %s13, 2
        // Predicated region
        $region57: #{quantized_model_forward.2} parent=55 // pred_check
          %p2199 = pneg %p173
        $region58: #{quantized_model_forward.2} parent=55 // pred_check_branch
          %2201 = sbr.rel (%p2199) target = $region60
        $region59: #{quantized_model_forward.2} parent=55 // pred_region
          %p2202 = scmp.lt.s32.totalorder %s19, 1
          %s2203 = scalar_select %p2202, %s19, 1
          %s2204 = smul.addr %s2203, 4
          %s2205 = smul.addr %s2204, 4
          %s2206 = scalar_lea.vmem %s6, %s2205
        $region60: #{quantized_model_forward.2} parent=55 // pred_fallthru
          _
      $region56: #{quantized_model_forward.2} parent=5 // pred_fallthru
        _
    $region6: #{quantized_model_forward.2} parent=1 // loop_footer
      %s17 = sadd.s32 1, %s13
    $region7: #{quantized_model_forward.2} parent=1 // loop_footer_branch
      %12 = sbr.rel target = $region3
    $region8: #{quantized_model_forward.2} parent=1 // loop_exit
      _
    %2207 = vsyncpa [#allocation3], 1
    %s2208 = scalar_lea.sflag [#allocation3], 1
    %2209 = vsyncpa %s2208, 1

// kernel: quantized_model_forward.3
$region0: #{quantized_model_forward.3}
  #allocation0 [shape = 'u32[]', space=smem, size = 0x4, offset = 0x4, fixed_abs, tag = 'smem constant byte address 0x4 - core index']
  #allocation1 [shape = 'u32[72,128]{1,0:T(1,128)}', space=vmem, size = 0x9000, scoped, tag = 'internal scratch']
  #allocation2 [shape = 'f32[1,1]{1,0:T(1,128)S(1)}', space=vmem, size = 0x200, scoped, tag = 'scoped memory for quantized_model_forward.3']
  %s0 = inlined_call_operand.vmem [shape: f32[2], index: 0, kind: input, shape index: {}]
  %s1 = inlined_call_operand.vmem [shape: bf16[2,3136], index: 1, kind: input, shape index: {}]
  %s2 = inlined_call_operand.vmem [shape: bf16[3136,16], index: 2, kind: input, shape index: {}]
  %s3 = inlined_call_operand.vmem [shape: f32[1,16], index: 3, kind: input, shape index: {}]
  %s4 = inlined_call_operand.vmem [shape: f32[1,16], index: 4, kind: input, shape index: {}]
  %s5 = inlined_call_operand.<no memory space> [shape: f32[1,1], index: 5, kind: input, shape index: {}]
  %s6 = inlined_call_operand.vmem [shape: f32[2,1], index: 6, kind: output, shape index: {}]
  %s7 = sld [smem:[#allocation0]]
  $region68: #{quantized_model_forward.3} parent=0
    _
  %s9 = ssub.s32 1, %s7
  %s10 = scalar_select 0, %s9, %s7
  %v11 = vstv %s5
  %12 = vst [vmem:[#allocation2] sm:$0x1] %v11
  $region1: #{quantized_model_forward.3} parent=0
    #allocation3 [shape = 'u8[512]{0}', space=smem, size = 0x200, scoped, tag = 'input window, operand 0, single buffered']
    #allocation4 [shape = 's32[1]{0}', space=sflag, size = 0x4, scoped, tag = 'scoped memory for quantized_model_forward.3']
    #allocation5 [shape = 'u8[8192]{0}', space=vmem, size = 0x2000, scoped, tag = 'output window, operand 0, single buffered']
    %13 = vsyncpa [#allocation4], 0
    // Predicated region
    $region2: #{quantized_model_forward.3} parent=1 // pred_check
      _
    $region3: #{quantized_model_forward.3} parent=1 // pred_check_branch
      %15 = sbr.rel (0) target = $region5
    $region4: #{quantized_model_forward.3} parent=1 // pred_region
      %17 = vsyncadd [#allocation4], 0
      %s19 = sshll.u32 %s0, 4
      %s20 = int_to_ptr.vmem [resolvable:$true] %s19
      %22 = dma.vmem_to_smem %s20, 16, [#allocation3], [#allocation4]
    $region5: #{quantized_model_forward.3} parent=1 // pred_fallthru
      _
    // Predicated region
    $region6: #{quantized_model_forward.3} parent=1 // pred_check
      _
    $region7: #{quantized_model_forward.3} parent=1 // pred_check_branch
      %24 = sbr.rel (0) target = $region9
    $region8: #{quantized_model_forward.3} parent=1 // pred_region
      _
    $region9: #{quantized_model_forward.3} parent=1 // pred_fallthru
      _
    // Predicated region
    $region10: #{quantized_model_forward.3} parent=1 // pred_check
      _
    $region11: #{quantized_model_forward.3} parent=1 // pred_check_branch
      %26 = sbr.rel (0) target = $region13
    $region12: #{quantized_model_forward.3} parent=1 // pred_region
      _
    $region13: #{quantized_model_forward.3} parent=1 // pred_fallthru
      _
    // Predicated region
    $region14: #{quantized_model_forward.3} parent=1 // pred_check
      _
    $region15: #{quantized_model_forward.3} parent=1 // pred_check_branch
      %28 = sbr.rel (0) target = $region17
    $region16: #{quantized_model_forward.3} parent=1 // pred_region
      _
    $region17: #{quantized_model_forward.3} parent=1 // pred_fallthru
      _
    // Predicated region
    $region18: #{quantized_model_forward.3} parent=1 // pred_check
      _
    $region19: #{quantized_model_forward.3} parent=1 // pred_check_branch
      %30 = sbr.rel (0) target = $region21
    $region20: #{quantized_model_forward.3} parent=1 // pred_region
      _
    $region21: #{quantized_model_forward.3} parent=1 // pred_fallthru
      _
    // Predicated region
    $region22: #{quantized_model_forward.3} parent=1 // pred_check
      _
    $region23: #{quantized_model_forward.3} parent=1 // pred_check_branch
      %32 = sbr.rel (0) target = $region25
    $region24: #{quantized_model_forward.3} parent=1 // pred_region
      _
    $region25: #{quantized_model_forward.3} parent=1 // pred_fallthru
      _
    // Predicated region
    $region26: #{quantized_model_forward.3} parent=1 // pred_check
      _
    $region27: #{quantized_model_forward.3} parent=1 // pred_check_branch
      %34 = sbr.rel (0) target = $region29
    $region28: #{quantized_model_forward.3} parent=1 // pred_region
      %36 = dma.done [#allocation4], 16
    $region29: #{quantized_model_forward.3} parent=1 // pred_fallthru
      _
    %37 = sfence
    %s39 = sld [smem:[#allocation3]]
    %v40 = vld [vmem:[%s1] sm:$0xff]
    %v41 = vld [vmem:[%s1 + $0x8] sm:$0xff]
    %v42 = vld [vmem:[%s1 + $0x10] sm:$0xff]
    %v43 = vld [vmem:[%s1 + $0x18] sm:$0x1]
    %v44 = vld [vmem:[%s1 + $0x19] sm:$0xff]
    %v45 = vld [vmem:[%s1 + $0x21] sm:$0xff]
    %v46 = vld [vmem:[%s1 + $0x29] sm:$0xff]
    %v47 = vld [vmem:[%s1 + $0x31] sm:$0x1]
    %v48 = vld [vmem:[%s1 + $0x32] sm:$0xff]
    %v49 = vld [vmem:[%s1 + $0x3a] sm:$0xff]
    %v50 = vld [vmem:[%s1 + $0x42] sm:$0xff]
    %v51 = vld [vmem:[%s1 + $0x4a] sm:$0x1]
    %v52 = vld [vmem:[%s1 + $0x4b] sm:$0xff]
    %v53 = vld [vmem:[%s1 + $0x53] sm:$0xff]
    %v54 = vld [vmem:[%s1 + $0x5b] sm:$0xff]
    %v55 = vld [vmem:[%s1 + $0x63] sm:$0x1]
    %v56 = vld [vmem:[%s1 + $0x64] sm:$0xff]
    %v57 = vld [vmem:[%s1 + $0x6c] sm:$0xff]
    %v58 = vld [vmem:[%s1 + $0x74] sm:$0xff]
    %v59 = vld [vmem:[%s1 + $0x7c] sm:$0x1]
    %v60 = vld [vmem:[%s1 + $0x7d] sm:$0xff]
    %v61 = vld [vmem:[%s1 + $0x85] sm:$0xff]
    %v62 = vld [vmem:[%s1 + $0x8d] sm:$0xff]
    %v63 = vld [vmem:[%s1 + $0x95] sm:$0x1]
    %v64 = vld [vmem:[%s1 + $0x96] sm:$0xff]
    %v65 = vld [vmem:[%s1 + $0x9e] sm:$0xff]
    %v66 = vld [vmem:[%s1 + $0xa6] sm:$0xff]
    %v67 = vld [vmem:[%s1 + $0xae] sm:$0x1]
    %v68 = vld [vmem:[%s1 + $0xaf] sm:$0xff]
    %v69 = vld [vmem:[%s1 + $0xb7] sm:$0xff]
    %v70 = vld [vmem:[%s1 + $0xbf] sm:$0xff]
    %v71 = vld [vmem:[%s1 + $0xc7] sm:$0x1]
    %v72 = vld [vmem:[%s2] sm:$0xf]
    %v73 = vld [vmem:[%s2 + $0x4] sm:$0xf]
    %v74 = vld [vmem:[%s2 + $0x8] sm:$0xf]
    %v75 = vld [vmem:[%s2 + $0xc] sm:$0xf]
    %v76 = vld [vmem:[%s2 + $0x10] sm:$0xf]
    %v77 = vld [vmem:[%s2 + $0x14] sm:$0xf]
    %v78 = vld [vmem:[%s2 + $0x18] sm:$0xf]
    %v79 = vld [vmem:[%s2 + $0x1c] sm:$0xf]
    %v80 = vld [vmem:[%s2 + $0x20] sm:$0xf]
    %v81 = vld [vmem:[%s2 + $0x24] sm:$0xf]
    %v82 = vld [vmem:[%s2 + $0x28] sm:$0xf]
    %v83 = vld [vmem:[%s2 + $0x2c] sm:$0xf]
    %v84 = vld [vmem:[%s2 + $0x30] sm:$0xf]
    %v85 = vld [vmem:[%s2 + $0x34] sm:$0xf]
    %v86 = vld [vmem:[%s2 + $0x38] sm:$0xf]
    %v87 = vld [vmem:[%s2 + $0x3c] sm:$0xf]
    %v88 = vld [vmem:[%s2 + $0x40] sm:$0xf]
    %v89 = vld [vmem:[%s2 + $0x44] sm:$0xf]
    %v90 = vld [vmem:[%s2 + $0x48] sm:$0xf]
    %v91 = vld [vmem:[%s2 + $0x4c] sm:$0xf]
    %v92 = vld [vmem:[%s2 + $0x50] sm:$0xf]
    %v93 = vld [vmem:[%s2 + $0x54] sm:$0xf]
    %v94 = vld [vmem:[%s2 + $0x58] sm:$0xf]
    %v95 = vld [vmem:[%s2 + $0x5c] sm:$0xf]
    %v96 = vld [vmem:[%s2 + $0x60] sm:$0xf]
    %v97 = vld [vmem:[%s2 + $0x64] sm:$0xf]
    %v98 = vld [vmem:[%s2 + $0x68] sm:$0xf]
    %v99 = vld [vmem:[%s2 + $0x6c] sm:$0xf]
    %v100 = vld [vmem:[%s2 + $0x70] sm:$0xf]
    %v101 = vld [vmem:[%s2 + $0x74] sm:$0xf]
    %v102 = vld [vmem:[%s2 + $0x78] sm:$0xf]
    %v103 = vld [vmem:[%s2 + $0x7c] sm:$0xf]
    %v104 = vld [vmem:[%s2 + $0x80] sm:$0xf]
    %v105 = vld [vmem:[%s2 + $0x84] sm:$0xf]
    %v106 = vld [vmem:[%s2 + $0x88] sm:$0xf]
    %v107 = vld [vmem:[%s2 + $0x8c] sm:$0xf]
    %v108 = vld [vmem:[%s2 + $0x90] sm:$0xf]
    %v109 = vld [vmem:[%s2 + $0x94] sm:$0xf]
    %v110 = vld [vmem:[%s2 + $0x98] sm:$0xf]
    %v111 = vld [vmem:[%s2 + $0x9c] sm:$0xf]
    %v112 = vld [vmem:[%s2 + $0xa0] sm:$0xf]
    %v113 = vld [vmem:[%s2 + $0xa4] sm:$0xf]
    %v114 = vld [vmem:[%s2 + $0xa8] sm:$0xf]
    %v115 = vld [vmem:[%s2 + $0xac] sm:$0xf]
    %v116 = vld [vmem:[%s2 + $0xb0] sm:$0xf]
    %v117 = vld [vmem:[%s2 + $0xb4] sm:$0xf]
    %v118 = vld [vmem:[%s2 + $0xb8] sm:$0xf]
    %v119 = vld [vmem:[%s2 + $0xbc] sm:$0xf]
    %v120 = vld [vmem:[%s2 + $0xc0] sm:$0xf]
    %v121 = vld [vmem:[%s2 + $0xc4] sm:$0xf]
    %v122 = vld [vmem:[%s2 + $0xc8] sm:$0xf]
    %v123 = vld [vmem:[%s2 + $0xcc] sm:$0xf]
    %v124 = vld [vmem:[%s2 + $0xd0] sm:$0xf]
    %v125 = vld [vmem:[%s2 + $0xd4] sm:$0xf]
    %v126 = vld [vmem:[%s2 + $0xd8] sm:$0xf]
    %v127 = vld [vmem:[%s2 + $0xdc] sm:$0xf]
    %v128 = vld [vmem:[%s2 + $0xe0] sm:$0xf]
    %v129 = vld [vmem:[%s2 + $0xe4] sm:$0xf]
    %v130 = vld [vmem:[%s2 + $0xe8] sm:$0xf]
    %v131 = vld [vmem:[%s2 + $0xec] sm:$0xf]
    %v132 = vld [vmem:[%s2 + $0xf0] sm:$0xf]
    %v133 = vld [vmem:[%s2 + $0xf4] sm:$0xf]
    %v134 = vld [vmem:[%s2 + $0xf8] sm:$0xf]
    %v135 = vld [vmem:[%s2 + $0xfc] sm:$0xf]
    %v136 = vld [vmem:[%s2 + $0x100] sm:$0xf]
    %v137 = vld [vmem:[%s2 + $0x104] sm:$0xf]
    %v138 = vld [vmem:[%s2 + $0x108] sm:$0xf]
    %v139 = vld [vmem:[%s2 + $0x10c] sm:$0xf]
    %v140 = vld [vmem:[%s2 + $0x110] sm:$0xf]
    %v141 = vld [vmem:[%s2 + $0x114] sm:$0xf]
    %v142 = vld [vmem:[%s2 + $0x118] sm:$0xf]
    %v143 = vld [vmem:[%s2 + $0x11c] sm:$0xf]
    %v144 = vld [vmem:[%s2 + $0x120] sm:$0xf]
    %v145 = vld [vmem:[%s2 + $0x124] sm:$0xf]
    %v146 = vld [vmem:[%s2 + $0x128] sm:$0xf]
    %v147 = vld [vmem:[%s2 + $0x12c] sm:$0xf]
    %v148 = vld [vmem:[%s2 + $0x130] sm:$0xf]
    %v149 = vld [vmem:[%s2 + $0x134] sm:$0xf]
    %v150 = vld [vmem:[%s2 + $0x138] sm:$0xf]
    %v151 = vld [vmem:[%s2 + $0x13c] sm:$0xf]
    %v152 = vld [vmem:[%s2 + $0x140] sm:$0xf]
    %v153 = vld [vmem:[%s2 + $0x144] sm:$0xf]
    %v154 = vld [vmem:[%s2 + $0x148] sm:$0xf]
    %v155 = vld [vmem:[%s2 + $0x14c] sm:$0xf]
    %v156 = vld [vmem:[%s2 + $0x150] sm:$0xf]
    %v157 = vld [vmem:[%s2 + $0x154] sm:$0xf]
    %v158 = vld [vmem:[%s2 + $0x158] sm:$0xf]
    %v159 = vld [vmem:[%s2 + $0x15c] sm:$0xf]
    %v160 = vld [vmem:[%s2 + $0x160] sm:$0xf]
    %v161 = vld [vmem:[%s2 + $0x164] sm:$0xf]
    %v162 = vld [vmem:[%s2 + $0x168] sm:$0xf]
    %v163 = vld [vmem:[%s2 + $0x16c] sm:$0xf]
    %v164 = vld [vmem:[%s2 + $0x170] sm:$0xf]
    %v165 = vld [vmem:[%s2 + $0x174] sm:$0xf]
    %v166 = vld [vmem:[%s2 + $0x178] sm:$0xf]
    %v167 = vld [vmem:[%s2 + $0x17c] sm:$0xf]
    %v168 = vld [vmem:[%s2 + $0x180] sm:$0xf]
    %v169 = vld [vmem:[%s2 + $0x184] sm:$0xf]
    %v170 = vld [vmem:[%s2 + $0x188] sm:$0xf]
    %v171 = vld [vmem:[%s2 + $0x18c] sm:$0xf]
    %v172 = vld [vmem:[%s2 + $0x190] sm:$0xf]
    %v173 = vld [vmem:[%s2 + $0x194] sm:$0xf]
    %v174 = vld [vmem:[%s2 + $0x198] sm:$0xf]
    %v175 = vld [vmem:[%s2 + $0x19c] sm:$0xf]
    %v176 = vld [vmem:[%s2 + $0x1a0] sm:$0xf]
    %v177 = vld [vmem:[%s2 + $0x1a4] sm:$0xf]
    %v178 = vld [vmem:[%s2 + $0x1a8] sm:$0xf]
    %v179 = vld [vmem:[%s2 + $0x1ac] sm:$0xf]
    %v180 = vld [vmem:[%s2 + $0x1b0] sm:$0xf]
    %v181 = vld [vmem:[%s2 + $0x1b4] sm:$0xf]
    %v182 = vld [vmem:[%s2 + $0x1b8] sm:$0xf]
    %v183 = vld [vmem:[%s2 + $0x1bc] sm:$0xf]
    %v184 = vld [vmem:[%s2 + $0x1c0] sm:$0xf]
    %v185 = vld [vmem:[%s2 + $0x1c4] sm:$0xf]
    %v186 = vld [vmem:[%s2 + $0x1c8] sm:$0xf]
    %v187 = vld [vmem:[%s2 + $0x1cc] sm:$0xf]
    %v188 = vld [vmem:[%s2 + $0x1d0] sm:$0xf]
    %v189 = vld [vmem:[%s2 + $0x1d4] sm:$0xf]
    %v190 = vld [vmem:[%s2 + $0x1d8] sm:$0xf]
    %v191 = vld [vmem:[%s2 + $0x1dc] sm:$0xf]
    %v192 = vld [vmem:[%s2 + $0x1e0] sm:$0xf]
    %v193 = vld [vmem:[%s2 + $0x1e4] sm:$0xf]
    %v194 = vld [vmem:[%s2 + $0x1e8] sm:$0xf]
    %v195 = vld [vmem:[%s2 + $0x1ec] sm:$0xf]
    %v196 = vld [vmem:[%s2 + $0x1f0] sm:$0xf]
    %v197 = vld [vmem:[%s2 + $0x1f4] sm:$0xf]
    %v198 = vld [vmem:[%s2 + $0x1f8] sm:$0xf]
    %v199 = vld [vmem:[%s2 + $0x1fc] sm:$0xf]
    %v200 = vld [vmem:[%s2 + $0x200] sm:$0xf]
    %v201 = vld [vmem:[%s2 + $0x204] sm:$0xf]
    %v202 = vld [vmem:[%s2 + $0x208] sm:$0xf]
    %v203 = vld [vmem:[%s2 + $0x20c] sm:$0xf]
    %v204 = vld [vmem:[%s2 + $0x210] sm:$0xf]
    %v205 = vld [vmem:[%s2 + $0x214] sm:$0xf]
    %v206 = vld [vmem:[%s2 + $0x218] sm:$0xf]
    %v207 = vld [vmem:[%s2 + $0x21c] sm:$0xf]
    %v208 = vld [vmem:[%s2 + $0x220] sm:$0xf]
    %v209 = vld [vmem:[%s2 + $0x224] sm:$0xf]
    %v210 = vld [vmem:[%s2 + $0x228] sm:$0xf]
    %v211 = vld [vmem:[%s2 + $0x22c] sm:$0xf]
    %v212 = vld [vmem:[%s2 + $0x230] sm:$0xf]
    %v213 = vld [vmem:[%s2 + $0x234] sm:$0xf]
    %v214 = vld [vmem:[%s2 + $0x238] sm:$0xf]
    %v215 = vld [vmem:[%s2 + $0x23c] sm:$0xf]
    %v216 = vld [vmem:[%s2 + $0x240] sm:$0xf]
    %v217 = vld [vmem:[%s2 + $0x244] sm:$0xf]
    %v218 = vld [vmem:[%s2 + $0x248] sm:$0xf]
    %v219 = vld [vmem:[%s2 + $0x24c] sm:$0xf]
    %v220 = vld [vmem:[%s2 + $0x250] sm:$0xf]
    %v221 = vld [vmem:[%s2 + $0x254] sm:$0xf]
    %v222 = vld [vmem:[%s2 + $0x258] sm:$0xf]
    %v223 = vld [vmem:[%s2 + $0x25c] sm:$0xf]
    %v224 = vld [vmem:[%s2 + $0x260] sm:$0xf]
    %v225 = vld [vmem:[%s2 + $0x264] sm:$0xf]
    %v226 = vld [vmem:[%s2 + $0x268] sm:$0xf]
    %v227 = vld [vmem:[%s2 + $0x26c] sm:$0xf]
    %v228 = vld [vmem:[%s2 + $0x270] sm:$0xf]
    %v229 = vld [vmem:[%s2 + $0x274] sm:$0xf]
    %v230 = vld [vmem:[%s2 + $0x278] sm:$0xf]
    %v231 = vld [vmem:[%s2 + $0x27c] sm:$0xf]
    %v232 = vld [vmem:[%s2 + $0x280] sm:$0xf]
    %v233 = vld [vmem:[%s2 + $0x284] sm:$0xf]
    %v234 = vld [vmem:[%s2 + $0x288] sm:$0xf]
    %v235 = vld [vmem:[%s2 + $0x28c] sm:$0xf]
    %v236 = vld [vmem:[%s2 + $0x290] sm:$0xf]
    %v237 = vld [vmem:[%s2 + $0x294] sm:$0xf]
    %v238 = vld [vmem:[%s2 + $0x298] sm:$0xf]
    %v239 = vld [vmem:[%s2 + $0x29c] sm:$0xf]
    %v240 = vld [vmem:[%s2 + $0x2a0] sm:$0xf]
    %v241 = vld [vmem:[%s2 + $0x2a4] sm:$0xf]
    %v242 = vld [vmem:[%s2 + $0x2a8] sm:$0xf]
    %v243 = vld [vmem:[%s2 + $0x2ac] sm:$0xf]
    %v244 = vld [vmem:[%s2 + $0x2b0] sm:$0xf]
    %v245 = vld [vmem:[%s2 + $0x2b4] sm:$0xf]
    %v246 = vld [vmem:[%s2 + $0x2b8] sm:$0xf]
    %v247 = vld [vmem:[%s2 + $0x2bc] sm:$0xf]
    %v248 = vld [vmem:[%s2 + $0x2c0] sm:$0xf]
    %v249 = vld [vmem:[%s2 + $0x2c4] sm:$0xf]
    %v250 = vld [vmem:[%s2 + $0x2c8] sm:$0xf]
    %v251 = vld [vmem:[%s2 + $0x2cc] sm:$0xf]
    %v252 = vld [vmem:[%s2 + $0x2d0] sm:$0xf]
    %v253 = vld [vmem:[%s2 + $0x2d4] sm:$0xf]
    %v254 = vld [vmem:[%s2 + $0x2d8] sm:$0xf]
    %v255 = vld [vmem:[%s2 + $0x2dc] sm:$0xf]
    %v256 = vld [vmem:[%s2 + $0x2e0] sm:$0xf]
    %v257 = vld [vmem:[%s2 + $0x2e4] sm:$0xf]
    %v258 = vld [vmem:[%s2 + $0x2e8] sm:$0xf]
    %v259 = vld [vmem:[%s2 + $0x2ec] sm:$0xf]
    %v260 = vld [vmem:[%s2 + $0x2f0] sm:$0xf]
    %v261 = vld [vmem:[%s2 + $0x2f4] sm:$0xf]
    %v262 = vld [vmem:[%s2 + $0x2f8] sm:$0xf]
    %v263 = vld [vmem:[%s2 + $0x2fc] sm:$0xf]
    %v264 = vld [vmem:[%s2 + $0x300] sm:$0xf]
    %v265 = vld [vmem:[%s2 + $0x304] sm:$0xf]
    %v266 = vld [vmem:[%s2 + $0x308] sm:$0xf]
    %v267 = vld [vmem:[%s2 + $0x30c] sm:$0xf]
    %v268 = vld [vmem:[%s2 + $0x310] sm:$0xf]
    %v269 = vld [vmem:[%s2 + $0x314] sm:$0xf]
    %v270 = vld [vmem:[%s2 + $0x318] sm:$0xf]
    %v271 = vld [vmem:[%s2 + $0x31c] sm:$0xf]
    %v272 = vld [vmem:[%s2 + $0x320] sm:$0xf]
    %v273 = vld [vmem:[%s2 + $0x324] sm:$0xf]
    %v274 = vld [vmem:[%s2 + $0x328] sm:$0xf]
    %v275 = vld [vmem:[%s2 + $0x32c] sm:$0xf]
    %v276 = vld [vmem:[%s2 + $0x330] sm:$0xf]
    %v277 = vld [vmem:[%s2 + $0x334] sm:$0xf]
    %v278 = vld [vmem:[%s2 + $0x338] sm:$0xf]
    %v279 = vld [vmem:[%s2 + $0x33c] sm:$0xf]
    %v280 = vld [vmem:[%s2 + $0x340] sm:$0xf]
    %v281 = vld [vmem:[%s2 + $0x344] sm:$0xf]
    %v282 = vld [vmem:[%s2 + $0x348] sm:$0xf]
    %v283 = vld [vmem:[%s2 + $0x34c] sm:$0xf]
    %v284 = vld [vmem:[%s2 + $0x350] sm:$0xf]
    %v285 = vld [vmem:[%s2 + $0x354] sm:$0xf]
    %v286 = vld [vmem:[%s2 + $0x358] sm:$0xf]
    %v287 = vld [vmem:[%s2 + $0x35c] sm:$0xf]
    %v288 = vld [vmem:[%s2 + $0x360] sm:$0xf]
    %v289 = vld [vmem:[%s2 + $0x364] sm:$0xf]
    %v290 = vld [vmem:[%s2 + $0x368] sm:$0xf]
    %v291 = vld [vmem:[%s2 + $0x36c] sm:$0xf]
    %v292 = vld [vmem:[%s2 + $0x370] sm:$0xf]
    %v293 = vld [vmem:[%s2 + $0x374] sm:$0xf]
    %v294 = vld [vmem:[%s2 + $0x378] sm:$0xf]
    %v295 = vld [vmem:[%s2 + $0x37c] sm:$0xf]
    %v296 = vld [vmem:[%s2 + $0x380] sm:$0xf]
    %v297 = vld [vmem:[%s2 + $0x384] sm:$0xf]
    %v298 = vld [vmem:[%s2 + $0x388] sm:$0xf]
    %v299 = vld [vmem:[%s2 + $0x38c] sm:$0xf]
    %v300 = vld [vmem:[%s2 + $0x390] sm:$0xf]
    %v301 = vld [vmem:[%s2 + $0x394] sm:$0xf]
    %v302 = vld [vmem:[%s2 + $0x398] sm:$0xf]
    %v303 = vld [vmem:[%s2 + $0x39c] sm:$0xf]
    %v304 = vld [vmem:[%s2 + $0x3a0] sm:$0xf]
    %v305 = vld [vmem:[%s2 + $0x3a4] sm:$0xf]
    %v306 = vld [vmem:[%s2 + $0x3a8] sm:$0xf]
    %v307 = vld [vmem:[%s2 + $0x3ac] sm:$0xf]
    %v308 = vld [vmem:[%s2 + $0x3b0] sm:$0xf]
    %v309 = vld [vmem:[%s2 + $0x3b4] sm:$0xf]
    %v310 = vld [vmem:[%s2 + $0x3b8] sm:$0xf]
    %v311 = vld [vmem:[%s2 + $0x3bc] sm:$0xf]
    %v312 = vld [vmem:[%s2 + $0x3c0] sm:$0xf]
    %v313 = vld [vmem:[%s2 + $0x3c4] sm:$0xf]
    %v314 = vld [vmem:[%s2 + $0x3c8] sm:$0xf]
    %v315 = vld [vmem:[%s2 + $0x3cc] sm:$0xf]
    %v316 = vld [vmem:[%s2 + $0x3d0] sm:$0xf]
    %v317 = vld [vmem:[%s2 + $0x3d4] sm:$0xf]
    %v318 = vld [vmem:[%s2 + $0x3d8] sm:$0xf]
    %v319 = vld [vmem:[%s2 + $0x3dc] sm:$0xf]
    %v320 = vld [vmem:[%s2 + $0x3e0] sm:$0xf]
    %v321 = vld [vmem:[%s2 + $0x3e4] sm:$0xf]
    %v322 = vld [vmem:[%s2 + $0x3e8] sm:$0xf]
    %v323 = vld [vmem:[%s2 + $0x3ec] sm:$0xf]
    %v324 = vld [vmem:[%s2 + $0x3f0] sm:$0xf]
    %v325 = vld [vmem:[%s2 + $0x3f4] sm:$0xf]
    %v326 = vld [vmem:[%s2 + $0x3f8] sm:$0xf]
    %v327 = vld [vmem:[%s2 + $0x3fc] sm:$0xf]
    %v328 = vld [vmem:[%s2 + $0x400] sm:$0xf]
    %v329 = vld [vmem:[%s2 + $0x404] sm:$0xf]
    %v330 = vld [vmem:[%s2 + $0x408] sm:$0xf]
    %v331 = vld [vmem:[%s2 + $0x40c] sm:$0xf]
    %v332 = vld [vmem:[%s2 + $0x410] sm:$0xf]
    %v333 = vld [vmem:[%s2 + $0x414] sm:$0xf]
    %v334 = vld [vmem:[%s2 + $0x418] sm:$0xf]
    %v335 = vld [vmem:[%s2 + $0x41c] sm:$0xf]
    %v336 = vld [vmem:[%s2 + $0x420] sm:$0xf]
    %v337 = vld [vmem:[%s2 + $0x424] sm:$0xf]
    %v338 = vld [vmem:[%s2 + $0x428] sm:$0xf]
    %v339 = vld [vmem:[%s2 + $0x42c] sm:$0xf]
    %v340 = vld [vmem:[%s2 + $0x430] sm:$0xf]
    %v341 = vld [vmem:[%s2 + $0x434] sm:$0xf]
    %v342 = vld [vmem:[%s2 + $0x438] sm:$0xf]
    %v343 = vld [vmem:[%s2 + $0x43c] sm:$0xf]
    %v344 = vld [vmem:[%s2 + $0x440] sm:$0xf]
    %v345 = vld [vmem:[%s2 + $0x444] sm:$0xf]
    %v346 = vld [vmem:[%s2 + $0x448] sm:$0xf]
    %v347 = vld [vmem:[%s2 + $0x44c] sm:$0xf]
    %v348 = vld [vmem:[%s2 + $0x450] sm:$0xf]
    %v349 = vld [vmem:[%s2 + $0x454] sm:$0xf]
    %v350 = vld [vmem:[%s2 + $0x458] sm:$0xf]
    %v351 = vld [vmem:[%s2 + $0x45c] sm:$0xf]
    %v352 = vld [vmem:[%s2 + $0x460] sm:$0xf]
    %v353 = vld [vmem:[%s2 + $0x464] sm:$0xf]
    %v354 = vld [vmem:[%s2 + $0x468] sm:$0xf]
    %v355 = vld [vmem:[%s2 + $0x46c] sm:$0xf]
    %v356 = vld [vmem:[%s2 + $0x470] sm:$0xf]
    %v357 = vld [vmem:[%s2 + $0x474] sm:$0xf]
    %v358 = vld [vmem:[%s2 + $0x478] sm:$0xf]
    %v359 = vld [vmem:[%s2 + $0x47c] sm:$0xf]
    %v360 = vld [vmem:[%s2 + $0x480] sm:$0xf]
    %v361 = vld [vmem:[%s2 + $0x484] sm:$0xf]
    %v362 = vld [vmem:[%s2 + $0x488] sm:$0xf]
    %v363 = vld [vmem:[%s2 + $0x48c] sm:$0xf]
    %v364 = vld [vmem:[%s2 + $0x490] sm:$0xf]
    %v365 = vld [vmem:[%s2 + $0x494] sm:$0xf]
    %v366 = vld [vmem:[%s2 + $0x498] sm:$0xf]
    %v367 = vld [vmem:[%s2 + $0x49c] sm:$0xf]
    %v368 = vld [vmem:[%s2 + $0x4a0] sm:$0xf]
    %v369 = vld [vmem:[%s2 + $0x4a4] sm:$0xf]
    %v370 = vld [vmem:[%s2 + $0x4a8] sm:$0xf]
    %v371 = vld [vmem:[%s2 + $0x4ac] sm:$0xf]
    %v372 = vld [vmem:[%s2 + $0x4b0] sm:$0xf]
    %v373 = vld [vmem:[%s2 + $0x4b4] sm:$0xf]
    %v374 = vld [vmem:[%s2 + $0x4b8] sm:$0xf]
    %v375 = vld [vmem:[%s2 + $0x4bc] sm:$0xf]
    %v376 = vld [vmem:[%s2 + $0x4c0] sm:$0xf]
    %v377 = vld [vmem:[%s2 + $0x4c4] sm:$0xf]
    %v378 = vld [vmem:[%s2 + $0x4c8] sm:$0xf]
    %v379 = vld [vmem:[%s2 + $0x4cc] sm:$0xf]
    %v380 = vld [vmem:[%s2 + $0x4d0] sm:$0xf]
    %v381 = vld [vmem:[%s2 + $0x4d4] sm:$0xf]
    %v382 = vld [vmem:[%s2 + $0x4d8] sm:$0xf]
    %v383 = vld [vmem:[%s2 + $0x4dc] sm:$0xf]
    %v384 = vld [vmem:[%s2 + $0x4e0] sm:$0xf]
    %v385 = vld [vmem:[%s2 + $0x4e4] sm:$0xf]
    %v386 = vld [vmem:[%s2 + $0x4e8] sm:$0xf]
    %v387 = vld [vmem:[%s2 + $0x4ec] sm:$0xf]
    %v388 = vld [vmem:[%s2 + $0x4f0] sm:$0xf]
    %v389 = vld [vmem:[%s2 + $0x4f4] sm:$0xf]
    %v390 = vld [vmem:[%s2 + $0x4f8] sm:$0xf]
    %v391 = vld [vmem:[%s2 + $0x4fc] sm:$0xf]
    %v392 = vld [vmem:[%s2 + $0x500] sm:$0xf]
    %v393 = vld [vmem:[%s2 + $0x504] sm:$0xf]
    %v394 = vld [vmem:[%s2 + $0x508] sm:$0xf]
    %v395 = vld [vmem:[%s2 + $0x50c] sm:$0xf]
    %v396 = vld [vmem:[%s2 + $0x510] sm:$0xf]
    %v397 = vld [vmem:[%s2 + $0x514] sm:$0xf]
    %v398 = vld [vmem:[%s2 + $0x518] sm:$0xf]
    %v399 = vld [vmem:[%s2 + $0x51c] sm:$0xf]
    %v400 = vld [vmem:[%s2 + $0x520] sm:$0xf]
    %v401 = vld [vmem:[%s2 + $0x524] sm:$0xf]
    %v402 = vld [vmem:[%s2 + $0x528] sm:$0xf]
    %v403 = vld [vmem:[%s2 + $0x52c] sm:$0xf]
    %v404 = vld [vmem:[%s2 + $0x530] sm:$0xf]
    %v405 = vld [vmem:[%s2 + $0x534] sm:$0xf]
    %v406 = vld [vmem:[%s2 + $0x538] sm:$0xf]
    %v407 = vld [vmem:[%s2 + $0x53c] sm:$0xf]
    %v408 = vld [vmem:[%s2 + $0x540] sm:$0xf]
    %v409 = vld [vmem:[%s2 + $0x544] sm:$0xf]
    %v410 = vld [vmem:[%s2 + $0x548] sm:$0xf]
    %v411 = vld [vmem:[%s2 + $0x54c] sm:$0xf]
    %v412 = vld [vmem:[%s2 + $0x550] sm:$0xf]
    %v413 = vld [vmem:[%s2 + $0x554] sm:$0xf]
    %v414 = vld [vmem:[%s2 + $0x558] sm:$0xf]
    %v415 = vld [vmem:[%s2 + $0x55c] sm:$0xf]
    %v416 = vld [vmem:[%s2 + $0x560] sm:$0xf]
    %v417 = vld [vmem:[%s2 + $0x564] sm:$0xf]
    %v418 = vld [vmem:[%s2 + $0x568] sm:$0xf]
    %v419 = vld [vmem:[%s2 + $0x56c] sm:$0xf]
    %v420 = vld [vmem:[%s2 + $0x570] sm:$0xf]
    %v421 = vld [vmem:[%s2 + $0x574] sm:$0xf]
    %v422 = vld [vmem:[%s2 + $0x578] sm:$0xf]
    %v423 = vld [vmem:[%s2 + $0x57c] sm:$0xf]
    %v424 = vld [vmem:[%s2 + $0x580] sm:$0xf]
    %v425 = vld [vmem:[%s2 + $0x584] sm:$0xf]
    %v426 = vld [vmem:[%s2 + $0x588] sm:$0xf]
    %v427 = vld [vmem:[%s2 + $0x58c] sm:$0xf]
    %v428 = vld [vmem:[%s2 + $0x590] sm:$0xf]
    %v429 = vld [vmem:[%s2 + $0x594] sm:$0xf]
    %v430 = vld [vmem:[%s2 + $0x598] sm:$0xf]
    %v431 = vld [vmem:[%s2 + $0x59c] sm:$0xf]
    %v432 = vld [vmem:[%s2 + $0x5a0] sm:$0xf]
    %v433 = vld [vmem:[%s2 + $0x5a4] sm:$0xf]
    %v434 = vld [vmem:[%s2 + $0x5a8] sm:$0xf]
    %v435 = vld [vmem:[%s2 + $0x5ac] sm:$0xf]
    %v436 = vld [vmem:[%s2 + $0x5b0] sm:$0xf]
    %v437 = vld [vmem:[%s2 + $0x5b4] sm:$0xf]
    %v438 = vld [vmem:[%s2 + $0x5b8] sm:$0xf]
    %v439 = vld [vmem:[%s2 + $0x5bc] sm:$0xf]
    %v440 = vld [vmem:[%s2 + $0x5c0] sm:$0xf]
    %v441 = vld [vmem:[%s2 + $0x5c4] sm:$0xf]
    %v442 = vld [vmem:[%s2 + $0x5c8] sm:$0xf]
    %v443 = vld [vmem:[%s2 + $0x5cc] sm:$0xf]
    %v444 = vld [vmem:[%s2 + $0x5d0] sm:$0xf]
    %v445 = vld [vmem:[%s2 + $0x5d4] sm:$0xf]
    %v446 = vld [vmem:[%s2 + $0x5d8] sm:$0xf]
    %v447 = vld [vmem:[%s2 + $0x5dc] sm:$0xf]
    %v448 = vld [vmem:[%s2 + $0x5e0] sm:$0xf]
    %v449 = vld [vmem:[%s2 + $0x5e4] sm:$0xf]
    %v450 = vld [vmem:[%s2 + $0x5e8] sm:$0xf]
    %v451 = vld [vmem:[%s2 + $0x5ec] sm:$0xf]
    %v452 = vld [vmem:[%s2 + $0x5f0] sm:$0xf]
    %v453 = vld [vmem:[%s2 + $0x5f4] sm:$0xf]
    %v454 = vld [vmem:[%s2 + $0x5f8] sm:$0xf]
    %v455 = vld [vmem:[%s2 + $0x5fc] sm:$0xf]
    %v456 = vld [vmem:[%s2 + $0x600] sm:$0xf]
    %v457 = vld [vmem:[%s2 + $0x604] sm:$0xf]
    %v458 = vld [vmem:[%s2 + $0x608] sm:$0xf]
    %v459 = vld [vmem:[%s2 + $0x60c] sm:$0xf]
    %v460 = vld [vmem:[%s2 + $0x610] sm:$0xf]
    %v461 = vld [vmem:[%s2 + $0x614] sm:$0xf]
    %v462 = vld [vmem:[%s2 + $0x618] sm:$0xf]
    %v463 = vld [vmem:[%s2 + $0x61c] sm:$0xf]
    %v464 = vld [vmem:[%s3] sm:$0x1]
    %v466 = vperm.slane %v464, 0
    %469 = vst [vmem:[#allocation1] ss:$9 sm:$0xff] %v40
    %s471 = scalar_lea.vmem [#allocation1], 1
    %472 = vst [vmem:[%s471] ss:$9 sm:$0xff] %v44
    %s474 = scalar_lea.vmem [#allocation1], 2
    %475 = vst [vmem:[%s474] ss:$9 sm:$0xff] %v48
    %s477 = scalar_lea.vmem [#allocation1], 3
    %478 = vst [vmem:[%s477] ss:$9 sm:$0xff] %v52
    %s480 = scalar_lea.vmem [#allocation1], 4
    %481 = vst [vmem:[%s480] ss:$9 sm:$0xff] %v56
    %s483 = scalar_lea.vmem [#allocation1], 5
    %484 = vst [vmem:[%s483] ss:$9 sm:$0xff] %v60
    %s486 = scalar_lea.vmem [#allocation1], 6
    %487 = vst [vmem:[%s486] ss:$9 sm:$0xff] %v64
    %s489 = scalar_lea.vmem [#allocation1], 7
    %490 = vst [vmem:[%s489] ss:$9 sm:$0xff] %v68
    %v491 = vld [vmem:[#allocation1] sm:$0xff]
    %v492 = vld [vmem:[#allocation1 + $0x9] sm:$0xff]
    %v493 = vld [vmem:[#allocation1 + $0x12] sm:$0xff]
    %v494 = vld [vmem:[#allocation1 + $0x1b] sm:$0xff]
    %v495 = vld [vmem:[#allocation1 + $0x24] sm:$0xff]
    %v496 = vld [vmem:[#allocation1 + $0x2d] sm:$0xff]
    %v497 = vld [vmem:[#allocation1 + $0x36] sm:$0xff]
    %v498 = vld [vmem:[#allocation1 + $0x3f] sm:$0xff]
    %500 = vst [vmem:[#allocation1] ss:$9 sm:$0xff] %v41
    %502 = vst [vmem:[%s471] ss:$9 sm:$0xff] %v45
    %504 = vst [vmem:[%s474] ss:$9 sm:$0xff] %v49
    %506 = vst [vmem:[%s477] ss:$9 sm:$0xff] %v53
    %508 = vst [vmem:[%s480] ss:$9 sm:$0xff] %v57
    %510 = vst [vmem:[%s483] ss:$9 sm:$0xff] %v61
    %512 = vst [vmem:[%s486] ss:$9 sm:$0xff] %v65
    %514 = vst [vmem:[%s489] ss:$9 sm:$0xff] %v69
    %v515 = vld [vmem:[#allocation1] sm:$0xff]
    %v516 = vld [vmem:[#allocation1 + $0x9] sm:$0xff]
    %v517 = vld [vmem:[#allocation1 + $0x12] sm:$0xff]
    %v518 = vld [vmem:[#allocation1 + $0x1b] sm:$0xff]
    %v519 = vld [vmem:[#allocation1 + $0x24] sm:$0xff]
    %v520 = vld [vmem:[#allocation1 + $0x2d] sm:$0xff]
    %v521 = vld [vmem:[#allocation1 + $0x36] sm:$0xff]
    %v522 = vld [vmem:[#allocation1 + $0x3f] sm:$0xff]
    %524 = vst [vmem:[#allocation1] ss:$9 sm:$0xff] %v42
    %526 = vst [vmem:[%s471] ss:$9 sm:$0xff] %v46
    %528 = vst [vmem:[%s474] ss:$9 sm:$0xff] %v50
    %530 = vst [vmem:[%s477] ss:$9 sm:$0xff] %v54
    %532 = vst [vmem:[%s480] ss:$9 sm:$0xff] %v58
    %534 = vst [vmem:[%s483] ss:$9 sm:$0xff] %v62
    %536 = vst [vmem:[%s486] ss:$9 sm:$0xff] %v66
    %538 = vst [vmem:[%s489] ss:$9 sm:$0xff] %v70
    %v539 = vld [vmem:[#allocation1] sm:$0xff]
    %v540 = vld [vmem:[#allocation1 + $0x9] sm:$0xff]
    %v541 = vld [vmem:[#allocation1 + $0x12] sm:$0xff]
    %v542 = vld [vmem:[#allocation1 + $0x1b] sm:$0xff]
    %v543 = vld [vmem:[#allocation1 + $0x24] sm:$0xff]
    %v544 = vld [vmem:[#allocation1 + $0x2d] sm:$0xff]
    %v545 = vld [vmem:[#allocation1 + $0x36] sm:$0xff]
    %v546 = vld [vmem:[#allocation1 + $0x3f] sm:$0xff]
    %548 = vst [vmem:[#allocation1] ss:$9 sm:$0xff] %v43
    %550 = vst [vmem:[%s471] ss:$9 sm:$0xff] %v47
    %552 = vst [vmem:[%s474] ss:$9 sm:$0xff] %v51
    %554 = vst [vmem:[%s477] ss:$9 sm:$0xff] %v55
    %556 = vst [vmem:[%s480] ss:$9 sm:$0xff] %v59
    %558 = vst [vmem:[%s483] ss:$9 sm:$0xff] %v63
    %560 = vst [vmem:[%s486] ss:$9 sm:$0xff] %v67
    %562 = vst [vmem:[%s489] ss:$9 sm:$0xff] %v71
    %v563 = vld [vmem:[#allocation1] sm:$0xff]
    %v980 = vunpack.c.l.b16 %v72
    %v981 = vunpack.c.l.b16 %v73
    %v982 = vunpack.c.l.b16 %v74
    %v983 = vunpack.c.l.b16 %v75
    %v984 = vunpack.c.l.b16 %v76
    %v985 = vunpack.c.l.b16 %v77
    %v986 = vunpack.c.l.b16 %v78
    %v987 = vunpack.c.l.b16 %v79
    %v988 = vunpack.c.l.b16 %v80
    %v989 = vunpack.c.l.b16 %v81
    %v990 = vunpack.c.l.b16 %v82
    %v991 = vunpack.c.l.b16 %v83
    %v992 = vunpack.c.l.b16 %v84
    %v993 = vunpack.c.l.b16 %v85
    %v994 = vunpack.c.l.b16 %v86
    %v995 = vunpack.c.l.b16 %v87
    %v996 = vunpack.c.l.b16 %v88
    %v997 = vunpack.c.l.b16 %v89
    %v998 = vunpack.c.l.b16 %v90
    %v999 = vunpack.c.l.b16 %v91
    %v1000 = vunpack.c.l.b16 %v92
    %v1001 = vunpack.c.l.b16 %v93
    %v1002 = vunpack.c.l.b16 %v94
    %v1003 = vunpack.c.l.b16 %v95
    %v1004 = vunpack.c.l.b16 %v96
    %v1005 = vunpack.c.l.b16 %v97
    %v1006 = vunpack.c.l.b16 %v98
    %v1007 = vunpack.c.l.b16 %v99
    %v1008 = vunpack.c.l.b16 %v100
    %v1009 = vunpack.c.l.b16 %v101
    %v1010 = vunpack.c.l.b16 %v102
    %v1011 = vunpack.c.l.b16 %v103
    %v1012 = vunpack.c.l.b16 %v104
    %v1013 = vunpack.c.l.b16 %v105
    %v1014 = vunpack.c.l.b16 %v106
    %v1015 = vunpack.c.l.b16 %v107
    %v1016 = vunpack.c.l.b16 %v108
    %v1017 = vunpack.c.l.b16 %v109
    %v1018 = vunpack.c.l.b16 %v110
    %v1019 = vunpack.c.l.b16 %v111
    %v1020 = vunpack.c.l.b16 %v112
    %v1021 = vunpack.c.l.b16 %v113
    %v1022 = vunpack.c.l.b16 %v114
    %v1023 = vunpack.c.l.b16 %v115
    %v1024 = vunpack.c.l.b16 %v116
    %v1025 = vunpack.c.l.b16 %v117
    %v1026 = vunpack.c.l.b16 %v118
    %v1027 = vunpack.c.l.b16 %v119
    %v1028 = vunpack.c.l.b16 %v120
    %v1029 = vunpack.c.l.b16 %v121
    %v1030 = vunpack.c.l.b16 %v122
    %v1031 = vunpack.c.l.b16 %v123
    %v1032 = vunpack.c.l.b16 %v124
    %v1033 = vunpack.c.l.b16 %v125
    %v1034 = vunpack.c.l.b16 %v126
    %v1035 = vunpack.c.l.b16 %v127
    %v1036 = vunpack.c.l.b16 %v128
    %v1037 = vunpack.c.l.b16 %v129
    %v1038 = vunpack.c.l.b16 %v130
    %v1039 = vunpack.c.l.b16 %v131
    %v1040 = vunpack.c.l.b16 %v132
    %v1041 = vunpack.c.l.b16 %v133
    %v1042 = vunpack.c.l.b16 %v134
    %v1043 = vunpack.c.l.b16 %v135
    %v1044 = vunpack.c.l.b16 %v136
    %v1045 = vunpack.c.l.b16 %v137
    %v1046 = vunpack.c.l.b16 %v138
    %v1047 = vunpack.c.l.b16 %v139
    %v1048 = vunpack.c.l.b16 %v140
    %v1049 = vunpack.c.l.b16 %v141
    %v1050 = vunpack.c.l.b16 %v142
    %v1051 = vunpack.c.l.b16 %v143
    %v1052 = vunpack.c.l.b16 %v144
    %v1053 = vunpack.c.l.b16 %v145
    %v1054 = vunpack.c.l.b16 %v146
    %v1055 = vunpack.c.l.b16 %v147
    %v1056 = vunpack.c.l.b16 %v148
    %v1057 = vunpack.c.l.b16 %v149
    %v1058 = vunpack.c.l.b16 %v150
    %v1059 = vunpack.c.l.b16 %v151
    %v1060 = vunpack.c.l.b16 %v152
    %v1061 = vunpack.c.l.b16 %v153
    %v1062 = vunpack.c.l.b16 %v154
    %v1063 = vunpack.c.l.b16 %v155
    %v1064 = vunpack.c.l.b16 %v156
    %v1065 = vunpack.c.l.b16 %v157
    %v1066 = vunpack.c.l.b16 %v158
    %v1067 = vunpack.c.l.b16 %v159
    %v1068 = vunpack.c.l.b16 %v160
    %v1069 = vunpack.c.l.b16 %v161
    %v1070 = vunpack.c.l.b16 %v162
    %v1071 = vunpack.c.l.b16 %v163
    %v1072 = vunpack.c.l.b16 %v164
    %v1073 = vunpack.c.l.b16 %v165
    %v1074 = vunpack.c.l.b16 %v166
    %v1075 = vunpack.c.l.b16 %v167
    %v1076 = vunpack.c.l.b16 %v168
    %v1077 = vunpack.c.l.b16 %v169
    %v1078 = vunpack.c.l.b16 %v170
    %v1079 = vunpack.c.l.b16 %v171
    %v1080 = vunpack.c.l.b16 %v172
    %v1081 = vunpack.c.l.b16 %v173
    %v1082 = vunpack.c.l.b16 %v174
    %v1083 = vunpack.c.l.b16 %v175
    %v1084 = vunpack.c.l.b16 %v176
    %v1085 = vunpack.c.l.b16 %v177
    %v1086 = vunpack.c.l.b16 %v178
    %v1087 = vunpack.c.l.b16 %v179
    %v1088 = vunpack.c.l.b16 %v180
    %v1089 = vunpack.c.l.b16 %v181
    %v1090 = vunpack.c.l.b16 %v182
    %v1091 = vunpack.c.l.b16 %v183
    %v1092 = vunpack.c.l.b16 %v184
    %v1093 = vunpack.c.l.b16 %v185
    %v1094 = vunpack.c.l.b16 %v186
    %v1095 = vunpack.c.l.b16 %v187
    %v1096 = vunpack.c.l.b16 %v188
    %v1097 = vunpack.c.l.b16 %v189
    %v1098 = vunpack.c.l.b16 %v190
    %v1099 = vunpack.c.l.b16 %v191
    %v1100 = vunpack.c.l.b16 %v192
    %v1101 = vunpack.c.l.b16 %v193
    %v1102 = vunpack.c.l.b16 %v194
    %v1103 = vunpack.c.l.b16 %v195
    %v1104 = vunpack.c.l.b16 %v196
    %v1105 = vunpack.c.l.b16 %v197
    %v1106 = vunpack.c.l.b16 %v198
    %v1107 = vunpack.c.l.b16 %v199
    %v1108 = vunpack.c.l.b16 %v200
    %v1109 = vunpack.c.l.b16 %v201
    %v1110 = vunpack.c.l.b16 %v202
    %v1111 = vunpack.c.l.b16 %v203
    %v1112 = vunpack.c.l.b16 %v204
    %v1113 = vunpack.c.l.b16 %v205
    %v1114 = vunpack.c.l.b16 %v206
    %v1115 = vunpack.c.l.b16 %v207
    %v1116 = vunpack.c.l.b16 %v208
    %v1117 = vunpack.c.l.b16 %v209
    %v1118 = vunpack.c.l.b16 %v210
    %v1119 = vunpack.c.l.b16 %v211
    %v1120 = vunpack.c.l.b16 %v212
    %v1121 = vunpack.c.l.b16 %v213
    %v1122 = vunpack.c.l.b16 %v214
    %v1123 = vunpack.c.l.b16 %v215
    %v1124 = vunpack.c.l.b16 %v216
    %v1125 = vunpack.c.l.b16 %v217
    %v1126 = vunpack.c.l.b16 %v218
    %v1127 = vunpack.c.l.b16 %v219
    %v1128 = vunpack.c.l.b16 %v220
    %v1129 = vunpack.c.l.b16 %v221
    %v1130 = vunpack.c.l.b16 %v222
    %v1131 = vunpack.c.l.b16 %v223
    %v1132 = vunpack.c.l.b16 %v224
    %v1133 = vunpack.c.l.b16 %v225
    %v1134 = vunpack.c.l.b16 %v226
    %v1135 = vunpack.c.l.b16 %v227
    %v1136 = vunpack.c.l.b16 %v228
    %v1137 = vunpack.c.l.b16 %v229
    %v1138 = vunpack.c.l.b16 %v230
    %v1139 = vunpack.c.l.b16 %v231
    %v1140 = vunpack.c.l.b16 %v232
    %v1141 = vunpack.c.l.b16 %v233
    %v1142 = vunpack.c.l.b16 %v234
    %v1143 = vunpack.c.l.b16 %v235
    %v1144 = vunpack.c.l.b16 %v236
    %v1145 = vunpack.c.l.b16 %v237
    %v1146 = vunpack.c.l.b16 %v238
    %v1147 = vunpack.c.l.b16 %v239
    %v1148 = vunpack.c.l.b16 %v240
    %v1149 = vunpack.c.l.b16 %v241
    %v1150 = vunpack.c.l.b16 %v242
    %v1151 = vunpack.c.l.b16 %v243
    %v1152 = vunpack.c.l.b16 %v244
    %v1153 = vunpack.c.l.b16 %v245
    %v1154 = vunpack.c.l.b16 %v246
    %v1155 = vunpack.c.l.b16 %v247
    %v1156 = vunpack.c.l.b16 %v248
    %v1157 = vunpack.c.l.b16 %v249
    %v1158 = vunpack.c.l.b16 %v250
    %v1159 = vunpack.c.l.b16 %v251
    %v1160 = vunpack.c.l.b16 %v252
    %v1161 = vunpack.c.l.b16 %v253
    %v1162 = vunpack.c.l.b16 %v254
    %v1163 = vunpack.c.l.b16 %v255
    %v1164 = vunpack.c.l.b16 %v256
    %v1165 = vunpack.c.l.b16 %v257
    %v1166 = vunpack.c.l.b16 %v258
    %v1167 = vunpack.c.l.b16 %v259
    %v1168 = vunpack.c.l.b16 %v260
    %v1169 = vunpack.c.l.b16 %v261
    %v1170 = vunpack.c.l.b16 %v262
    %v1171 = vunpack.c.l.b16 %v263
    %v1172 = vunpack.c.l.b16 %v264
    %v1173 = vunpack.c.l.b16 %v265
    %v1174 = vunpack.c.l.b16 %v266
    %v1175 = vunpack.c.l.b16 %v267
    %v1176 = vunpack.c.l.b16 %v268
    %v1177 = vunpack.c.l.b16 %v269
    %v1178 = vunpack.c.l.b16 %v270
    %v1179 = vunpack.c.l.b16 %v271
    %v1180 = vunpack.c.l.b16 %v272
    %v1181 = vunpack.c.l.b16 %v273
    %v1182 = vunpack.c.l.b16 %v274
    %v1183 = vunpack.c.l.b16 %v275
    %v1184 = vunpack.c.l.b16 %v276
    %v1185 = vunpack.c.l.b16 %v277
    %v1186 = vunpack.c.l.b16 %v278
    %v1187 = vunpack.c.l.b16 %v279
    %v1188 = vunpack.c.l.b16 %v280
    %v1189 = vunpack.c.l.b16 %v281
    %v1190 = vunpack.c.l.b16 %v282
    %v1191 = vunpack.c.l.b16 %v283
    %v1192 = vunpack.c.l.b16 %v284
    %v1193 = vunpack.c.l.b16 %v285
    %v1194 = vunpack.c.l.b16 %v286
    %v1195 = vunpack.c.l.b16 %v287
    %v1196 = vunpack.c.l.b16 %v288
    %v1197 = vunpack.c.l.b16 %v289
    %v1198 = vunpack.c.l.b16 %v290
    %v1199 = vunpack.c.l.b16 %v291
    %v1200 = vunpack.c.l.b16 %v292
    %v1201 = vunpack.c.l.b16 %v293
    %v1202 = vunpack.c.l.b16 %v294
    %v1203 = vunpack.c.l.b16 %v295
    %v1204 = vunpack.c.l.b16 %v296
    %v1205 = vunpack.c.l.b16 %v297
    %v1206 = vunpack.c.l.b16 %v298
    %v1207 = vunpack.c.l.b16 %v299
    %v1208 = vunpack.c.l.b16 %v300
    %v1209 = vunpack.c.l.b16 %v301
    %v1210 = vunpack.c.l.b16 %v302
    %v1211 = vunpack.c.l.b16 %v303
    %v1212 = vunpack.c.l.b16 %v304
    %v1213 = vunpack.c.l.b16 %v305
    %v1214 = vunpack.c.l.b16 %v306
    %v1215 = vunpack.c.l.b16 %v307
    %v1216 = vunpack.c.l.b16 %v308
    %v1217 = vunpack.c.l.b16 %v309
    %v1218 = vunpack.c.l.b16 %v310
    %v1219 = vunpack.c.l.b16 %v311
    %v1220 = vunpack.c.l.b16 %v312
    %v1221 = vunpack.c.l.b16 %v313
    %v1222 = vunpack.c.l.b16 %v314
    %v1223 = vunpack.c.l.b16 %v315
    %v1224 = vunpack.c.l.b16 %v316
    %v1225 = vunpack.c.l.b16 %v317
    %v1226 = vunpack.c.l.b16 %v318
    %v1227 = vunpack.c.l.b16 %v319
    %v1228 = vunpack.c.l.b16 %v320
    %v1229 = vunpack.c.l.b16 %v321
    %v1230 = vunpack.c.l.b16 %v322
    %v1231 = vunpack.c.l.b16 %v323
    %v1232 = vunpack.c.l.b16 %v324
    %v1233 = vunpack.c.l.b16 %v325
    %v1234 = vunpack.c.l.b16 %v326
    %v1235 = vunpack.c.l.b16 %v327
    %v1236 = vunpack.c.l.b16 %v328
    %v1237 = vunpack.c.l.b16 %v329
    %v1238 = vunpack.c.l.b16 %v330
    %v1239 = vunpack.c.l.b16 %v331
    %v1240 = vunpack.c.l.b16 %v332
    %v1241 = vunpack.c.l.b16 %v333
    %v1242 = vunpack.c.l.b16 %v334
    %v1243 = vunpack.c.l.b16 %v335
    %v1244 = vunpack.c.l.b16 %v336
    %v1245 = vunpack.c.l.b16 %v337
    %v1246 = vunpack.c.l.b16 %v338
    %v1247 = vunpack.c.l.b16 %v339
    %v1248 = vunpack.c.l.b16 %v340
    %v1249 = vunpack.c.l.b16 %v341
    %v1250 = vunpack.c.l.b16 %v342
    %v1251 = vunpack.c.l.b16 %v343
    %v1252 = vunpack.c.l.b16 %v344
    %v1253 = vunpack.c.l.b16 %v345
    %v1254 = vunpack.c.l.b16 %v346
    %v1255 = vunpack.c.l.b16 %v347
    %v1256 = vunpack.c.l.b16 %v348
    %v1257 = vunpack.c.l.b16 %v349
    %v1258 = vunpack.c.l.b16 %v350
    %v1259 = vunpack.c.l.b16 %v351
    %v1260 = vunpack.c.l.b16 %v352
    %v1261 = vunpack.c.l.b16 %v353
    %v1262 = vunpack.c.l.b16 %v354
    %v1263 = vunpack.c.l.b16 %v355
    %v1264 = vunpack.c.l.b16 %v356
    %v1265 = vunpack.c.l.b16 %v357
    %v1266 = vunpack.c.l.b16 %v358
    %v1267 = vunpack.c.l.b16 %v359
    %v1268 = vunpack.c.l.b16 %v360
    %v1269 = vunpack.c.l.b16 %v361
    %v1270 = vunpack.c.l.b16 %v362
    %v1271 = vunpack.c.l.b16 %v363
    %v1272 = vunpack.c.l.b16 %v364
    %v1273 = vunpack.c.l.b16 %v365
    %v1274 = vunpack.c.l.b16 %v366
    %v1275 = vunpack.c.l.b16 %v367
    %v1276 = vunpack.c.l.b16 %v368
    %v1277 = vunpack.c.l.b16 %v369
    %v1278 = vunpack.c.l.b16 %v370
    %v1279 = vunpack.c.l.b16 %v371
    %v1280 = vunpack.c.l.b16 %v372
    %v1281 = vunpack.c.l.b16 %v373
    %v1282 = vunpack.c.l.b16 %v374
    %v1283 = vunpack.c.l.b16 %v375
    %v1284 = vunpack.c.l.b16 %v376
    %v1285 = vunpack.c.l.b16 %v377
    %v1286 = vunpack.c.l.b16 %v378
    %v1287 = vunpack.c.l.b16 %v379
    %v1288 = vunpack.c.l.b16 %v380
    %v1289 = vunpack.c.l.b16 %v381
    %v1290 = vunpack.c.l.b16 %v382
    %v1291 = vunpack.c.l.b16 %v383
    %v1292 = vunpack.c.l.b16 %v384
    %v1293 = vunpack.c.l.b16 %v385
    %v1294 = vunpack.c.l.b16 %v386
    %v1295 = vunpack.c.l.b16 %v387
    %v1296 = vunpack.c.l.b16 %v388
    %v1297 = vunpack.c.l.b16 %v389
    %v1298 = vunpack.c.l.b16 %v390
    %v1299 = vunpack.c.l.b16 %v391
    %v1300 = vunpack.c.l.b16 %v392
    %v1301 = vunpack.c.l.b16 %v393
    %v1302 = vunpack.c.l.b16 %v394
    %v1303 = vunpack.c.l.b16 %v395
    %v1304 = vunpack.c.l.b16 %v396
    %v1305 = vunpack.c.l.b16 %v397
    %v1306 = vunpack.c.l.b16 %v398
    %v1307 = vunpack.c.l.b16 %v399
    %v1308 = vunpack.c.l.b16 %v400
    %v1309 = vunpack.c.l.b16 %v401
    %v1310 = vunpack.c.l.b16 %v402
    %v1311 = vunpack.c.l.b16 %v403
    %v1312 = vunpack.c.l.b16 %v404
    %v1313 = vunpack.c.l.b16 %v405
    %v1314 = vunpack.c.l.b16 %v406
    %v1315 = vunpack.c.l.b16 %v407
    %v1316 = vunpack.c.l.b16 %v408
    %v1317 = vunpack.c.l.b16 %v409
    %v1318 = vunpack.c.l.b16 %v410
    %v1319 = vunpack.c.l.b16 %v411
    %v1320 = vunpack.c.l.b16 %v412
    %v1321 = vunpack.c.l.b16 %v413
    %v1322 = vunpack.c.l.b16 %v414
    %v1323 = vunpack.c.l.b16 %v415
    %v1324 = vunpack.c.l.b16 %v416
    %v1325 = vunpack.c.l.b16 %v417
    %v1326 = vunpack.c.l.b16 %v418
    %v1327 = vunpack.c.l.b16 %v419
    %v1328 = vunpack.c.l.b16 %v420
    %v1329 = vunpack.c.l.b16 %v421
    %v1330 = vunpack.c.l.b16 %v422
    %v1331 = vunpack.c.l.b16 %v423
    %v1332 = vunpack.c.l.b16 %v424
    %v1333 = vunpack.c.l.b16 %v425
    %v1334 = vunpack.c.l.b16 %v426
    %v1335 = vunpack.c.l.b16 %v427
    %v1336 = vunpack.c.l.b16 %v428
    %v1337 = vunpack.c.l.b16 %v429
    %v1338 = vunpack.c.l.b16 %v430
    %v1339 = vunpack.c.l.b16 %v431
    %v1340 = vunpack.c.l.b16 %v432
    %v1341 = vunpack.c.l.b16 %v433
    %v1342 = vunpack.c.l.b16 %v434
    %v1343 = vunpack.c.l.b16 %v435
    %v1344 = vunpack.c.l.b16 %v436
    %v1345 = vunpack.c.l.b16 %v437
    %v1346 = vunpack.c.l.b16 %v438
    %v1347 = vunpack.c.l.b16 %v439
    %v1348 = vunpack.c.l.b16 %v440
    %v1349 = vunpack.c.l.b16 %v441
    %v1350 = vunpack.c.l.b16 %v442
    %v1351 = vunpack.c.l.b16 %v443
    %v1352 = vunpack.c.l.b16 %v444
    %v1353 = vunpack.c.l.b16 %v445
    %v1354 = vunpack.c.l.b16 %v446
    %v1355 = vunpack.c.l.b16 %v447
    %v1356 = vunpack.c.l.b16 %v448
    %v1357 = vunpack.c.l.b16 %v449
    %v1358 = vunpack.c.l.b16 %v450
    %v1359 = vunpack.c.l.b16 %v451
    %v1360 = vunpack.c.l.b16 %v452
    %v1361 = vunpack.c.l.b16 %v453
    %v1362 = vunpack.c.l.b16 %v454
    %v1363 = vunpack.c.l.b16 %v455
    %v1364 = vunpack.c.l.b16 %v456
    %v1365 = vunpack.c.l.b16 %v457
    %v1366 = vunpack.c.l.b16 %v458
    %v1367 = vunpack.c.l.b16 %v459
    %v1368 = vunpack.c.l.b16 %v460
    %v1369 = vunpack.c.l.b16 %v461
    %v1370 = vunpack.c.l.b16 %v462
    %v1371 = vunpack.c.l.b16 %v463
    %v1372 = vpack.c.b16 %v981, %v980
    %v1373 = vpack.c.b16 %v983, %v982
    %v1374 = vpack.c.b16 %v985, %v984
    %v1375 = vpack.c.b16 %v987, %v986
    %v1376 = vpack.c.b16 %v989, %v988
    %v1377 = vpack.c.b16 %v991, %v990
    %v1378 = vpack.c.b16 %v993, %v992
    %v1379 = vpack.c.b16 %v995, %v994
    %v1380 = vpack.c.b16 %v997, %v996
    %v1381 = vpack.c.b16 %v999, %v998
    %v1382 = vpack.c.b16 %v1001, %v1000
    %v1383 = vpack.c.b16 %v1003, %v1002
    %v1384 = vpack.c.b16 %v1005, %v1004
    %v1385 = vpack.c.b16 %v1007, %v1006
    %v1386 = vpack.c.b16 %v1009, %v1008
    %v1387 = vpack.c.b16 %v1011, %v1010
    %v1388 = vpack.c.b16 %v1013, %v1012
    %v1389 = vpack.c.b16 %v1015, %v1014
    %v1390 = vpack.c.b16 %v1017, %v1016
    %v1391 = vpack.c.b16 %v1019, %v1018
    %v1392 = vpack.c.b16 %v1021, %v1020
    %v1393 = vpack.c.b16 %v1023, %v1022
    %v1394 = vpack.c.b16 %v1025, %v1024
    %v1395 = vpack.c.b16 %v1027, %v1026
    %v1396 = vpack.c.b16 %v1029, %v1028
    %v1397 = vpack.c.b16 %v1031, %v1030
    %v1398 = vpack.c.b16 %v1033, %v1032
    %v1399 = vpack.c.b16 %v1035, %v1034
    %v1400 = vpack.c.b16 %v1037, %v1036
    %v1401 = vpack.c.b16 %v1039, %v1038
    %v1402 = vpack.c.b16 %v1041, %v1040
    %v1403 = vpack.c.b16 %v1043, %v1042
    %v1404 = vpack.c.b16 %v1045, %v1044
    %v1405 = vpack.c.b16 %v1047, %v1046
    %v1406 = vpack.c.b16 %v1049, %v1048
    %v1407 = vpack.c.b16 %v1051, %v1050
    %v1408 = vpack.c.b16 %v1053, %v1052
    %v1409 = vpack.c.b16 %v1055, %v1054
    %v1410 = vpack.c.b16 %v1057, %v1056
    %v1411 = vpack.c.b16 %v1059, %v1058
    %v1412 = vpack.c.b16 %v1061, %v1060
    %v1413 = vpack.c.b16 %v1063, %v1062
    %v1414 = vpack.c.b16 %v1065, %v1064
    %v1415 = vpack.c.b16 %v1067, %v1066
    %v1416 = vpack.c.b16 %v1069, %v1068
    %v1417 = vpack.c.b16 %v1071, %v1070
    %v1418 = vpack.c.b16 %v1073, %v1072
    %v1419 = vpack.c.b16 %v1075, %v1074
    %v1420 = vpack.c.b16 %v1077, %v1076
    %v1421 = vpack.c.b16 %v1079, %v1078
    %v1422 = vpack.c.b16 %v1081, %v1080
    %v1423 = vpack.c.b16 %v1083, %v1082
    %v1424 = vpack.c.b16 %v1085, %v1084
    %v1425 = vpack.c.b16 %v1087, %v1086
    %v1426 = vpack.c.b16 %v1089, %v1088
    %v1427 = vpack.c.b16 %v1091, %v1090
    %v1428 = vpack.c.b16 %v1093, %v1092
    %v1429 = vpack.c.b16 %v1095, %v1094
    %v1430 = vpack.c.b16 %v1097, %v1096
    %v1431 = vpack.c.b16 %v1099, %v1098
    %v1432 = vpack.c.b16 %v1101, %v1100
    %v1433 = vpack.c.b16 %v1103, %v1102
    %v1434 = vpack.c.b16 %v1105, %v1104
    %v1435 = vpack.c.b16 %v1107, %v1106
    %v1436 = vpack.c.b16 %v1109, %v1108
    %v1437 = vpack.c.b16 %v1111, %v1110
    %v1438 = vpack.c.b16 %v1113, %v1112
    %v1439 = vpack.c.b16 %v1115, %v1114
    %v1440 = vpack.c.b16 %v1117, %v1116
    %v1441 = vpack.c.b16 %v1119, %v1118
    %v1442 = vpack.c.b16 %v1121, %v1120
    %v1443 = vpack.c.b16 %v1123, %v1122
    %v1444 = vpack.c.b16 %v1125, %v1124
    %v1445 = vpack.c.b16 %v1127, %v1126
    %v1446 = vpack.c.b16 %v1129, %v1128
    %v1447 = vpack.c.b16 %v1131, %v1130
    %v1448 = vpack.c.b16 %v1133, %v1132
    %v1449 = vpack.c.b16 %v1135, %v1134
    %v1450 = vpack.c.b16 %v1137, %v1136
    %v1451 = vpack.c.b16 %v1139, %v1138
    %v1452 = vpack.c.b16 %v1141, %v1140
    %v1453 = vpack.c.b16 %v1143, %v1142
    %v1454 = vpack.c.b16 %v1145, %v1144
    %v1455 = vpack.c.b16 %v1147, %v1146
    %v1456 = vpack.c.b16 %v1149, %v1148
    %v1457 = vpack.c.b16 %v1151, %v1150
    %v1458 = vpack.c.b16 %v1153, %v1152
    %v1459 = vpack.c.b16 %v1155, %v1154
    %v1460 = vpack.c.b16 %v1157, %v1156
    %v1461 = vpack.c.b16 %v1159, %v1158
    %v1462 = vpack.c.b16 %v1161, %v1160
    %v1463 = vpack.c.b16 %v1163, %v1162
    %v1464 = vpack.c.b16 %v1165, %v1164
    %v1465 = vpack.c.b16 %v1167, %v1166
    %v1466 = vpack.c.b16 %v1169, %v1168
    %v1467 = vpack.c.b16 %v1171, %v1170
    %v1468 = vpack.c.b16 %v1173, %v1172
    %v1469 = vpack.c.b16 %v1175, %v1174
    %v1470 = vpack.c.b16 %v1177, %v1176
    %v1471 = vpack.c.b16 %v1179, %v1178
    %v1472 = vpack.c.b16 %v1181, %v1180
    %v1473 = vpack.c.b16 %v1183, %v1182
    %v1474 = vpack.c.b16 %v1185, %v1184
    %v1475 = vpack.c.b16 %v1187, %v1186
    %v1476 = vpack.c.b16 %v1189, %v1188
    %v1477 = vpack.c.b16 %v1191, %v1190
    %v1478 = vpack.c.b16 %v1193, %v1192
    %v1479 = vpack.c.b16 %v1195, %v1194
    %v1480 = vpack.c.b16 %v1197, %v1196
    %v1481 = vpack.c.b16 %v1199, %v1198
    %v1482 = vpack.c.b16 %v1201, %v1200
    %v1483 = vpack.c.b16 %v1203, %v1202
    %v1484 = vpack.c.b16 %v1205, %v1204
    %v1485 = vpack.c.b16 %v1207, %v1206
    %v1486 = vpack.c.b16 %v1209, %v1208
    %v1487 = vpack.c.b16 %v1211, %v1210
    %v1488 = vpack.c.b16 %v1213, %v1212
    %v1489 = vpack.c.b16 %v1215, %v1214
    %v1490 = vpack.c.b16 %v1217, %v1216
    %v1491 = vpack.c.b16 %v1219, %v1218
    %v1492 = vpack.c.b16 %v1221, %v1220
    %v1493 = vpack.c.b16 %v1223, %v1222
    %v1494 = vpack.c.b16 %v1225, %v1224
    %v1495 = vpack.c.b16 %v1227, %v1226
    %v1496 = vpack.c.b16 %v1229, %v1228
    %v1497 = vpack.c.b16 %v1231, %v1230
    %v1498 = vpack.c.b16 %v1233, %v1232
    %v1499 = vpack.c.b16 %v1235, %v1234
    %v1500 = vpack.c.b16 %v1237, %v1236
    %v1501 = vpack.c.b16 %v1239, %v1238
    %v1502 = vpack.c.b16 %v1241, %v1240
    %v1503 = vpack.c.b16 %v1243, %v1242
    %v1504 = vpack.c.b16 %v1245, %v1244
    %v1505 = vpack.c.b16 %v1247, %v1246
    %v1506 = vpack.c.b16 %v1249, %v1248
    %v1507 = vpack.c.b16 %v1251, %v1250
    %v1508 = vpack.c.b16 %v1253, %v1252
    %v1509 = vpack.c.b16 %v1255, %v1254
    %v1510 = vpack.c.b16 %v1257, %v1256
    %v1511 = vpack.c.b16 %v1259, %v1258
    %v1512 = vpack.c.b16 %v1261, %v1260
    %v1513 = vpack.c.b16 %v1263, %v1262
    %v1514 = vpack.c.b16 %v1265, %v1264
    %v1515 = vpack.c.b16 %v1267, %v1266
    %v1516 = vpack.c.b16 %v1269, %v1268
    %v1517 = vpack.c.b16 %v1271, %v1270
    %v1518 = vpack.c.b16 %v1273, %v1272
    %v1519 = vpack.c.b16 %v1275, %v1274
    %v1520 = vpack.c.b16 %v1277, %v1276
    %v1521 = vpack.c.b16 %v1279, %v1278
    %v1522 = vpack.c.b16 %v1281, %v1280
    %v1523 = vpack.c.b16 %v1283, %v1282
    %v1524 = vpack.c.b16 %v1285, %v1284
    %v1525 = vpack.c.b16 %v1287, %v1286
    %v1526 = vpack.c.b16 %v1289, %v1288
    %v1527 = vpack.c.b16 %v1291, %v1290
    %v1528 = vpack.c.b16 %v1293, %v1292
    %v1529 = vpack.c.b16 %v1295, %v1294
    %v1530 = vpack.c.b16 %v1297, %v1296
    %v1531 = vpack.c.b16 %v1299, %v1298
    %v1532 = vpack.c.b16 %v1301, %v1300
    %v1533 = vpack.c.b16 %v1303, %v1302
    %v1534 = vpack.c.b16 %v1305, %v1304
    %v1535 = vpack.c.b16 %v1307, %v1306
    %v1536 = vpack.c.b16 %v1309, %v1308
    %v1537 = vpack.c.b16 %v1311, %v1310
    %v1538 = vpack.c.b16 %v1313, %v1312
    %v1539 = vpack.c.b16 %v1315, %v1314
    %v1540 = vpack.c.b16 %v1317, %v1316
    %v1541 = vpack.c.b16 %v1319, %v1318
    %v1542 = vpack.c.b16 %v1321, %v1320
    %v1543 = vpack.c.b16 %v1323, %v1322
    %v1544 = vpack.c.b16 %v1325, %v1324
    %v1545 = vpack.c.b16 %v1327, %v1326
    %v1546 = vpack.c.b16 %v1329, %v1328
    %v1547 = vpack.c.b16 %v1331, %v1330
    %v1548 = vpack.c.b16 %v1333, %v1332
    %v1549 = vpack.c.b16 %v1335, %v1334
    %v1550 = vpack.c.b16 %v1337, %v1336
    %v1551 = vpack.c.b16 %v1339, %v1338
    %v1552 = vpack.c.b16 %v1341, %v1340
    %v1553 = vpack.c.b16 %v1343, %v1342
    %v1554 = vpack.c.b16 %v1345, %v1344
    %v1555 = vpack.c.b16 %v1347, %v1346
    %v1556 = vpack.c.b16 %v1349, %v1348
    %v1557 = vpack.c.b16 %v1351, %v1350
    %v1558 = vpack.c.b16 %v1353, %v1352
    %v1559 = vpack.c.b16 %v1355, %v1354
    %v1560 = vpack.c.b16 %v1357, %v1356
    %v1561 = vpack.c.b16 %v1359, %v1358
    %v1562 = vpack.c.b16 %v1361, %v1360
    %v1563 = vpack.c.b16 %v1363, %v1362
    %v1564 = vpack.c.b16 %v1365, %v1364
    %v1565 = vpack.c.b16 %v1367, %v1366
    %v1566 = vpack.c.b16 %v1369, %v1368
    %v1567 = vpack.c.b16 %v1371, %v1370
    %vm1764 = vcmask 523264
    %v1765 = vsel %vm1764, %v563, 0
    %1767 = vmatpush.bf16.msra.mxu0 %v1379
    %1768 = vmatpush.bf16.msra.mxu0 %v1378
    %1769 = vmatpush.bf16.msra.mxu0 %v1377
    %1770 = vmatpush.bf16.msra.mxu0 %v1376
    %1771 = vmatpush.bf16.msra.mxu0 %v1375
    %1772 = vmatpush.bf16.msra.mxu0 %v1374
    %1773 = vmatpush.bf16.msra.mxu0 %v1373
    %1774 = vmatpush.bf16.msra.mxu0 %v1372
    %1775 = vmatmul.bf16.gmra.mxu0 %v491
    %v1776 = vpop.f32.mrf.mxu0
    %v1777 = vadd.f32 %v466, %v1776
    %v1778 = vpop.f32.mrf.mxu0
    %v1779 = vadd.f32 %v466, %v1778
    %1780 = vdwg.mxu0
    %1781 = vmatpush.bf16.msra.mxu0 %v1387
    %1782 = vmatpush.bf16.msra.mxu0 %v1386
    %1783 = vmatpush.bf16.msra.mxu0 %v1385
    %1784 = vmatpush.bf16.msra.mxu0 %v1384
    %1785 = vmatpush.bf16.msra.mxu0 %v1383
    %1786 = vmatpush.bf16.msra.mxu0 %v1382
    %1787 = vmatpush.bf16.msra.mxu0 %v1381
    %1788 = vmatpush.bf16.msra.mxu0 %v1380
    %1789 = vmatmul.bf16.gmra.mxu0 %v492
    %v1790 = vpop.f32.mrf.mxu0
    %v1791 = vadd.f32 %v1777, %v1790
    %v1792 = vpop.f32.mrf.mxu0
    %v1793 = vadd.f32 %v1779, %v1792
    %1794 = vdwg.mxu0
    %1795 = vmatpush.bf16.msra.mxu0 %v1395
    %1796 = vmatpush.bf16.msra.mxu0 %v1394
    %1797 = vmatpush.bf16.msra.mxu0 %v1393
    %1798 = vmatpush.bf16.msra.mxu0 %v1392
    %1799 = vmatpush.bf16.msra.mxu0 %v1391
    %1800 = vmatpush.bf16.msra.mxu0 %v1390
    %1801 = vmatpush.bf16.msra.mxu0 %v1389
    %1802 = vmatpush.bf16.msra.mxu0 %v1388
    %1803 = vmatmul.bf16.gmra.mxu0 %v493
    %v1804 = vpop.f32.mrf.mxu0
    %v1805 = vadd.f32 %v1791, %v1804
    %v1806 = vpop.f32.mrf.mxu0
    %v1807 = vadd.f32 %v1793, %v1806
    %1808 = vdwg.mxu0
    %1809 = vmatpush.bf16.msra.mxu0 %v1403
    %1810 = vmatpush.bf16.msra.mxu0 %v1402
    %1811 = vmatpush.bf16.msra.mxu0 %v1401
    %1812 = vmatpush.bf16.msra.mxu0 %v1400
    %1813 = vmatpush.bf16.msra.mxu0 %v1399
    %1814 = vmatpush.bf16.msra.mxu0 %v1398
    %1815 = vmatpush.bf16.msra.mxu0 %v1397
    %1816 = vmatpush.bf16.msra.mxu0 %v1396
    %1817 = vmatmul.bf16.gmra.mxu0 %v494
    %v1818 = vpop.f32.mrf.mxu0
    %v1819 = vadd.f32 %v1805, %v1818
    %v1820 = vpop.f32.mrf.mxu0
    %v1821 = vadd.f32 %v1807, %v1820
    %1822 = vdwg.mxu0
    %1823 = vmatpush.bf16.msra.mxu0 %v1411
    %1824 = vmatpush.bf16.msra.mxu0 %v1410
    %1825 = vmatpush.bf16.msra.mxu0 %v1409
    %1826 = vmatpush.bf16.msra.mxu0 %v1408
    %1827 = vmatpush.bf16.msra.mxu0 %v1407
    %1828 = vmatpush.bf16.msra.mxu0 %v1406
    %1829 = vmatpush.bf16.msra.mxu0 %v1405
    %1830 = vmatpush.bf16.msra.mxu0 %v1404
    %1831 = vmatmul.bf16.gmra.mxu0 %v495
    %v1832 = vpop.f32.mrf.mxu0
    %v1833 = vadd.f32 %v1819, %v1832
    %v1834 = vpop.f32.mrf.mxu0
    %v1835 = vadd.f32 %v1821, %v1834
    %1836 = vdwg.mxu0
    %1837 = vmatpush.bf16.msra.mxu0 %v1419
    %1838 = vmatpush.bf16.msra.mxu0 %v1418
    %1839 = vmatpush.bf16.msra.mxu0 %v1417
    %1840 = vmatpush.bf16.msra.mxu0 %v1416
    %1841 = vmatpush.bf16.msra.mxu0 %v1415
    %1842 = vmatpush.bf16.msra.mxu0 %v1414
    %1843 = vmatpush.bf16.msra.mxu0 %v1413
    %1844 = vmatpush.bf16.msra.mxu0 %v1412
    %1845 = vmatmul.bf16.gmra.mxu0 %v496
    %v1846 = vpop.f32.mrf.mxu0
    %v1847 = vadd.f32 %v1833, %v1846
    %v1848 = vpop.f32.mrf.mxu0
    %v1849 = vadd.f32 %v1835, %v1848
    %1850 = vdwg.mxu0
    %1851 = vmatpush.bf16.msra.mxu0 %v1427
    %1852 = vmatpush.bf16.msra.mxu0 %v1426
    %1853 = vmatpush.bf16.msra.mxu0 %v1425
    %1854 = vmatpush.bf16.msra.mxu0 %v1424
    %1855 = vmatpush.bf16.msra.mxu0 %v1423
    %1856 = vmatpush.bf16.msra.mxu0 %v1422
    %1857 = vmatpush.bf16.msra.mxu0 %v1421
    %1858 = vmatpush.bf16.msra.mxu0 %v1420
    %1859 = vmatmul.bf16.gmra.mxu0 %v497
    %v1860 = vpop.f32.mrf.mxu0
    %v1861 = vadd.f32 %v1847, %v1860
    %v1862 = vpop.f32.mrf.mxu0
    %v1863 = vadd.f32 %v1849, %v1862
    %1864 = vdwg.mxu0
    %1865 = vmatpush.bf16.msra.mxu0 %v1435
    %1866 = vmatpush.bf16.msra.mxu0 %v1434
    %1867 = vmatpush.bf16.msra.mxu0 %v1433
    %1868 = vmatpush.bf16.msra.mxu0 %v1432
    %1869 = vmatpush.bf16.msra.mxu0 %v1431
    %1870 = vmatpush.bf16.msra.mxu0 %v1430
    %1871 = vmatpush.bf16.msra.mxu0 %v1429
    %1872 = vmatpush.bf16.msra.mxu0 %v1428
    %1873 = vmatmul.bf16.gmra.mxu0 %v498
    %v1874 = vpop.f32.mrf.mxu0
    %v1875 = vadd.f32 %v1861, %v1874
    %v1876 = vpop.f32.mrf.mxu0
    %v1877 = vadd.f32 %v1863, %v1876
    %1878 = vdwg.mxu0
    %1879 = vmatpush.bf16.msra.mxu0 %v1443
    %1880 = vmatpush.bf16.msra.mxu0 %v1442
    %1881 = vmatpush.bf16.msra.mxu0 %v1441
    %1882 = vmatpush.bf16.msra.mxu0 %v1440
    %1883 = vmatpush.bf16.msra.mxu0 %v1439
    %1884 = vmatpush.bf16.msra.mxu0 %v1438
    %1885 = vmatpush.bf16.msra.mxu0 %v1437
    %1886 = vmatpush.bf16.msra.mxu0 %v1436
    %1887 = vmatmul.bf16.gmra.mxu0 %v515
    %v1888 = vpop.f32.mrf.mxu0
    %v1889 = vadd.f32 %v1875, %v1888
    %v1890 = vpop.f32.mrf.mxu0
    %v1891 = vadd.f32 %v1877, %v1890
    %1892 = vdwg.mxu0
    %1893 = vmatpush.bf16.msra.mxu0 %v1451
    %1894 = vmatpush.bf16.msra.mxu0 %v1450
    %1895 = vmatpush.bf16.msra.mxu0 %v1449
    %1896 = vmatpush.bf16.msra.mxu0 %v1448
    %1897 = vmatpush.bf16.msra.mxu0 %v1447
    %1898 = vmatpush.bf16.msra.mxu0 %v1446
    %1899 = vmatpush.bf16.msra.mxu0 %v1445
    %1900 = vmatpush.bf16.msra.mxu0 %v1444
    %1901 = vmatmul.bf16.gmra.mxu0 %v516
    %v1902 = vpop.f32.mrf.mxu0
    %v1903 = vadd.f32 %v1889, %v1902
    %v1904 = vpop.f32.mrf.mxu0
    %v1905 = vadd.f32 %v1891, %v1904
    %1906 = vdwg.mxu0
    %1907 = vmatpush.bf16.msra.mxu0 %v1459
    %1908 = vmatpush.bf16.msra.mxu0 %v1458
    %1909 = vmatpush.bf16.msra.mxu0 %v1457
    %1910 = vmatpush.bf16.msra.mxu0 %v1456
    %1911 = vmatpush.bf16.msra.mxu0 %v1455
    %1912 = vmatpush.bf16.msra.mxu0 %v1454
    %1913 = vmatpush.bf16.msra.mxu0 %v1453
    %1914 = vmatpush.bf16.msra.mxu0 %v1452
    %1915 = vmatmul.bf16.gmra.mxu0 %v517
    %v1916 = vpop.f32.mrf.mxu0
    %v1917 = vadd.f32 %v1903, %v1916
    %v1918 = vpop.f32.mrf.mxu0
    %v1919 = vadd.f32 %v1905, %v1918
    %1920 = vdwg.mxu0
    %1921 = vmatpush.bf16.msra.mxu0 %v1467
    %1922 = vmatpush.bf16.msra.mxu0 %v1466
    %1923 = vmatpush.bf16.msra.mxu0 %v1465
    %1924 = vmatpush.bf16.msra.mxu0 %v1464
    %1925 = vmatpush.bf16.msra.mxu0 %v1463
    %1926 = vmatpush.bf16.msra.mxu0 %v1462
    %1927 = vmatpush.bf16.msra.mxu0 %v1461
    %1928 = vmatpush.bf16.msra.mxu0 %v1460
    %1929 = vmatmul.bf16.gmra.mxu0 %v518
    %v1930 = vpop.f32.mrf.mxu0
    %v1931 = vadd.f32 %v1917, %v1930
    %v1932 = vpop.f32.mrf.mxu0
    %v1933 = vadd.f32 %v1919, %v1932
    %1934 = vdwg.mxu0
    %1935 = vmatpush.bf16.msra.mxu0 %v1475
    %1936 = vmatpush.bf16.msra.mxu0 %v1474
    %1937 = vmatpush.bf16.msra.mxu0 %v1473
    %1938 = vmatpush.bf16.msra.mxu0 %v1472
    %1939 = vmatpush.bf16.msra.mxu0 %v1471
    %1940 = vmatpush.bf16.msra.mxu0 %v1470
    %1941 = vmatpush.bf16.msra.mxu0 %v1469
    %1942 = vmatpush.bf16.msra.mxu0 %v1468
    %1943 = vmatmul.bf16.gmra.mxu0 %v519
    %v1944 = vpop.f32.mrf.mxu0
    %v1945 = vadd.f32 %v1931, %v1944
    %v1946 = vpop.f32.mrf.mxu0
    %v1947 = vadd.f32 %v1933, %v1946
    %1948 = vdwg.mxu0
    %1949 = vmatpush.bf16.msra.mxu0 %v1483
    %1950 = vmatpush.bf16.msra.mxu0 %v1482
    %1951 = vmatpush.bf16.msra.mxu0 %v1481
    %1952 = vmatpush.bf16.msra.mxu0 %v1480
    %1953 = vmatpush.bf16.msra.mxu0 %v1479
    %1954 = vmatpush.bf16.msra.mxu0 %v1478
    %1955 = vmatpush.bf16.msra.mxu0 %v1477
    %1956 = vmatpush.bf16.msra.mxu0 %v1476
    %1957 = vmatmul.bf16.gmra.mxu0 %v520
    %v1958 = vpop.f32.mrf.mxu0
    %v1959 = vadd.f32 %v1945, %v1958
    %v1960 = vpop.f32.mrf.mxu0
    %v1961 = vadd.f32 %v1947, %v1960
    %1962 = vdwg.mxu0
    %1963 = vmatpush.bf16.msra.mxu0 %v1491
    %1964 = vmatpush.bf16.msra.mxu0 %v1490
    %1965 = vmatpush.bf16.msra.mxu0 %v1489
    %1966 = vmatpush.bf16.msra.mxu0 %v1488
    %1967 = vmatpush.bf16.msra.mxu0 %v1487
    %1968 = vmatpush.bf16.msra.mxu0 %v1486
    %1969 = vmatpush.bf16.msra.mxu0 %v1485
    %1970 = vmatpush.bf16.msra.mxu0 %v1484
    %1971 = vmatmul.bf16.gmra.mxu0 %v521
    %v1972 = vpop.f32.mrf.mxu0
    %v1973 = vadd.f32 %v1959, %v1972
    %v1974 = vpop.f32.mrf.mxu0
    %v1975 = vadd.f32 %v1961, %v1974
    %1976 = vdwg.mxu0
    %1977 = vmatpush.bf16.msra.mxu0 %v1499
    %1978 = vmatpush.bf16.msra.mxu0 %v1498
    %1979 = vmatpush.bf16.msra.mxu0 %v1497
    %1980 = vmatpush.bf16.msra.mxu0 %v1496
    %1981 = vmatpush.bf16.msra.mxu0 %v1495
    %1982 = vmatpush.bf16.msra.mxu0 %v1494
    %1983 = vmatpush.bf16.msra.mxu0 %v1493
    %1984 = vmatpush.bf16.msra.mxu0 %v1492
    %1985 = vmatmul.bf16.gmra.mxu0 %v522
    %v1986 = vpop.f32.mrf.mxu0
    %v1987 = vadd.f32 %v1973, %v1986
    %v1988 = vpop.f32.mrf.mxu0
    %v1989 = vadd.f32 %v1975, %v1988
    %1990 = vdwg.mxu0
    %1991 = vmatpush.bf16.msra.mxu0 %v1507
    %1992 = vmatpush.bf16.msra.mxu0 %v1506
    %1993 = vmatpush.bf16.msra.mxu0 %v1505
    %1994 = vmatpush.bf16.msra.mxu0 %v1504
    %1995 = vmatpush.bf16.msra.mxu0 %v1503
    %1996 = vmatpush.bf16.msra.mxu0 %v1502
    %1997 = vmatpush.bf16.msra.mxu0 %v1501
    %1998 = vmatpush.bf16.msra.mxu0 %v1500
    %1999 = vmatmul.bf16.gmra.mxu0 %v539
    %v2000 = vpop.f32.mrf.mxu0
    %v2001 = vadd.f32 %v1987, %v2000
    %v2002 = vpop.f32.mrf.mxu0
    %v2003 = vadd.f32 %v1989, %v2002
    %2004 = vdwg.mxu0
    %2005 = vmatpush.bf16.msra.mxu0 %v1515
    %2006 = vmatpush.bf16.msra.mxu0 %v1514
    %2007 = vmatpush.bf16.msra.mxu0 %v1513
    %2008 = vmatpush.bf16.msra.mxu0 %v1512
    %2009 = vmatpush.bf16.msra.mxu0 %v1511
    %2010 = vmatpush.bf16.msra.mxu0 %v1510
    %2011 = vmatpush.bf16.msra.mxu0 %v1509
    %2012 = vmatpush.bf16.msra.mxu0 %v1508
    %2013 = vmatmul.bf16.gmra.mxu0 %v540
    %v2014 = vpop.f32.mrf.mxu0
    %v2015 = vadd.f32 %v2001, %v2014
    %v2016 = vpop.f32.mrf.mxu0
    %v2017 = vadd.f32 %v2003, %v2016
    %2018 = vdwg.mxu0
    %2019 = vmatpush.bf16.msra.mxu0 %v1523
    %2020 = vmatpush.bf16.msra.mxu0 %v1522
    %2021 = vmatpush.bf16.msra.mxu0 %v1521
    %2022 = vmatpush.bf16.msra.mxu0 %v1520
    %2023 = vmatpush.bf16.msra.mxu0 %v1519
    %2024 = vmatpush.bf16.msra.mxu0 %v1518
    %2025 = vmatpush.bf16.msra.mxu0 %v1517
    %2026 = vmatpush.bf16.msra.mxu0 %v1516
    %2027 = vmatmul.bf16.gmra.mxu0 %v541
    %v2028 = vpop.f32.mrf.mxu0
    %v2029 = vadd.f32 %v2015, %v2028
    %v2030 = vpop.f32.mrf.mxu0
    %v2031 = vadd.f32 %v2017, %v2030
    %2032 = vdwg.mxu0
    %2033 = vmatpush.bf16.msra.mxu0 %v1531
    %2034 = vmatpush.bf16.msra.mxu0 %v1530
    %2035 = vmatpush.bf16.msra.mxu0 %v1529
    %2036 = vmatpush.bf16.msra.mxu0 %v1528
    %2037 = vmatpush.bf16.msra.mxu0 %v1527
    %2038 = vmatpush.bf16.msra.mxu0 %v1526
    %2039 = vmatpush.bf16.msra.mxu0 %v1525
    %2040 = vmatpush.bf16.msra.mxu0 %v1524
    %2041 = vmatmul.bf16.gmra.mxu0 %v542
    %v2042 = vpop.f32.mrf.mxu0
    %v2043 = vadd.f32 %v2029, %v2042
    %v2044 = vpop.f32.mrf.mxu0
    %v2045 = vadd.f32 %v2031, %v2044
    %2046 = vdwg.mxu0
    %2047 = vmatpush.bf16.msra.mxu0 %v1539
    %2048 = vmatpush.bf16.msra.mxu0 %v1538
    %2049 = vmatpush.bf16.msra.mxu0 %v1537
    %2050 = vmatpush.bf16.msra.mxu0 %v1536
    %2051 = vmatpush.bf16.msra.mxu0 %v1535
    %2052 = vmatpush.bf16.msra.mxu0 %v1534
    %2053 = vmatpush.bf16.msra.mxu0 %v1533
    %2054 = vmatpush.bf16.msra.mxu0 %v1532
    %2055 = vmatmul.bf16.gmra.mxu0 %v543
    %v2056 = vpop.f32.mrf.mxu0
    %v2057 = vadd.f32 %v2043, %v2056
    %v2058 = vpop.f32.mrf.mxu0
    %v2059 = vadd.f32 %v2045, %v2058
    %2060 = vdwg.mxu0
    %2061 = vmatpush.bf16.msra.mxu0 %v1547
    %2062 = vmatpush.bf16.msra.mxu0 %v1546
    %2063 = vmatpush.bf16.msra.mxu0 %v1545
    %2064 = vmatpush.bf16.msra.mxu0 %v1544
    %2065 = vmatpush.bf16.msra.mxu0 %v1543
    %2066 = vmatpush.bf16.msra.mxu0 %v1542
    %2067 = vmatpush.bf16.msra.mxu0 %v1541
    %2068 = vmatpush.bf16.msra.mxu0 %v1540
    %2069 = vmatmul.bf16.gmra.mxu0 %v544
    %v2070 = vpop.f32.mrf.mxu0
    %v2071 = vadd.f32 %v2057, %v2070
    %v2072 = vpop.f32.mrf.mxu0
    %v2073 = vadd.f32 %v2059, %v2072
    %2074 = vdwg.mxu0
    %2075 = vmatpush.bf16.msra.mxu0 %v1555
    %2076 = vmatpush.bf16.msra.mxu0 %v1554
    %2077 = vmatpush.bf16.msra.mxu0 %v1553
    %2078 = vmatpush.bf16.msra.mxu0 %v1552
    %2079 = vmatpush.bf16.msra.mxu0 %v1551
    %2080 = vmatpush.bf16.msra.mxu0 %v1550
    %2081 = vmatpush.bf16.msra.mxu0 %v1549
    %2082 = vmatpush.bf16.msra.mxu0 %v1548
    %2083 = vmatmul.bf16.gmra.mxu0 %v545
    %v2084 = vpop.f32.mrf.mxu0
    %v2085 = vadd.f32 %v2071, %v2084
    %v2086 = vpop.f32.mrf.mxu0
    %v2087 = vadd.f32 %v2073, %v2086
    %2088 = vdwg.mxu0
    %2089 = vmatpush.bf16.msra.mxu0 %v1563
    %2090 = vmatpush.bf16.msra.mxu0 %v1562
    %2091 = vmatpush.bf16.msra.mxu0 %v1561
    %2092 = vmatpush.bf16.msra.mxu0 %v1560
    %2093 = vmatpush.bf16.msra.mxu0 %v1559
    %2094 = vmatpush.bf16.msra.mxu0 %v1558
    %2095 = vmatpush.bf16.msra.mxu0 %v1557
    %2096 = vmatpush.bf16.msra.mxu0 %v1556
    %2097 = vmatmul.bf16.gmra.mxu0 %v546
    %v2098 = vpop.f32.mrf.mxu0
    %v2099 = vadd.f32 %v2085, %v2098
    %v2100 = vpop.f32.mrf.mxu0
    %v2101 = vadd.f32 %v2087, %v2100
    %2102 = vdwg.mxu0
    %2103 = vmatpush.bf16.msra.mxu0 0
    %2104 = vmatpush.bf16.msra.mxu0 0
    %2105 = vmatpush.bf16.msra.mxu0 0
    %2106 = vmatpush.bf16.msra.mxu0 0
    %2107 = vmatpush.bf16.msra.mxu0 %v1567
    %2108 = vmatpush.bf16.msra.mxu0 %v1566
    %2109 = vmatpush.bf16.msra.mxu0 %v1565
    %2110 = vmatpush.bf16.msra.mxu0 %v1564
    %2111 = vmatmul.bf16.gmra.mxu0 %v1765
    %v2112 = vpop.f32.mrf.mxu0
    %v2113 = vadd.f32 %v2099, %v2112
    %v2114 = vpop.f32.mrf.mxu0
    %v2115 = vadd.f32 %v2101, %v2114
    %2116 = vdwg.mxu0
    %v2117 = vround.ne.pseudo %v2113
    %v2118 = vround.ne.pseudo %v2115
    %v2119 = vmax.f32 %v2117, 0.0
    %v2120 = vmax.f32 %v2118, 0.0
    %v2121 = vmin.f32 %v2119, 255.0
    %v2122 = vmin.f32 %v2120, 255.0
    %v2123 = vld [vmem:[%s4] sm:$0x1]
    %v2125 = vperm.slane %v2123, 0
    %v2127 = vmul.f32 %v2121, %v2125
    %v2128 = vmul.f32 %v2122, %v2125
    %vm2129 = vcmask 130048
    %v2130 = vsel %vm2129, %v2127, 0.0
    %2131 = vadd.xlane.f32.xlu0 %v2130
    %v2132 = vpop.xlane.xlu0 %2131
    %v2133 = vsel %vm2129, %v2128, 0.0
    %2134 = vadd.xlane.f32.xlu0 %v2133
    %v2135 = vpop.xlane.xlu0 %2134
    %v2136 = vld [vmem:[#allocation2] sm:$0x1]
    %v2138 = vperm.slane %v2136, 0
    %v2140 = vadd.f32 %v2132, %v2138
    %v2141 = vadd.f32 %v2135, %v2138
    %v2142 = vstv %s39
    %v2143 = vmul.f32 %v2140, %v2142
    %v2144 = vmul.f32 %v2141, %v2142
    %vm2145 = vcmask 7168
    %2146 = vst.msk [vmem:[#allocation5] sm:$0xff] %vm2145, %v2143
    %2147 = vst.msk [vmem:[#allocation5 + $0x8] sm:$0xff] %vm2145, %v2144
    // Predicated region
    $region30: #{quantized_model_forward.3} parent=1 // pred_check
      _
    $region31: #{quantized_model_forward.3} parent=1 // pred_check_branch
      %2149 = sbr.rel (0) target = $region33
    $region32: #{quantized_model_forward.3} parent=1 // pred_region
      // Predicated region
      $region34: #{quantized_model_forward.3} parent=32 // pred_check
        _
      $region35: #{quantized_model_forward.3} parent=32 // pred_check_branch
        %2151 = sbr.rel (0) target = $region37
      $region36: #{quantized_model_forward.3} parent=32 // pred_region
        // Predicated region
        $region38: #{quantized_model_forward.3} parent=36 // pred_check
          _
        $region39: #{quantized_model_forward.3} parent=36 // pred_check_branch
          %2153 = sbr.rel target = $region41
        $region40: #{quantized_model_forward.3} parent=36 // pred_region
          // Predicated region
          $region53: #{quantized_model_forward.3} parent=40 // pred_check
            _
          $region54: #{quantized_model_forward.3} parent=40 // pred_check_branch
            %2169 = sbr.rel (0) target = $region56
          $region55: #{quantized_model_forward.3} parent=40 // pred_region
            %s2171 = ssub.s32 4, 1
            loop: start=0, step=1, limit=1
            $region57: #{quantized_model_forward.3} parent=55 // loop_pre_header
              _
            $region58: #{quantized_model_forward.3} parent=55 // loop_header
              %s2173 = sphi 0, %s2177
              %p2174 = scmp.ge.s32.totalorder %s2173, 1
              %s2178 = sphi [#allocation5], [#allocation5]
              %s2179 = sphi %s6, %s6
            $region59: #{quantized_model_forward.3} parent=55 // loop_header_branch
              %2176 = sbr.rel (%p2174) target = $region63
            $region60: #{quantized_model_forward.3} parent=55 // loop_body
              %v2180 = vld [vmem:[%s2178] sm:%s2171]
              %2181 = vst [vmem:[%s2179] sm:%s2171] %v2180
            $region61: #{quantized_model_forward.3} parent=55 // loop_footer
              %s2177 = sadd.s32 1, %s2173
            $region62: #{quantized_model_forward.3} parent=55 // loop_footer_branch
              %2172 = sbr.rel target = $region58
            $region63: #{quantized_model_forward.3} parent=55 // loop_exit
              _
          $region56: #{quantized_model_forward.3} parent=40 // pred_fallthru
            _
        $region41: #{quantized_model_forward.3} parent=36 // pred_fallthru
          _
        // Predicated region
        $region42: #{quantized_model_forward.3} parent=36 // pred_check
          _
        $region43: #{quantized_model_forward.3} parent=36 // pred_check_branch
          %2155 = sbr.rel (0) target = $region45
        $region44: #{quantized_model_forward.3} parent=36 // pred_region
          %s2157 = ssub.s32 4, 1
          loop: start=0, step=1, limit=1
          $region46: #{quantized_model_forward.3} parent=44 // loop_pre_header
            _
          $region47: #{quantized_model_forward.3} parent=44 // loop_header
            %s2159 = sphi 0, %s2163
            %p2160 = scmp.ge.s32.totalorder %s2159, 1
            %s2164 = sphi [#allocation5], [#allocation5]
            %s2165 = sphi %s6, %s6
          $region48: #{quantized_model_forward.3} parent=44 // loop_header_branch
            %2162 = sbr.rel (%p2160) target = $region52
          $region49: #{quantized_model_forward.3} parent=44 // loop_body
            %v2166 = vld [vmem:[%s2164] sm:%s2157]
            %2167 = vst [vmem:[%s2165] sm:%s2157] %v2166
          $region50: #{quantized_model_forward.3} parent=44 // loop_footer
            %s2163 = sadd.s32 1, %s2159
          $region51: #{quantized_model_forward.3} parent=44 // loop_footer_branch
            %2158 = sbr.rel target = $region47
          $region52: #{quantized_model_forward.3} parent=44 // loop_exit
            _
        $region45: #{quantized_model_forward.3} parent=36 // pred_fallthru
          _
      $region37: #{quantized_model_forward.3} parent=32 // pred_fallthru
        _
      %2182 = vnop
    $region33: #{quantized_model_forward.3} parent=1 // pred_fallthru
      _
    // Predicated region
    $region64: #{quantized_model_forward.3} parent=1 // pred_check
      _
    $region65: #{quantized_model_forward.3} parent=1 // pred_check_branch
      %2184 = sbr.rel (0) target = $region67
    $region66: #{quantized_model_forward.3} parent=1 // pred_region
      _
    $region67: #{quantized_model_forward.3} parent=1 // pred_fallthru
      _
    %2185 = vsyncpa [#allocation4], 1

</llo_original>
